<compile_context>
chip_gen: v6e
topology: v6e:2x2x1
jax: 0.10.0
libtpu: 0.0.40
codegen_flags: <defaults>
</compile_context>

<pallas_src>
import functools

import numpy as np
import jax
import jax.numpy as jnp
from jax.experimental import pallas as pl
from jax.experimental.pallas import tpu as pltpu


def _ceil_to(x, m):
    return ((x + m - 1) // m) * m


def _largest_div_tile(dim, cap):
    """Largest multiple of 128 that divides ceil_to(dim, 128) and is <= cap."""
    dp = _ceil_to(dim, 128)
    m = dp // 128
    best = 1
    for d in range(1, m + 1):
        if m % d == 0 and 128 * d <= cap:
            best = d
    return 128 * best


def _pick_tm(m):
    tm = _ceil_to(max(m, 8), 16)
    if m >= 256:
        # >= 2 M-blocks so the second TensorCore (v7x) gets work on a
        # "parallel" axis; harmless on v5e/v6e (1 TC).
        tm = _ceil_to((m + 1) // 2, 16)
    return min(tm, 512)


def _pick_tk(k):
    return _largest_div_tile(k, 1024)


def _pick_tn(n):
    return _largest_div_tile(n, 256)


# --------------------------------------------------------------------------
# Tiled matmul kernel: bf16 operands on the MXU, f32 VMEM accumulator,
# fused bias + LeakyReLU(0.2) + optional output projection in the epilogue.
# --------------------------------------------------------------------------

def _mm_kernel(*refs, leaky, has_bias, has_post):
    x_ref, w_ref = refs[0], refs[1]
    idx = 2
    b_ref = pw_ref = pb_ref = None
    if has_bias:
        b_ref = refs[idx]
        idx += 1
    if has_post:
        pw_ref, pb_ref = refs[idx], refs[idx + 1]
        idx += 2
    o_ref, acc_ref = refs[idx], refs[idx + 1]

    @pl.when(pl.program_id(2) == 0)
    def _():
        acc_ref[...] = jnp.zeros_like(acc_ref)

    acc_ref[...] += jnp.dot(x_ref[...], w_ref[...],
                            preferred_element_type=jnp.float32)

    @pl.when(pl.program_id(2) == pl.num_programs(2) - 1)
    def _():
        acc = acc_ref[...]
        if has_bias:
            acc = acc + b_ref[...]                      # (1, tn) broadcasts
        if leaky:
            acc = jnp.where(acc >= 0, acc, jnp.float32(0.2) * acc)
        if has_post:                                    # fused 1x1 projection
            acc = jnp.dot(acc.astype(pw_ref.dtype), pw_ref[...],
                          preferred_element_type=jnp.float32) + pb_ref[...]
        o_ref[...] = acc.astype(o_ref.dtype)


def pallas_matmul(x, w, b=None, *, post_w=None, post_b=None, leaky=False,
                  out_dtype=jnp.float32):
    """x:(M,K) @ w:(K,N) [+b, LeakyReLU, @post_w + post_b] -> (M, Npadded/N2).

    Operands are expected in bf16 with lane-aligned K/N (prepared once in
    `prepare_params`); the wrapper only pads when strictly necessary.  The
    N dimension of the result stays lane-padded (carried to the next layer)."""
    M, K = x.shape
    K2, N = w.shape
    assert K == K2, (K, K2)

    tm, tk, tn = _pick_tm(M), _pick_tk(K), _pick_tn(N)
    Mp, Kp, Np = _ceil_to(M, tm), _ceil_to(K, tk), _ceil_to(N, tn)

    xb = x.astype(jnp.bfloat16)
    if (Mp, Kp) != (M, K):
        xb = jnp.pad(xb, ((0, Mp - M), (0, Kp - K)))
    wb = w.astype(jnp.bfloat16)
    if (Kp, Np) != (K, N):
        wb = jnp.pad(wb, ((0, Kp - K), (0, Np - N)))

    args = [xb, wb]
    in_specs = [pl.BlockSpec((tm, tk), lambda i, j, k: (i, k)),
                pl.BlockSpec((tk, tn), lambda i, j, k: (k, j))]

    has_bias = b is not None
    if has_bias:
        bb = b.astype(jnp.float32).reshape(1, -1)
        if bb.shape[1] != Np:
            bb = jnp.pad(bb, ((0, 0), (0, Np - bb.shape[1])))
        args.append(bb)
        in_specs.append(pl.BlockSpec((1, tn), lambda i, j, k: (0, j)))

    has_post = post_w is not None
    if has_post:
        assert Np == tn, "fused output projection needs a single N tile"
        N2 = post_w.shape[1]
        assert N2 % 128 == 0, "post projection output must be lane-padded"
        pwb = post_w.astype(jnp.bfloat16)
        if pwb.shape[0] != Np:
            pwb = jnp.pad(pwb, ((0, Np - pwb.shape[0]), (0, 0)))
        pbb = post_b.astype(jnp.float32).reshape(1, N2)
        args += [pwb, pbb]
        in_specs += [pl.BlockSpec((tn, N2), lambda i, j, k: (0, 0)),
                     pl.BlockSpec((1, N2), lambda i, j, k: (0, 0))]
        out_cols = N2
        o_spec = pl.BlockSpec((tm, N2), lambda i, j, k: (i, 0))
    else:
        out_cols = Np
        o_spec = pl.BlockSpec((tm, tn), lambda i, j, k: (i, j))

    flops = 2 * M * K * N + (2 * M * N * post_w.shape[1] if has_post else 0)
    bytes_accessed = (xb.size + wb.size) * 2 + Mp * out_cols * jnp.dtype(out_dtype).itemsize

    out = pl.pallas_call(
        functools.partial(_mm_kernel, leaky=leaky, has_bias=has_bias,
                          has_post=has_post),
        out_shape=jax.ShapeDtypeStruct((Mp, out_cols), out_dtype),
        grid=(Mp // tm, Np // tn, Kp // tk),
        in_specs=in_specs,
        out_specs=o_spec,
        scratch_shapes=[pltpu.VMEM((tm, tn), jnp.float32)],
        compiler_params=pltpu.CompilerParams(
            dimension_semantics=("parallel", "parallel", "arbitrary")),
        cost_estimate=pl.CostEstimate(flops=int(flops), transcendentals=0,
                                      bytes_accessed=int(bytes_accessed)),
    )(*args)

    if Mp != M:
        out = out[:M]
    return out


# --------------------------------------------------------------------------
# Row-tiled softmax / log_softmax + KL(uniform || q), per-block KL partials
# --------------------------------------------------------------------------

def _softmax_kld_kernel(x_ref, soft_ref, kld_ref):
    x = x_ref[...]                                        # (tr, N) f32
    n = x.shape[-1]
    m = jnp.max(x, axis=-1, keepdims=True)
    ex = jnp.exp(x - m)
    s = jnp.sum(ex, axis=-1, keepdims=True)
    soft_ref[...] = (ex * pl.reciprocal(s, approx=True)).astype(soft_ref.dtype)

    log_qy = (x - m) - jnp.log(s)                         # log_softmax
    log_uniform = -jnp.log(jnp.float32(n))
    # F.kl_div(log_qy, log_uniform, log_target=True) pointwise:
    #   exp(log_uniform) * (log_uniform - log_qy)
    blk = jnp.sum(log_uniform - log_qy) * jnp.float32(1.0 / n)
    kld_ref[...] = jnp.zeros(kld_ref.shape, kld_ref.dtype) + blk


def pallas_softmax_kld(logits_flat):
    """(R, N) f32 -> (softmax (R, N) bf16, total KL sum scalar f32)."""
    R, N = logits_flat.shape
    assert N % 128 == 0, "token dim must be lane aligned"
    tr = min(256, _ceil_to(R, 8))
    Rp = _ceil_to(R, tr)
    x = logits_flat.astype(jnp.float32)
    if Rp != R:
        # zero rows give log_qy == log_uniform -> exactly 0 KL contribution
        x = jnp.pad(x, ((0, Rp - R), (0, 0)))
    nb = Rp // tr

    soft, kparts = pl.pallas_call(
        _softmax_kld_kernel,
        out_shape=(jax.ShapeDtypeStruct((Rp, N), jnp.bfloat16),
                   jax.ShapeDtypeStruct((nb, 128), jnp.float32)),
        grid=(nb,),
        in_specs=[pl.BlockSpec((tr, N), lambda i: (i, 0))],
        out_specs=(pl.BlockSpec((tr, N), lambda i: (i, 0)),
                   pl.BlockSpec((1, 128), lambda i: (i, 0))),
        compiler_params=pltpu.CompilerParams(
            dimension_semantics=("parallel",)),
        cost_estimate=pl.CostEstimate(flops=6 * Rp * N,
                                      transcendentals=Rp * N + Rp,
                                      bytes_accessed=Rp * N * 6 + nb * 512),
    )(x)

    if Rp != R:
        soft = soft[:R]
    return soft, jnp.sum(kparts[:, 0])


# --------------------------------------------------------------------------
# im2col glue (XLA level) -- patches ordered (tap, channel), NHWC activations
# --------------------------------------------------------------------------

def _im2col(x, kh, kw, stride, padding):
    B, H, W, C = x.shape
    if padding:
        x = jnp.pad(x, ((0, 0), (padding, padding), (padding, padding), (0, 0)))
    Hp, Wp = H + 2 * padding, W + 2 * padding
    Ho = (Hp - kh) // stride + 1
    Wo = (Wp - kw) // stride + 1
    cols = [x[:, i:i + stride * (Ho - 1) + 1:stride,
              j:j + stride * (Wo - 1) + 1:stride, :]
            for i in range(kh) for j in range(kw)]
    patches = jnp.stack(cols, axis=3).reshape(B * Ho * Wo, kh * kw * C)
    return patches, Ho, Wo


# --------------------------------------------------------------------------
# One-time parameter preparation (outside the jitted forward)
# --------------------------------------------------------------------------

def prepare_params(raw, *, hidden_dim, num_tokens, codebook_dim):
    hd = hidden_dim
    CP = 128                       # lane-padded channel width carried end-to-end

    def pad_axis(a, axis, to):
        if to is None or to <= a.shape[axis]:
            return a
        pads = [(0, 0)] * a.ndim
        pads[axis] = (0, to - a.shape[axis])
        return jnp.pad(a, pads)

    def conv_wmat(w_oihw, cin_to, cout_to):
        # Conv2d weight (Cout, Cin, kh, kw) -> (kh*kw*Cin_p, Cout_p) bf16
        w = jnp.transpose(w_oihw.astype(jnp.float32), (2, 3, 1, 0))
        w = pad_axis(w, 2, cin_to)
        w = pad_axis(w, 3, cout_to)
        kh, kw, ci, co = w.shape
        return w.reshape(kh * kw * ci, co).astype(jnp.bfloat16)

    # Phase-decomposition selection matrix for ConvTranspose2d(k=4, s=2, p=1):
    # out[2m+r, 2n+c] = b + sum_{di,dj} xpad[m+r+di, n+c+dj] @ W[.., 3-r-2di, 3-c-2dj]
    sel_np = np.zeros((3, 2, 4), np.float32)
    for p in range(3):
        for r in range(2):
            di = p - r
            if 0 <= di <= 1:
                sel_np[p, r, 3 - r - 2 * di] = 1.0
    sel = jnp.asarray(sel_np)

    def convt_phase_wmat(w_iohw, cin_to, cout_to, compose_left=None):
        # ConvTranspose2d weight (Cin, Cout, 4, 4) -> (9*Cin_p, 4*Cout_p) bf16,
        # optionally with a left matmul (e.g. the codebook) folded into Cin.
        wb = jnp.einsum('prh,qcv,iohv->pqirco', sel, sel,
                        w_iohw.astype(jnp.float32))
        if compose_left is not None:
            wb = jnp.einsum('nd,pqdrco->pqnrco',
                            compose_left.astype(jnp.float32), wb)
        wb = pad_axis(wb, 2, cin_to)
        wb = pad_axis(wb, 5, cout_to)
        p, q, ci, r, c, co = wb.shape
        return wb.reshape(p * q * ci, r * c * co).astype(jnp.bfloat16)

    def bias_row(b, pad_to=None, reps=1):
        b = b.astype(jnp.float32)
        b = pad_axis(b, 0, pad_to)
        if reps > 1:
            b = jnp.tile(b, reps)
        return b.reshape(1, -1)

    # final 1x1 conv (hd -> 3) fused as a post-projection over the 4 phases
    w1 = jnp.transpose(raw["dec_w3"][:, :, 0, 0].astype(jnp.float32))   # (hd, 3)
    post_w = pad_axis(jnp.kron(jnp.eye(4, dtype=jnp.float32), w1), 1, 128)
    post_b = jnp.pad(jnp.tile(raw["dec_b3"].astype(jnp.float32), 4),
                     (0, 128 - 4 * 3)).reshape(1, 128)

    return {
        # encoder
        "enc1_w": conv_wmat(raw["enc_w1"], hd, CP),
        "enc1_b": bias_row(raw["enc_b1"], CP),
        "enc2_w": conv_wmat(raw["enc_w2"], CP, CP),
        "enc2_b": bias_row(raw["enc_b2"], CP),
        "enc3_w": conv_wmat(raw["enc_w3"], CP, num_tokens),
        "enc3_b": bias_row(raw["enc_b3"]),
        # decoder (codebook folded into the first ConvTranspose weight)
        "dec1_w": convt_phase_wmat(raw["dec_w1"], num_tokens, CP,
                                   compose_left=raw["codebook"]),
        "dec1_b": bias_row(raw["dec_b1"], CP, reps=4),
        "dec2_w": convt_phase_wmat(raw["dec_w2"], CP, hd),
        "dec2_b": bias_row(raw["dec_b2"], reps=4),
        "post_w": post_w.astype(jnp.bfloat16),
        "post_b": post_b,
    }


# --------------------------------------------------------------------------
# Discrete_VAE forward (eval path), num_resnet_blocks = 0, num_layers = 3
# --------------------------------------------------------------------------

def discrete_vae_forward(pp, x_nchw, *, hidden_dim, num_tokens):
    B = x_nchw.shape[0]
    x = jnp.transpose(x_nchw, (0, 2, 3, 1)).astype(jnp.bfloat16)   # NHWC bf16

    # ---- encoder: 2 x (conv k4 s2 p1 + LeakyReLU(0.2)) + 1x1 conv to tokens
    p, Ho, Wo = _im2col(x, 4, 4, 2, 1)
    h = pallas_matmul(p, pp["enc1_w"], pp["enc1_b"],
                      leaky=True, out_dtype=jnp.bfloat16)
    h = h.reshape(B, Ho, Wo, -1)

    p, Ho, Wo = _im2col(h, 4, 4, 2, 1)
    h = pallas_matmul(p, pp["enc2_w"], pp["enc2_b"],
                      leaky=True, out_dtype=jnp.bfloat16)
    h = h.reshape(B, Ho, Wo, -1)
    Hh, Ww = Ho, Wo

    logits = pallas_matmul(h.reshape(B * Hh * Ww, -1), pp["enc3_w"],
                           pp["enc3_b"], leaky=False, out_dtype=jnp.float32)
    logits = logits.reshape(B, Hh, Ww, num_tokens)

    # reference: logits = encoder(x).view(-1, hidden_dim, num_tokens) on the
    # NCHW-contiguous buffer; reproduce that exact flat ordering.
    logits_nchw = jnp.transpose(logits, (0, 3, 1, 2))     # (B, num_tokens, h, w)
    total = B * num_tokens * Hh * Ww
    assert total % (hidden_dim * num_tokens) == 0
    Mflat = total // (hidden_dim * num_tokens)
    flat = logits_nchw.reshape(-1, num_tokens)

    # ---- softmax / log_softmax / KLD (eval path; tiled Pallas kernel)
    # TODO(synk): training-path gumbel_softmax (temperature tau) not implemented.
    soft_flat, kld_sum = pallas_softmax_kld(flat)
    kld = kld_sum / jnp.float32(Mflat)                    # 'batchmean'

    # ---- einsum 'b n h w, n d -> b d h w' with the codebook weight (n, d)
    # TODO(synk): reference einsum on the 3-D soft_onehot is shape-invalid; we
    # lay soft_onehot back out as (B, num_tokens, h, w), contract the token
    # axis with the codebook -- here that contraction is pre-folded into the
    # first ConvTranspose weight (dec1_w), so soft feeds the decoder directly.
    soft_nhwc = jnp.transpose(soft_flat.reshape(B, num_tokens, Hh, Ww),
                              (0, 2, 3, 1))               # (B, h, w, num_tokens)

    # ---- decoder: convT1 (codebook folded in) + LReLU, convT2 + LReLU + 1x1
    p, _, _ = _im2col(soft_nhwc, 3, 3, 1, 1)
    h = pallas_matmul(p, pp["dec1_w"], pp["dec1_b"],
                      leaky=True, out_dtype=jnp.bfloat16)
    CPd = pp["dec1_w"].shape[1] // 4                      # padded per-phase ch
    h = (h.reshape(B, Hh, Ww, 2, 2, CPd)
          .transpose(0, 1, 3, 2, 4, 5)
          .reshape(B, 2 * Hh, 2 * Ww, CPd))               # depth-to-space

    p, _, _ = _im2col(h, 3, 3, 1, 1)
    out = pallas_matmul(p, pp["dec2_w"], pp["dec2_b"],
                        post_w=pp["post_w"], post_b=pp["post_b"],
                        leaky=True, out_dtype=jnp.float32)
    H2, W2 = 2 * Hh, 2 * Ww
    out = (out[:, :4 * 3].reshape(B, H2, W2, 2, 2, 3)
           .transpose(0, 1, 3, 2, 4, 5)
           .reshape(B, 2 * H2, 2 * W2, 3))                # depth-to-space
    return jnp.transpose(out, (0, 3, 1, 2)), kld          # NHWC -> NCHW


# --------------------------------------------------------------------------
# Deterministic parameter init (synthetic -- shapes per the module __init__)
# --------------------------------------------------------------------------

def init_params(key, *, hidden_dim, num_tokens, codebook_dim):
    ks = jax.random.split(key, 13)

    def nrm(k, shape, scale=0.05):
        return scale * jax.random.normal(k, shape, jnp.float32)

    hd = hidden_dim
    return {
        "codebook": nrm(ks[0], (num_tokens, codebook_dim)),          # Embedding
        # encoder
        "enc_w1": nrm(ks[1], (hd, hd, 4, 4)), "enc_b1": nrm(ks[2], (hd,)),
        "enc_w2": nrm(ks[3], (hd, hd, 4, 4)), "enc_b2": nrm(ks[4], (hd,)),
        "enc_w3": nrm(ks[5], (num_tokens, hd, 1, 1)),
        "enc_b3": nrm(ks[6], (num_tokens,)),
        # decoder (ConvTranspose2d weights are (Cin, Cout, kh, kw))
        "dec_w1": nrm(ks[7], (codebook_dim, hd, 4, 4)),
        "dec_b1": nrm(ks[8], (hd,)),
        "dec_w2": nrm(ks[9], (hd, hd, 4, 4)), "dec_b2": nrm(ks[10], (hd,)),
        "dec_w3": nrm(ks[11], (3, hd, 1, 1)), "dec_b3": nrm(ks[12], (3,)),
    }


# --------------------------------------------------------------------------
# Main
# --------------------------------------------------------------------------

if __name__ == "__main__":
    # Small config consistent with the module (defaults scaled down):
    IMAGE_SIZE = 16
    NUM_TOKENS = 128
    CODEBOOK_DIM = 128
    HIDDEN_DIM = 32
    BATCH = 2

    key = jax.random.PRNGKey(0)
    kp, kx = jax.random.split(key)
    raw_params = init_params(kp, hidden_dim=HIDDEN_DIM, num_tokens=NUM_TOKENS,
                             codebook_dim=CODEBOOK_DIM)
    pp = prepare_params(raw_params, hidden_dim=HIDDEN_DIM,
                        num_tokens=NUM_TOKENS, codebook_dim=CODEBOOK_DIM)

    # Encoder's first conv expects `hidden_dim` input channels (per the code).
    x = jax.random.normal(kx, (BATCH, HIDDEN_DIM, IMAGE_SIZE, IMAGE_SIZE),
                          jnp.float32)

    fwd = jax.jit(functools.partial(discrete_vae_forward,
                                    hidden_dim=HIDDEN_DIM,
                                    num_tokens=NUM_TOKENS))
    out, kld = fwd(pp, x)
    out = jax.block_until_ready(out)
    kld = jax.block_until_ready(kld)

    assert out.shape == (BATCH, 3, IMAGE_SIZE, IMAGE_SIZE), out.shape
    assert kld.shape == (), kld.shape
    assert bool(jnp.all(jnp.isfinite(out))) and bool(jnp.isfinite(kld))
    print("KERNEL_OK")
</pallas_src>

<mosaic_0001>
module attributes {stable_mosaic.version = 11 : i64} {
  func.func @_mm_kernel(%arg0: i32, %arg1: i32, %arg2: i32, %arg3: memref<128x512xbf16, #tpu.memory_space<vmem>>, %arg4: memref<512x128xbf16, #tpu.memory_space<vmem>>, %arg5: memref<1x128xf32, #tpu.memory_space<vmem>>, %arg6: memref<128x128xbf16, #tpu.memory_space<vmem>>, %arg7: memref<128x128xf32, #tpu.memory_space<vmem>>) attributes {dimension_semantics = [#tpu.dimension_semantics<parallel>, #tpu.dimension_semantics<parallel>, #tpu.dimension_semantics<arbitrary>], iteration_bounds = array<i64: 1, 1, 1>, scalar_prefetch = 0 : i64, scratch_operands = 1 : i64, tpu.core_type = #tpu.core_type<tc>, window_params = [{transform_indices = @transform_0, window_bounds = array<i64: 128, 512>}, {transform_indices = @transform_1, window_bounds = array<i64: 512, 128>}, {transform_indices = @transform_2, window_bounds = array<i64: 1, 128>}, {transform_indices = @transform_3, window_bounds = array<i64: 128, 128>}]} {
    %c0_i32 = arith.constant 0 : i32
    %0 = arith.cmpi eq, %arg2, %c0_i32 : i32
    %1 = arith.extui %0 : i1 to i32
    %c0_i32_0 = arith.constant 0 : i32
    %2 = arith.cmpi ne, %1, %c0_i32_0 : i32
    scf.if %2 {
      %cst_10 = arith.constant 0.000000e+00 : f32
      %12 = vector.broadcast %cst_10 : f32 to vector<128x128xf32>
      %c0_11 = arith.constant 0 : index
      %c0_12 = arith.constant 0 : index
      %13 = vector.load %arg7[%c0_11, %c0_12] : memref<128x128xf32, #tpu.memory_space<vmem>>, vector<128x128xf32>
      tpu.vector_store %arg7[%c0_11, %c0_12], %12 {strides = array<i32>} : memref<128x128xf32, #tpu.memory_space<vmem>>, vector<128x128xf32>,
    } else {
    }
    %c0 = arith.constant 0 : index
    %c0_1 = arith.constant 0 : index
    %3 = vector.load %arg7[%c0, %c0_1] : memref<128x128xf32, #tpu.memory_space<vmem>>, vector<128x128xf32>
    %c0_2 = arith.constant 0 : index
    %c0_3 = arith.constant 0 : index
    %4 = vector.load %arg3[%c0_2, %c0_3] : memref<128x512xbf16, #tpu.memory_space<vmem>>, vector<128x512xbf16>
    %c0_4 = arith.constant 0 : index
    %c0_5 = arith.constant 0 : index
    %5 = vector.load %arg4[%c0_4, %c0_5] : memref<512x128xbf16, #tpu.memory_space<vmem>>, vector<512x128xbf16>
    %cst = arith.constant dense<0.000000e+00> : vector<128x128xf32>
    %6 = tpu.matmul %4, %5, %cst {dimension_numbers = #tpu.dot_dimension_numbers<[1], [0], [0], [1], [0, 0, 1, 1], [], []>} : vector<128x512xbf16>, vector<512x128xbf16>, vector<128x128xf32> -> vector<128x128xf32>
    %7 = arith.addf %3, %6 : vector<128x128xf32>
    %c0_6 = arith.constant 0 : index
    %c0_7 = arith.constant 0 : index
    %8 = vector.load %arg7[%c0_6, %c0_7] : memref<128x128xf32, #tpu.memory_space<vmem>>, vector<128x128xf32>
    tpu.vector_store %arg7[%c0_6, %c0_7], %7 {strides = array<i32>} : memref<128x128xf32, #tpu.memory_space<vmem>>, vector<128x128xf32>,
    %c0_i32_8 = arith.constant 0 : i32
    %9 = arith.cmpi eq, %arg2, %c0_i32_8 : i32
    %10 = arith.extui %9 : i1 to i32
    %c0_i32_9 = arith.constant 0 : i32
    %11 = arith.cmpi ne, %10, %c0_i32_9 : i32
    scf.if %11 {
      %c0_10 = arith.constant 0 : index
      %c0_11 = arith.constant 0 : index
      %12 = vector.load %arg7[%c0_10, %c0_11] : memref<128x128xf32, #tpu.memory_space<vmem>>, vector<128x128xf32>
      %c0_12 = arith.constant 0 : index
      %c0_13 = arith.constant 0 : index
      %13 = vector.load %arg5[%c0_12, %c0_13] : memref<1x128xf32, #tpu.memory_space<vmem>>, vector<1x128xf32>
      %14 = vector.broadcast %13 : vector<1x128xf32> to vector<128x128xf32>
      %15 = arith.addf %12, %14 : vector<128x128xf32>
      %cst_14 = arith.constant 0.000000e+00 : f32
      %16 = vector.broadcast %cst_14 : f32 to vector<128x128xf32>
      %17 = arith.cmpf oge, %15, %16 : vector<128x128xf32>
      %cst_15 = arith.constant 2.000000e-01 : f32
      %18 = vector.broadcast %cst_15 : f32 to vector<128x128xf32>
      %19 = arith.mulf %18, %15 : vector<128x128xf32>
      %20 = arith.select %17, %15, %19 : vector<128x128xi1>, vector<128x128xf32>
      %21 = arith.truncf %20 : vector<128x128xf32> to vector<128x128xbf16>
      %c0_16 = arith.constant 0 : index
      %c0_17 = arith.constant 0 : index
      %22 = vector.load %arg6[%c0_16, %c0_17] : memref<128x128xbf16, #tpu.memory_space<vmem>>, vector<128x128xbf16>
      tpu.vector_store %arg6[%c0_16, %c0_17], %21 {strides = array<i32>} : memref<128x128xbf16, #tpu.memory_space<vmem>>, vector<128x128xbf16>,
    } else {
    }
    return
  }
  func.func @transform_0(%arg0: i32, %arg1: i32, %arg2: i32) -> (i32, i32) {
    %c0_i32 = arith.constant 0 : i32
    return %arg0, %arg2 : i32, i32
  }
  func.func @transform_1(%arg0: i32, %arg1: i32, %arg2: i32) -> (i32, i32) {
    %c0_i32 = arith.constant 0 : i32
    return %arg2, %arg1 : i32, i32
  }
  func.func @transform_2(%arg0: i32, %arg1: i32, %arg2: i32) -> (i32, i32) {
    %c0_i32 = arith.constant 0 : i32
    %c0_i32_0 = arith.constant 0 : i32
    return %c0_i32, %arg1 : i32, i32
  }
  func.func @transform_3(%arg0: i32, %arg1: i32, %arg2: i32) -> (i32, i32) {
    %c0_i32 = arith.constant 0 : i32
    return %arg0, %arg1 : i32, i32
  }
}

module attributes {stable_mosaic.version = 11 : i64} {
  func.func @_mm_kernel(%arg0: i32, %arg1: i32, %arg2: i32, %arg3: memref<32x1024xbf16, #tpu.memory_space<vmem>>, %arg4: memref<1024x128xbf16, #tpu.memory_space<vmem>>, %arg5: memref<1x128xf32, #tpu.memory_space<vmem>>, %arg6: memref<32x128xbf16, #tpu.memory_space<vmem>>, %arg7: memref<32x128xf32, #tpu.memory_space<vmem>>) attributes {dimension_semantics = [#tpu.dimension_semantics<parallel>, #tpu.dimension_semantics<parallel>, #tpu.dimension_semantics<arbitrary>], iteration_bounds = array<i64: 1, 1, 2>, scalar_prefetch = 0 : i64, scratch_operands = 1 : i64, tpu.core_type = #tpu.core_type<tc>, window_params = [{transform_indices = @transform_0, window_bounds = array<i64: 32, 1024>}, {transform_indices = @transform_1, window_bounds = array<i64: 1024, 128>}, {transform_indices = @transform_2, window_bounds = array<i64: 1, 128>}, {transform_indices = @transform_3, window_bounds = array<i64: 32, 128>}]} {
    %c0_i32 = arith.constant 0 : i32
    %0 = arith.cmpi eq, %arg2, %c0_i32 : i32
    %1 = arith.extui %0 : i1 to i32
    %c0_i32_0 = arith.constant 0 : i32
    %2 = arith.cmpi ne, %1, %c0_i32_0 : i32
    scf.if %2 {
      %cst_9 = arith.constant 0.000000e+00 : f32
      %12 = vector.broadcast %cst_9 : f32 to vector<32x128xf32>
      %c0_10 = arith.constant 0 : index
      %c0_11 = arith.constant 0 : index
      %13 = vector.load %arg7[%c0_10, %c0_11] : memref<32x128xf32, #tpu.memory_space<vmem>>, vector<32x128xf32>
      tpu.vector_store %arg7[%c0_10, %c0_11], %12 {strides = array<i32>} : memref<32x128xf32, #tpu.memory_space<vmem>>, vector<32x128xf32>,
    } else {
    }
    %c0 = arith.constant 0 : index
    %c0_1 = arith.constant 0 : index
    %3 = vector.load %arg7[%c0, %c0_1] : memref<32x128xf32, #tpu.memory_space<vmem>>, vector<32x128xf32>
    %c0_2 = arith.constant 0 : index
    %c0_3 = arith.constant 0 : index
    %4 = vector.load %arg3[%c0_2, %c0_3] : memref<32x1024xbf16, #tpu.memory_space<vmem>>, vector<32x1024xbf16>
    %c0_4 = arith.constant 0 : index
    %c0_5 = arith.constant 0 : index
    %5 = vector.load %arg4[%c0_4, %c0_5] : memref<1024x128xbf16, #tpu.memory_space<vmem>>, vector<1024x128xbf16>
    %cst = arith.constant dense<0.000000e+00> : vector<32x128xf32>
    %6 = tpu.matmul %4, %5, %cst {dimension_numbers = #tpu.dot_dimension_numbers<[1], [0], [0], [1], [0, 0, 1, 1], [], []>} : vector<32x1024xbf16>, vector<1024x128xbf16>, vector<32x128xf32> -> vector<32x128xf32>
    %7 = arith.addf %3, %6 : vector<32x128xf32>
    %c0_6 = arith.constant 0 : index
    %c0_7 = arith.constant 0 : index
    %8 = vector.load %arg7[%c0_6, %c0_7] : memref<32x128xf32, #tpu.memory_space<vmem>>, vector<32x128xf32>
    tpu.vector_store %arg7[%c0_6, %c0_7], %7 {strides = array<i32>} : memref<32x128xf32, #tpu.memory_space<vmem>>, vector<32x128xf32>,
    %c1_i32 = arith.constant 1 : i32
    %9 = arith.cmpi eq, %arg2, %c1_i32 : i32
    %10 = arith.extui %9 : i1 to i32
    %c0_i32_8 = arith.constant 0 : i32
    %11 = arith.cmpi ne, %10, %c0_i32_8 : i32
    scf.if %11 {
      %c0_9 = arith.constant 0 : index
      %c0_10 = arith.constant 0 : index
      %12 = vector.load %arg7[%c0_9, %c0_10] : memref<32x128xf32, #tpu.memory_space<vmem>>, vector<32x128xf32>
      %c0_11 = arith.constant 0 : index
      %c0_12 = arith.constant 0 : index
      %13 = vector.load %arg5[%c0_11, %c0_12] : memref<1x128xf32, #tpu.memory_space<vmem>>, vector<1x128xf32>
      %14 = vector.broadcast %13 : vector<1x128xf32> to vector<32x128xf32>
      %15 = arith.addf %12, %14 : vector<32x128xf32>
      %cst_13 = arith.constant 0.000000e+00 : f32
      %16 = vector.broadcast %cst_13 : f32 to vector<32x128xf32>
      %17 = arith.cmpf oge, %15, %16 : vector<32x128xf32>
      %cst_14 = arith.constant 2.000000e-01 : f32
      %18 = vector.broadcast %cst_14 : f32 to vector<32x128xf32>
      %19 = arith.mulf %18, %15 : vector<32x128xf32>
      %20 = arith.select %17, %15, %19 : vector<32x128xi1>, vector<32x128xf32>
      %21 = arith.truncf %20 : vector<32x128xf32> to vector<32x128xbf16>
      %c0_15 = arith.constant 0 : index
      %c0_16 = arith.constant 0 : index
      %22 = vector.load %arg6[%c0_15, %c0_16] : memref<32x128xbf16, #tpu.memory_space<vmem>>, vector<32x128xbf16>
      tpu.vector_store %arg6[%c0_15, %c0_16], %21 {strides = array<i32>} : memref<32x128xbf16, #tpu.memory_space<vmem>>, vector<32x128xbf16>,
    } else {
    }
    return
  }
  func.func @transform_0(%arg0: i32, %arg1: i32, %arg2: i32) -> (i32, i32) {
    %c0_i32 = arith.constant 0 : i32
    return %arg0, %arg2 : i32, i32
  }
  func.func @transform_1(%arg0: i32, %arg1: i32, %arg2: i32) -> (i32, i32) {
    %c0_i32 = arith.constant 0 : i32
    return %arg2, %arg1 : i32, i32
  }
  func.func @transform_2(%arg0: i32, %arg1: i32, %arg2: i32) -> (i32, i32) {
    %c0_i32 = arith.constant 0 : i32
    %c0_i32_0 = arith.constant 0 : i32
    return %c0_i32, %arg1 : i32, i32
  }
  func.func @transform_3(%arg0: i32, %arg1: i32, %arg2: i32) -> (i32, i32) {
    %c0_i32 = arith.constant 0 : i32
    return %arg0, %arg1 : i32, i32
  }
}

module attributes {stable_mosaic.version = 11 : i64} {
  func.func @_mm_kernel(%arg0: i32, %arg1: i32, %arg2: i32, %arg3: memref<32x128xbf16, #tpu.memory_space<vmem>>, %arg4: memref<128x128xbf16, #tpu.memory_space<vmem>>, %arg5: memref<1x128xf32, #tpu.memory_space<vmem>>, %arg6: memref<32x128xf32, #tpu.memory_space<vmem>>, %arg7: memref<32x128xf32, #tpu.memory_space<vmem>>) attributes {dimension_semantics = [#tpu.dimension_semantics<parallel>, #tpu.dimension_semantics<parallel>, #tpu.dimension_semantics<arbitrary>], iteration_bounds = array<i64: 1, 1, 1>, scalar_prefetch = 0 : i64, scratch_operands = 1 : i64, tpu.core_type = #tpu.core_type<tc>, window_params = [{transform_indices = @transform_0, window_bounds = array<i64: 32, 128>}, {transform_indices = @transform_1, window_bounds = array<i64: 128, 128>}, {transform_indices = @transform_2, window_bounds = array<i64: 1, 128>}, {transform_indices = @transform_3, window_bounds = array<i64: 32, 128>}]} {
    %c0_i32 = arith.constant 0 : i32
    %0 = arith.cmpi eq, %arg2, %c0_i32 : i32
    %1 = arith.extui %0 : i1 to i32
    %c0_i32_0 = arith.constant 0 : i32
    %2 = arith.cmpi ne, %1, %c0_i32_0 : i32
    scf.if %2 {
      %cst_10 = arith.constant 0.000000e+00 : f32
      %12 = vector.broadcast %cst_10 : f32 to vector<32x128xf32>
      %c0_11 = arith.constant 0 : index
      %c0_12 = arith.constant 0 : index
      %13 = vector.load %arg7[%c0_11, %c0_12] : memref<32x128xf32, #tpu.memory_space<vmem>>, vector<32x128xf32>
      tpu.vector_store %arg7[%c0_11, %c0_12], %12 {strides = array<i32>} : memref<32x128xf32, #tpu.memory_space<vmem>>, vector<32x128xf32>,
    } else {
    }
    %c0 = arith.constant 0 : index
    %c0_1 = arith.constant 0 : index
    %3 = vector.load %arg7[%c0, %c0_1] : memref<32x128xf32, #tpu.memory_space<vmem>>, vector<32x128xf32>
    %c0_2 = arith.constant 0 : index
    %c0_3 = arith.constant 0 : index
    %4 = vector.load %arg3[%c0_2, %c0_3] : memref<32x128xbf16, #tpu.memory_space<vmem>>, vector<32x128xbf16>
    %c0_4 = arith.constant 0 : index
    %c0_5 = arith.constant 0 : index
    %5 = vector.load %arg4[%c0_4, %c0_5] : memref<128x128xbf16, #tpu.memory_space<vmem>>, vector<128x128xbf16>
    %cst = arith.constant dense<0.000000e+00> : vector<32x128xf32>
    %6 = tpu.matmul %4, %5, %cst {dimension_numbers = #tpu.dot_dimension_numbers<[1], [0], [0], [1], [0, 0, 1, 1], [], []>} : vector<32x128xbf16>, vector<128x128xbf16>, vector<32x128xf32> -> vector<32x128xf32>
    %7 = arith.addf %3, %6 : vector<32x128xf32>
    %c0_6 = arith.constant 0 : index
    %c0_7 = arith.constant 0 : index
    %8 = vector.load %arg7[%c0_6, %c0_7] : memref<32x128xf32, #tpu.memory_space<vmem>>, vector<32x128xf32>
    tpu.vector_store %arg7[%c0_6, %c0_7], %7 {strides = array<i32>} : memref<32x128xf32, #tpu.memory_space<vmem>>, vector<32x128xf32>,
    %c0_i32_8 = arith.constant 0 : i32
    %9 = arith.cmpi eq, %arg2, %c0_i32_8 : i32
    %10 = arith.extui %9 : i1 to i32
    %c0_i32_9 = arith.constant 0 : i32
    %11 = arith.cmpi ne, %10, %c0_i32_9 : i32
    scf.if %11 {
      %c0_10 = arith.constant 0 : index
      %c0_11 = arith.constant 0 : index
      %12 = vector.load %arg7[%c0_10, %c0_11] : memref<32x128xf32, #tpu.memory_space<vmem>>, vector<32x128xf32>
      %c0_12 = arith.constant 0 : index
      %c0_13 = arith.constant 0 : index
      %13 = vector.load %arg5[%c0_12, %c0_13] : memref<1x128xf32, #tpu.memory_space<vmem>>, vector<1x128xf32>
      %14 = vector.broadcast %13 : vector<1x128xf32> to vector<32x128xf32>
      %15 = arith.addf %12, %14 : vector<32x128xf32>
      %c0_14 = arith.constant 0 : index
      %c0_15 = arith.constant 0 : index
      %16 = vector.load %arg6[%c0_14, %c0_15] : memref<32x128xf32, #tpu.memory_space<vmem>>, vector<32x128xf32>
      tpu.vector_store %arg6[%c0_14, %c0_15], %15 {strides = array<i32>} : memref<32x128xf32, #tpu.memory_space<vmem>>, vector<32x128xf32>,
    } else {
    }
    return
  }
  func.func @transform_0(%arg0: i32, %arg1: i32, %arg2: i32) -> (i32, i32) {
    %c0_i32 = arith.constant 0 : i32
    return %arg0, %arg2 : i32, i32
  }
  func.func @transform_1(%arg0: i32, %arg1: i32, %arg2: i32) -> (i32, i32) {
    %c0_i32 = arith.constant 0 : i32
    return %arg2, %arg1 : i32, i32
  }
  func.func @transform_2(%arg0: i32, %arg1: i32, %arg2: i32) -> (i32, i32) {
    %c0_i32 = arith.constant 0 : i32
    %c0_i32_0 = arith.constant 0 : i32
    return %c0_i32, %arg1 : i32, i32
  }
  func.func @transform_3(%arg0: i32, %arg1: i32, %arg2: i32) -> (i32, i32) {
    %c0_i32 = arith.constant 0 : i32
    return %arg0, %arg1 : i32, i32
  }
}

module attributes {stable_mosaic.version = 11 : i64} {
  func.func @_softmax_kld_kernel(%arg0: i32, %arg1: memref<32x128xf32, #tpu.memory_space<vmem>>, %arg2: memref<32x128xbf16, #tpu.memory_space<vmem>>, %arg3: memref<1x128xf32, #tpu.memory_space<vmem>>) attributes {dimension_semantics = [#tpu.dimension_semantics<parallel>], iteration_bounds = array<i64: 1>, scalar_prefetch = 0 : i64, scratch_operands = 0 : i64, tpu.core_type = #tpu.core_type<tc>, window_params = [{transform_indices = @transform_0, window_bounds = array<i64: 32, 128>}, {transform_indices = @transform_1, window_bounds = array<i64: 32, 128>}, {transform_indices = @transform_2, window_bounds = array<i64: 1, 128>}]} {
    %c0 = arith.constant 0 : index
    %c0_0 = arith.constant 0 : index
    %0 = vector.load %arg1[%c0, %c0_0] : memref<32x128xf32, #tpu.memory_space<vmem>>, vector<32x128xf32>
    %cst = arith.constant dense<0xFF800000> : vector<32xf32>
    %1 = vector.multi_reduction <maximumf>, %0, %cst [1] : vector<32x128xf32> to vector<32xf32>
    %2 = vector.shape_cast %1 : vector<32xf32> to vector<32x1xf32>
    %3 = vector.broadcast %2 : vector<32x1xf32> to vector<32x128xf32>
    %4 = arith.subf %0, %3 : vector<32x128xf32>
    %5 = math.exp %4 : vector<32x128xf32>
    %cst_1 = arith.constant dense<0.000000e+00> : vector<32xf32>
    %6 = vector.multi_reduction <add>, %5, %cst_1 [1] : vector<32x128xf32> to vector<32xf32>
    %7 = vector.shape_cast %6 : vector<32xf32> to vector<32x1xf32>
    %8 = tpu.reciprocal %7 {approx = true} : vector<32x1xf32> -> vector<32x1xf32>
    %9 = vector.broadcast %8 : vector<32x1xf32> to vector<32x128xf32>
    %10 = arith.mulf %5, %9 : vector<32x128xf32>
    %11 = arith.truncf %10 : vector<32x128xf32> to vector<32x128xbf16>
    %c0_2 = arith.constant 0 : index
    %c0_3 = arith.constant 0 : index
    %12 = vector.load %arg2[%c0_2, %c0_3] : memref<32x128xbf16, #tpu.memory_space<vmem>>, vector<32x128xbf16>
    tpu.vector_store %arg2[%c0_2, %c0_3], %11 {strides = array<i32>} : memref<32x128xbf16, #tpu.memory_space<vmem>>, vector<32x128xbf16>,
    %13 = vector.broadcast %2 : vector<32x1xf32> to vector<32x128xf32>
    %14 = arith.subf %0, %13 : vector<32x128xf32>
    %15 = math.log %7 : vector<32x1xf32>
    %16 = vector.broadcast %15 : vector<32x1xf32> to vector<32x128xf32>
    %17 = arith.subf %14, %16 : vector<32x128xf32>
    %cst_4 = arith.constant 1.280000e+02 : f32
    %18 = math.log %cst_4 : f32
    %cst_5 = arith.constant 0.000000e+00 : f32
    %19 = arith.subf %cst_5, %18 : f32
    %20 = vector.broadcast %19 : f32 to vector<32x128xf32>
    %21 = arith.subf %20, %17 : vector<32x128xf32>
    %22 = vector.shape_cast %21 : vector<32x128xf32> to vector<1x32x128xf32>
    %cst_6 = arith.constant dense<0.000000e+00> : vector<1xf32>
    %23 = vector.multi_reduction <add>, %22, %cst_6 [1, 2] : vector<1x32x128xf32> to vector<1xf32>
    %24 = vector.shape_cast %23 : vector<1xf32> to vector<1x1x1xf32>
    %25 = vector.extract %24[0, 0, 0] : f32 from vector<1x1x1xf32>
    %cst_7 = arith.constant 7.812500e-03 : f32
    %26 = arith.mulf %25, %cst_7 : f32
    %cst_8 = arith.constant 0.000000e+00 : f32
    %27 = vector.broadcast %cst_8 : f32 to vector<1x128xf32>
    %28 = vector.broadcast %26 : f32 to vector<1x128xf32>
    %29 = arith.addf %27, %28 : vector<1x128xf32>
    %c0_9 = arith.constant 0 : index
    %c0_10 = arith.constant 0 : index
    %30 = vector.load %arg3[%c0_9, %c0_10] : memref<1x128xf32, #tpu.memory_space<vmem>>, vector<1x128xf32>
    tpu.vector_store %arg3[%c0_9, %c0_10], %29 {strides = array<i32>} : memref<1x128xf32, #tpu.memory_space<vmem>>, vector<1x128xf32>,
    return
  }
  func.func @transform_0(%arg0: i32) -> (i32, i32) {
    %c0_i32 = arith.constant 0 : i32
    %c0_i32_0 = arith.constant 0 : i32
    return %arg0, %c0_i32 : i32, i32
  }
  func.func @transform_1(%arg0: i32) -> (i32, i32) {
    %c0_i32 = arith.constant 0 : i32
    %c0_i32_0 = arith.constant 0 : i32
    return %arg0, %c0_i32 : i32, i32
  }
  func.func @transform_2(%arg0: i32) -> (i32, i32) {
    %c0_i32 = arith.constant 0 : i32
    %c0_i32_0 = arith.constant 0 : i32
    return %arg0, %c0_i32 : i32, i32
  }
}

module attributes {stable_mosaic.version = 11 : i64} {
  func.func @_mm_kernel(%arg0: i32, %arg1: i32, %arg2: i32, %arg3: memref<32x384xbf16, #tpu.memory_space<vmem>>, %arg4: memref<384x256xbf16, #tpu.memory_space<vmem>>, %arg5: memref<1x256xf32, #tpu.memory_space<vmem>>, %arg6: memref<32x256xbf16, #tpu.memory_space<vmem>>, %arg7: memref<32x256xf32, #tpu.memory_space<vmem>>) attributes {dimension_semantics = [#tpu.dimension_semantics<parallel>, #tpu.dimension_semantics<parallel>, #tpu.dimension_semantics<arbitrary>], iteration_bounds = array<i64: 1, 2, 3>, scalar_prefetch = 0 : i64, scratch_operands = 1 : i64, tpu.core_type = #tpu.core_type<tc>, window_params = [{transform_indices = @transform_0, window_bounds = array<i64: 32, 384>}, {transform_indices = @transform_1, window_bounds = array<i64: 384, 256>}, {transform_indices = @transform_2, window_bounds = array<i64: 1, 256>}, {transform_indices = @transform_3, window_bounds = array<i64: 32, 256>}]} {
    %c0_i32 = arith.constant 0 : i32
    %0 = arith.cmpi eq, %arg2, %c0_i32 : i32
    %1 = arith.extui %0 : i1 to i32
    %c0_i32_0 = arith.constant 0 : i32
    %2 = arith.cmpi ne, %1, %c0_i32_0 : i32
    scf.if %2 {
      %cst_9 = arith.constant 0.000000e+00 : f32
      %12 = vector.broadcast %cst_9 : f32 to vector<32x256xf32>
      %c0_10 = arith.constant 0 : index
      %c0_11 = arith.constant 0 : index
      %13 = vector.load %arg7[%c0_10, %c0_11] : memref<32x256xf32, #tpu.memory_space<vmem>>, vector<32x256xf32>
      tpu.vector_store %arg7[%c0_10, %c0_11], %12 {strides = array<i32>} : memref<32x256xf32, #tpu.memory_space<vmem>>, vector<32x256xf32>,
    } else {
    }
    %c0 = arith.constant 0 : index
    %c0_1 = arith.constant 0 : index
    %3 = vector.load %arg7[%c0, %c0_1] : memref<32x256xf32, #tpu.memory_space<vmem>>, vector<32x256xf32>
    %c0_2 = arith.constant 0 : index
    %c0_3 = arith.constant 0 : index
    %4 = vector.load %arg3[%c0_2, %c0_3] : memref<32x384xbf16, #tpu.memory_space<vmem>>, vector<32x384xbf16>
    %c0_4 = arith.constant 0 : index
    %c0_5 = arith.constant 0 : index
    %5 = vector.load %arg4[%c0_4, %c0_5] : memref<384x256xbf16, #tpu.memory_space<vmem>>, vector<384x256xbf16>
    %cst = arith.constant dense<0.000000e+00> : vector<32x256xf32>
    %6 = tpu.matmul %4, %5, %cst {dimension_numbers = #tpu.dot_dimension_numbers<[1], [0], [0], [1], [0, 0, 1, 1], [], []>} : vector<32x384xbf16>, vector<384x256xbf16>, vector<32x256xf32> -> vector<32x256xf32>
    %7 = arith.addf %3, %6 : vector<32x256xf32>
    %c0_6 = arith.constant 0 : index
    %c0_7 = arith.constant 0 : index
    %8 = vector.load %arg7[%c0_6, %c0_7] : memref<32x256xf32, #tpu.memory_space<vmem>>, vector<32x256xf32>
    tpu.vector_store %arg7[%c0_6, %c0_7], %7 {strides = array<i32>} : memref<32x256xf32, #tpu.memory_space<vmem>>, vector<32x256xf32>,
    %c2_i32 = arith.constant 2 : i32
    %9 = arith.cmpi eq, %arg2, %c2_i32 : i32
    %10 = arith.extui %9 : i1 to i32
    %c0_i32_8 = arith.constant 0 : i32
    %11 = arith.cmpi ne, %10, %c0_i32_8 : i32
    scf.if %11 {
      %c0_9 = arith.constant 0 : index
      %c0_10 = arith.constant 0 : index
      %12 = vector.load %arg7[%c0_9, %c0_10] : memref<32x256xf32, #tpu.memory_space<vmem>>, vector<32x256xf32>
      %c0_11 = arith.constant 0 : index
      %c0_12 = arith.constant 0 : index
      %13 = vector.load %arg5[%c0_11, %c0_12] : memref<1x256xf32, #tpu.memory_space<vmem>>, vector<1x256xf32>
      %14 = vector.broadcast %13 : vector<1x256xf32> to vector<32x256xf32>
      %15 = arith.addf %12, %14 : vector<32x256xf32>
      %cst_13 = arith.constant 0.000000e+00 : f32
      %16 = vector.broadcast %cst_13 : f32 to vector<32x256xf32>
      %17 = arith.cmpf oge, %15, %16 : vector<32x256xf32>
      %cst_14 = arith.constant 2.000000e-01 : f32
      %18 = vector.broadcast %cst_14 : f32 to vector<32x256xf32>
      %19 = arith.mulf %18, %15 : vector<32x256xf32>
      %20 = arith.select %17, %15, %19 : vector<32x256xi1>, vector<32x256xf32>
      %21 = arith.truncf %20 : vector<32x256xf32> to vector<32x256xbf16>
      %c0_15 = arith.constant 0 : index
      %c0_16 = arith.constant 0 : index
      %22 = vector.load %arg6[%c0_15, %c0_16] : memref<32x256xbf16, #tpu.memory_space<vmem>>, vector<32x256xbf16>
      tpu.vector_store %arg6[%c0_15, %c0_16], %21 {strides = array<i32>} : memref<32x256xbf16, #tpu.memory_space<vmem>>, vector<32x256xbf16>,
    } else {
    }
    return
  }
  func.func @transform_0(%arg0: i32, %arg1: i32, %arg2: i32) -> (i32, i32) {
    %c0_i32 = arith.constant 0 : i32
    return %arg0, %arg2 : i32, i32
  }
  func.func @transform_1(%arg0: i32, %arg1: i32, %arg2: i32) -> (i32, i32) {
    %c0_i32 = arith.constant 0 : i32
    return %arg2, %arg1 : i32, i32
  }
  func.func @transform_2(%arg0: i32, %arg1: i32, %arg2: i32) -> (i32, i32) {
    %c0_i32 = arith.constant 0 : i32
    %c0_i32_0 = arith.constant 0 : i32
    return %c0_i32, %arg1 : i32, i32
  }
  func.func @transform_3(%arg0: i32, %arg1: i32, %arg2: i32) -> (i32, i32) {
    %c0_i32 = arith.constant 0 : i32
    return %arg0, %arg1 : i32, i32
  }
}

module attributes {stable_mosaic.version = 11 : i64} {
  func.func @_mm_kernel(%arg0: i32, %arg1: i32, %arg2: i32, %arg3: memref<128x384xbf16, #tpu.memory_space<vmem>>, %arg4: memref<384x128xbf16, #tpu.memory_space<vmem>>, %arg5: memref<1x128xf32, #tpu.memory_space<vmem>>, %arg6: memref<128x128xbf16, #tpu.memory_space<vmem>>, %arg7: memref<1x128xf32, #tpu.memory_space<vmem>>, %arg8: memref<128x128xf32, #tpu.memory_space<vmem>>, %arg9: memref<128x128xf32, #tpu.memory_space<vmem>>) attributes {dimension_semantics = [#tpu.dimension_semantics<parallel>, #tpu.dimension_semantics<parallel>, #tpu.dimension_semantics<arbitrary>], iteration_bounds = array<i64: 1, 1, 3>, scalar_prefetch = 0 : i64, scratch_operands = 1 : i64, tpu.core_type = #tpu.core_type<tc>, window_params = [{transform_indices = @transform_0, window_bounds = array<i64: 128, 384>}, {transform_indices = @transform_1, window_bounds = array<i64: 384, 128>}, {transform_indices = @transform_2, window_bounds = array<i64: 1, 128>}, {pipeline_mode = #tpu.pipeline_mode<synchronous>, transform_indices = @transform_3, window_bounds = array<i64: 128, 128>}, {pipeline_mode = #tpu.pipeline_mode<synchronous>, transform_indices = @transform_4, window_bounds = array<i64: 1, 128>}, {transform_indices = @transform_5, window_bounds = array<i64: 128, 128>}]} {
    %c0_i32 = arith.constant 0 : i32
    %0 = arith.cmpi eq, %arg2, %c0_i32 : i32
    %1 = arith.extui %0 : i1 to i32
    %c0_i32_0 = arith.constant 0 : i32
    %2 = arith.cmpi ne, %1, %c0_i32_0 : i32
    scf.if %2 {
      %cst_9 = arith.constant 0.000000e+00 : f32
      %12 = vector.broadcast %cst_9 : f32 to vector<128x128xf32>
      %c0_10 = arith.constant 0 : index
      %c0_11 = arith.constant 0 : index
      %13 = vector.load %arg9[%c0_10, %c0_11] : memref<128x128xf32, #tpu.memory_space<vmem>>, vector<128x128xf32>
      tpu.vector_store %arg9[%c0_10, %c0_11], %12 {strides = array<i32>} : memref<128x128xf32, #tpu.memory_space<vmem>>, vector<128x128xf32>,
    } else {
    }
    %c0 = arith.constant 0 : index
    %c0_1 = arith.constant 0 : index
    %3 = vector.load %arg9[%c0, %c0_1] : memref<128x128xf32, #tpu.memory_space<vmem>>, vector<128x128xf32>
    %c0_2 = arith.constant 0 : index
    %c0_3 = arith.constant 0 : index
    %4 = vector.load %arg3[%c0_2, %c0_3] : memref<128x384xbf16, #tpu.memory_space<vmem>>, vector<128x384xbf16>
    %c0_4 = arith.constant 0 : index
    %c0_5 = arith.constant 0 : index
    %5 = vector.load %arg4[%c0_4, %c0_5] : memref<384x128xbf16, #tpu.memory_space<vmem>>, vector<384x128xbf16>
    %cst = arith.constant dense<0.000000e+00> : vector<128x128xf32>
    %6 = tpu.matmul %4, %5, %cst {dimension_numbers = #tpu.dot_dimension_numbers<[1], [0], [0], [1], [0, 0, 1, 1], [], []>} : vector<128x384xbf16>, vector<384x128xbf16>, vector<128x128xf32> -> vector<128x128xf32>
    %7 = arith.addf %3, %6 : vector<128x128xf32>
    %c0_6 = arith.constant 0 : index
    %c0_7 = arith.constant 0 : index
    %8 = vector.load %arg9[%c0_6, %c0_7] : memref<128x128xf32, #tpu.memory_space<vmem>>, vector<128x128xf32>
    tpu.vector_store %arg9[%c0_6, %c0_7], %7 {strides = array<i32>} : memref<128x128xf32, #tpu.memory_space<vmem>>, vector<128x128xf32>,
    %c2_i32 = arith.constant 2 : i32
    %9 = arith.cmpi eq, %arg2, %c2_i32 : i32
    %10 = arith.extui %9 : i1 to i32
    %c0_i32_8 = arith.constant 0 : i32
    %11 = arith.cmpi ne, %10, %c0_i32_8 : i32
    scf.if %11 {
      %c0_9 = arith.constant 0 : index
      %c0_10 = arith.constant 0 : index
      %12 = vector.load %arg9[%c0_9, %c0_10] : memref<128x128xf32, #tpu.memory_space<vmem>>, vector<128x128xf32>
      %c0_11 = arith.constant 0 : index
      %c0_12 = arith.constant 0 : index
      %13 = vector.load %arg5[%c0_11, %c0_12] : memref<1x128xf32, #tpu.memory_space<vmem>>, vector<1x128xf32>
      %14 = vector.broadcast %13 : vector<1x128xf32> to vector<128x128xf32>
      %15 = arith.addf %12, %14 : vector<128x128xf32>
      %cst_13 = arith.constant 0.000000e+00 : f32
      %16 = vector.broadcast %cst_13 : f32 to vector<128x128xf32>
      %17 = arith.cmpf oge, %15, %16 : vector<128x128xf32>
      %cst_14 = arith.constant 2.000000e-01 : f32
      %18 = vector.broadcast %cst_14 : f32 to vector<128x128xf32>
      %19 = arith.mulf %18, %15 : vector<128x128xf32>
      %20 = arith.select %17, %15, %19 : vector<128x128xi1>, vector<128x128xf32>
      %21 = arith.truncf %20 : vector<128x128xf32> to vector<128x128xbf16>
      %c0_15 = arith.constant 0 : index
      %c0_16 = arith.constant 0 : index
      %22 = vector.load %arg6[%c0_15, %c0_16] : memref<128x128xbf16, #tpu.memory_space<vmem>>, vector<128x128xbf16>
      %cst_17 = arith.constant dense<0.000000e+00> : vector<128x128xf32>
      %23 = tpu.matmul %21, %22, %cst_17 {dimension_numbers = #tpu.dot_dimension_numbers<[1], [0], [0], [1], [0, 0, 1, 1], [], []>} : vector<128x128xbf16>, vector<128x128xbf16>, vector<128x128xf32> -> vector<128x128xf32>
      %c0_18 = arith.constant 0 : index
      %c0_19 = arith.constant 0 : index
      %24 = vector.load %arg7[%c0_18, %c0_19] : memref<1x128xf32, #tpu.memory_space<vmem>>, vector<1x128xf32>
      %25 = vector.broadcast %24 : vector<1x128xf32> to vector<128x128xf32>
      %26 = arith.addf %23, %25 : vector<128x128xf32>
      %c0_20 = arith.constant 0 : index
      %c0_21 = arith.constant 0 : index
      %27 = vector.load %arg8[%c0_20, %c0_21] : memref<128x128xf32, #tpu.memory_space<vmem>>, vector<128x128xf32>
      tpu.vector_store %arg8[%c0_20, %c0_21], %26 {strides = array<i32>} : memref<128x128xf32, #tpu.memory_space<vmem>>, vector<128x128xf32>,
    } else {
    }
    return
  }
  func.func @transform_0(%arg0: i32, %arg1: i32, %arg2: i32) -> (i32, i32) {
    %c0_i32 = arith.constant 0 : i32
    return %arg0, %arg2 : i32, i32
  }
  func.func @transform_1(%arg0: i32, %arg1: i32, %arg2: i32) -> (i32, i32) {
    %c0_i32 = arith.constant 0 : i32
    return %arg2, %arg1 : i32, i32
  }
  func.func @transform_2(%arg0: i32, %arg1: i32, %arg2: i32) -> (i32, i32) {
    %c0_i32 = arith.constant 0 : i32
    %c0_i32_0 = arith.constant 0 : i32
    return %c0_i32, %arg1 : i32, i32
  }
  func.func @transform_3(%arg0: i32, %arg1: i32, %arg2: i32) -> (i32, i32) {
    %c0_i32 = arith.constant 0 : i32
    %c0_i32_0 = arith.constant 0 : i32
    %c0_i32_1 = arith.constant 0 : i32
    return %c0_i32, %c0_i32_0 : i32, i32
  }
  func.func @transform_4(%arg0: i32, %arg1: i32, %arg2: i32) -> (i32, i32) {
    %c0_i32 = arith.constant 0 : i32
    %c0_i32_0 = arith.constant 0 : i32
    %c0_i32_1 = arith.constant 0 : i32
    return %c0_i32, %c0_i32_0 : i32, i32
  }
  func.func @transform_5(%arg0: i32, %arg1: i32, %arg2: i32) -> (i32, i32) {
    %c0_i32 = arith.constant 0 : i32
    %c0_i32_0 = arith.constant 0 : i32
    return %arg0, %c0_i32 : i32, i32
  }
}

</mosaic_0001>

<llo_original>
// kernel: discrete_vae_forward.6
$region0: #{discrete_vae_forward.6}
  #allocation0 [shape = 'u32[]', space=smem, size = 0x4, offset = 0x4, fixed_abs, tag = 'smem constant byte address 0x4 - core index']
  #allocation1 [shape = 'u32[144,128]{1,0:T(1,128)}', space=vmem, size = 0x12000, scoped, tag = 'internal scratch']
  #allocation2 [shape = 'f32[128,128]{1,0:T(8,128)}', space=vmem, size = 0x10000, scoped, tag = 'scratch operand']
  %s0 = inlined_call_operand.vmem [shape: bf16[128,512], index: 0, kind: input, shape index: {}]
  %s1 = inlined_call_operand.vmem [shape: bf16[512,128], index: 1, kind: input, shape index: {}]
  %s2 = inlined_call_operand.vmem [shape: f32[1,128], index: 2, kind: input, shape index: {}]
  %s3 = inlined_call_operand.vmem [shape: bf16[128,128], index: 3, kind: output, shape index: {}]
  %s4 = sld [smem:[#allocation0]]
  $region30: #{discrete_vae_forward.6} parent=0
    _
  %s6 = ssub.s32 1, %s4
  %s7 = scalar_select 0, %s6, %s4
  // Predicated region
  $region2: #{discrete_vae_forward.6} parent=0 // pred_check
    _
  $region3: #{discrete_vae_forward.6} parent=0 // pred_check_branch
    %9 = sbr.rel (0) target = $region5
  $region4: #{discrete_vae_forward.6} parent=0 // pred_region
    _
  $region5: #{discrete_vae_forward.6} parent=0 // pred_fallthru
    _
  // Predicated region
  $region6: #{discrete_vae_forward.6} parent=0 // pred_check
    _
  $region7: #{discrete_vae_forward.6} parent=0 // pred_check_branch
    %11 = sbr.rel (0) target = $region9
  $region8: #{discrete_vae_forward.6} parent=0 // pred_region
    _
  $region9: #{discrete_vae_forward.6} parent=0 // pred_fallthru
    _
  // Predicated region
  $region10: #{discrete_vae_forward.6} parent=0 // pred_check
    _
  $region11: #{discrete_vae_forward.6} parent=0 // pred_check_branch
    %13 = sbr.rel (0) target = $region13
  $region12: #{discrete_vae_forward.6} parent=0 // pred_region
    _
  $region13: #{discrete_vae_forward.6} parent=0 // pred_fallthru
    _
  %p15 = scmp.eq.s32.totalorder 0, 0
  // Predicated region
  $region14: #{discrete_vae_forward.6} parent=0 // pred_check
    %p16 = pneg %p15
  $region15: #{discrete_vae_forward.6} parent=0 // pred_check_branch
    %18 = sbr.rel (%p16) target = $region17
  $region16: #{discrete_vae_forward.6} parent=0 // pred_region
    %19 = vst [vmem:[#allocation2] sm:$0xff] 0.0
    %20 = vst [vmem:[#allocation2 + $0x8] sm:$0xff] 0.0
    %21 = vst [vmem:[#allocation2 + $0x10] sm:$0xff] 0.0
    %22 = vst [vmem:[#allocation2 + $0x18] sm:$0xff] 0.0
    %23 = vst [vmem:[#allocation2 + $0x20] sm:$0xff] 0.0
    %24 = vst [vmem:[#allocation2 + $0x28] sm:$0xff] 0.0
    %25 = vst [vmem:[#allocation2 + $0x30] sm:$0xff] 0.0
    %26 = vst [vmem:[#allocation2 + $0x38] sm:$0xff] 0.0
    %27 = vst [vmem:[#allocation2 + $0x40] sm:$0xff] 0.0
    %28 = vst [vmem:[#allocation2 + $0x48] sm:$0xff] 0.0
    %29 = vst [vmem:[#allocation2 + $0x50] sm:$0xff] 0.0
    %30 = vst [vmem:[#allocation2 + $0x58] sm:$0xff] 0.0
    %31 = vst [vmem:[#allocation2 + $0x60] sm:$0xff] 0.0
    %32 = vst [vmem:[#allocation2 + $0x68] sm:$0xff] 0.0
    %33 = vst [vmem:[#allocation2 + $0x70] sm:$0xff] 0.0
    %34 = vst [vmem:[#allocation2 + $0x78] sm:$0xff] 0.0
  $region17: #{discrete_vae_forward.6} parent=0 // pred_fallthru
    _
  %v35 = vld [vmem:[#allocation2] sm:$0xff]
  %v36 = vld [vmem:[#allocation2 + $0x8] sm:$0xff]
  %v37 = vld [vmem:[#allocation2 + $0x10] sm:$0xff]
  %v38 = vld [vmem:[#allocation2 + $0x18] sm:$0xff]
  %v39 = vld [vmem:[#allocation2 + $0x20] sm:$0xff]
  %v40 = vld [vmem:[#allocation2 + $0x28] sm:$0xff]
  %v41 = vld [vmem:[#allocation2 + $0x30] sm:$0xff]
  %v42 = vld [vmem:[#allocation2 + $0x38] sm:$0xff]
  %v43 = vld [vmem:[#allocation2 + $0x40] sm:$0xff]
  %v44 = vld [vmem:[#allocation2 + $0x48] sm:$0xff]
  %v45 = vld [vmem:[#allocation2 + $0x50] sm:$0xff]
  %v46 = vld [vmem:[#allocation2 + $0x58] sm:$0xff]
  %v47 = vld [vmem:[#allocation2 + $0x60] sm:$0xff]
  %v48 = vld [vmem:[#allocation2 + $0x68] sm:$0xff]
  %v49 = vld [vmem:[#allocation2 + $0x70] sm:$0xff]
  %v50 = vld [vmem:[#allocation2 + $0x78] sm:$0xff]
  %v51 = vld [vmem:[%s0] sm:$0xff]
  %v52 = vld [vmem:[%s0 + $0x8] sm:$0xff]
  %v53 = vld [vmem:[%s0 + $0x10] sm:$0xff]
  %v54 = vld [vmem:[%s0 + $0x18] sm:$0xff]
  %v55 = vld [vmem:[%s0 + $0x20] sm:$0xff]
  %v56 = vld [vmem:[%s0 + $0x28] sm:$0xff]
  %v57 = vld [vmem:[%s0 + $0x30] sm:$0xff]
  %v58 = vld [vmem:[%s0 + $0x38] sm:$0xff]
  %v59 = vld [vmem:[%s0 + $0x40] sm:$0xff]
  %v60 = vld [vmem:[%s0 + $0x48] sm:$0xff]
  %v61 = vld [vmem:[%s0 + $0x50] sm:$0xff]
  %v62 = vld [vmem:[%s0 + $0x58] sm:$0xff]
  %v63 = vld [vmem:[%s0 + $0x60] sm:$0xff]
  %v64 = vld [vmem:[%s0 + $0x68] sm:$0xff]
  %v65 = vld [vmem:[%s0 + $0x70] sm:$0xff]
  %v66 = vld [vmem:[%s0 + $0x78] sm:$0xff]
  %v67 = vld [vmem:[%s0 + $0x80] sm:$0xff]
  %v68 = vld [vmem:[%s0 + $0x88] sm:$0xff]
  %v69 = vld [vmem:[%s0 + $0x90] sm:$0xff]
  %v70 = vld [vmem:[%s0 + $0x98] sm:$0xff]
  %v71 = vld [vmem:[%s0 + $0xa0] sm:$0xff]
  %v72 = vld [vmem:[%s0 + $0xa8] sm:$0xff]
  %v73 = vld [vmem:[%s0 + $0xb0] sm:$0xff]
  %v74 = vld [vmem:[%s0 + $0xb8] sm:$0xff]
  %v75 = vld [vmem:[%s0 + $0xc0] sm:$0xff]
  %v76 = vld [vmem:[%s0 + $0xc8] sm:$0xff]
  %v77 = vld [vmem:[%s0 + $0xd0] sm:$0xff]
  %v78 = vld [vmem:[%s0 + $0xd8] sm:$0xff]
  %v79 = vld [vmem:[%s0 + $0xe0] sm:$0xff]
  %v80 = vld [vmem:[%s0 + $0xe8] sm:$0xff]
  %v81 = vld [vmem:[%s0 + $0xf0] sm:$0xff]
  %v82 = vld [vmem:[%s0 + $0xf8] sm:$0xff]
  %v83 = vld [vmem:[%s1] sm:$0xf]
  %v84 = vld [vmem:[%s1 + $0x4] sm:$0xf]
  %v85 = vld [vmem:[%s1 + $0x8] sm:$0xf]
  %v86 = vld [vmem:[%s1 + $0xc] sm:$0xf]
  %v87 = vld [vmem:[%s1 + $0x10] sm:$0xf]
  %v88 = vld [vmem:[%s1 + $0x14] sm:$0xf]
  %v89 = vld [vmem:[%s1 + $0x18] sm:$0xf]
  %v90 = vld [vmem:[%s1 + $0x1c] sm:$0xf]
  %v91 = vld [vmem:[%s1 + $0x20] sm:$0xf]
  %v92 = vld [vmem:[%s1 + $0x24] sm:$0xf]
  %v93 = vld [vmem:[%s1 + $0x28] sm:$0xf]
  %v94 = vld [vmem:[%s1 + $0x2c] sm:$0xf]
  %v95 = vld [vmem:[%s1 + $0x30] sm:$0xf]
  %v96 = vld [vmem:[%s1 + $0x34] sm:$0xf]
  %v97 = vld [vmem:[%s1 + $0x38] sm:$0xf]
  %v98 = vld [vmem:[%s1 + $0x3c] sm:$0xf]
  %v99 = vld [vmem:[%s1 + $0x40] sm:$0xf]
  %v100 = vld [vmem:[%s1 + $0x44] sm:$0xf]
  %v101 = vld [vmem:[%s1 + $0x48] sm:$0xf]
  %v102 = vld [vmem:[%s1 + $0x4c] sm:$0xf]
  %v103 = vld [vmem:[%s1 + $0x50] sm:$0xf]
  %v104 = vld [vmem:[%s1 + $0x54] sm:$0xf]
  %v105 = vld [vmem:[%s1 + $0x58] sm:$0xf]
  %v106 = vld [vmem:[%s1 + $0x5c] sm:$0xf]
  %v107 = vld [vmem:[%s1 + $0x60] sm:$0xf]
  %v108 = vld [vmem:[%s1 + $0x64] sm:$0xf]
  %v109 = vld [vmem:[%s1 + $0x68] sm:$0xf]
  %v110 = vld [vmem:[%s1 + $0x6c] sm:$0xf]
  %v111 = vld [vmem:[%s1 + $0x70] sm:$0xf]
  %v112 = vld [vmem:[%s1 + $0x74] sm:$0xf]
  %v113 = vld [vmem:[%s1 + $0x78] sm:$0xf]
  %v114 = vld [vmem:[%s1 + $0x7c] sm:$0xf]
  %v115 = vld [vmem:[%s1 + $0x80] sm:$0xf]
  %v116 = vld [vmem:[%s1 + $0x84] sm:$0xf]
  %v117 = vld [vmem:[%s1 + $0x88] sm:$0xf]
  %v118 = vld [vmem:[%s1 + $0x8c] sm:$0xf]
  %v119 = vld [vmem:[%s1 + $0x90] sm:$0xf]
  %v120 = vld [vmem:[%s1 + $0x94] sm:$0xf]
  %v121 = vld [vmem:[%s1 + $0x98] sm:$0xf]
  %v122 = vld [vmem:[%s1 + $0x9c] sm:$0xf]
  %v123 = vld [vmem:[%s1 + $0xa0] sm:$0xf]
  %v124 = vld [vmem:[%s1 + $0xa4] sm:$0xf]
  %v125 = vld [vmem:[%s1 + $0xa8] sm:$0xf]
  %v126 = vld [vmem:[%s1 + $0xac] sm:$0xf]
  %v127 = vld [vmem:[%s1 + $0xb0] sm:$0xf]
  %v128 = vld [vmem:[%s1 + $0xb4] sm:$0xf]
  %v129 = vld [vmem:[%s1 + $0xb8] sm:$0xf]
  %v130 = vld [vmem:[%s1 + $0xbc] sm:$0xf]
  %v131 = vld [vmem:[%s1 + $0xc0] sm:$0xf]
  %v132 = vld [vmem:[%s1 + $0xc4] sm:$0xf]
  %v133 = vld [vmem:[%s1 + $0xc8] sm:$0xf]
  %v134 = vld [vmem:[%s1 + $0xcc] sm:$0xf]
  %v135 = vld [vmem:[%s1 + $0xd0] sm:$0xf]
  %v136 = vld [vmem:[%s1 + $0xd4] sm:$0xf]
  %v137 = vld [vmem:[%s1 + $0xd8] sm:$0xf]
  %v138 = vld [vmem:[%s1 + $0xdc] sm:$0xf]
  %v139 = vld [vmem:[%s1 + $0xe0] sm:$0xf]
  %v140 = vld [vmem:[%s1 + $0xe4] sm:$0xf]
  %v141 = vld [vmem:[%s1 + $0xe8] sm:$0xf]
  %v142 = vld [vmem:[%s1 + $0xec] sm:$0xf]
  %v143 = vld [vmem:[%s1 + $0xf0] sm:$0xf]
  %v144 = vld [vmem:[%s1 + $0xf4] sm:$0xf]
  %v145 = vld [vmem:[%s1 + $0xf8] sm:$0xf]
  %v146 = vld [vmem:[%s1 + $0xfc] sm:$0xf]
  %v179 = vunpack.c.l.b16 %v51
  %v180 = vunpack.c.h.b16 %v51
  %v181 = vunpack.c.l.b16 %v52
  %v182 = vunpack.c.h.b16 %v52
  %v183 = vunpack.c.l.b16 %v53
  %v184 = vunpack.c.h.b16 %v53
  %v185 = vunpack.c.l.b16 %v54
  %v186 = vunpack.c.h.b16 %v54
  %v187 = vunpack.c.l.b16 %v55
  %v188 = vunpack.c.h.b16 %v55
  %v189 = vunpack.c.l.b16 %v56
  %v190 = vunpack.c.h.b16 %v56
  %v191 = vunpack.c.l.b16 %v57
  %v192 = vunpack.c.h.b16 %v57
  %v193 = vunpack.c.l.b16 %v58
  %v194 = vunpack.c.h.b16 %v58
  %v195 = vunpack.c.l.b16 %v59
  %v196 = vunpack.c.h.b16 %v59
  %v197 = vunpack.c.l.b16 %v60
  %v198 = vunpack.c.h.b16 %v60
  %v199 = vunpack.c.l.b16 %v61
  %v200 = vunpack.c.h.b16 %v61
  %v201 = vunpack.c.l.b16 %v62
  %v202 = vunpack.c.h.b16 %v62
  %v203 = vunpack.c.l.b16 %v63
  %v204 = vunpack.c.h.b16 %v63
  %v205 = vunpack.c.l.b16 %v64
  %v206 = vunpack.c.h.b16 %v64
  %v207 = vunpack.c.l.b16 %v65
  %v208 = vunpack.c.h.b16 %v65
  %v209 = vunpack.c.l.b16 %v66
  %v210 = vunpack.c.h.b16 %v66
  %v211 = vunpack.c.l.b16 %v67
  %v212 = vunpack.c.h.b16 %v67
  %v213 = vunpack.c.l.b16 %v68
  %v214 = vunpack.c.h.b16 %v68
  %v215 = vunpack.c.l.b16 %v69
  %v216 = vunpack.c.h.b16 %v69
  %v217 = vunpack.c.l.b16 %v70
  %v218 = vunpack.c.h.b16 %v70
  %v219 = vunpack.c.l.b16 %v71
  %v220 = vunpack.c.h.b16 %v71
  %v221 = vunpack.c.l.b16 %v72
  %v222 = vunpack.c.h.b16 %v72
  %v223 = vunpack.c.l.b16 %v73
  %v224 = vunpack.c.h.b16 %v73
  %v225 = vunpack.c.l.b16 %v74
  %v226 = vunpack.c.h.b16 %v74
  %v227 = vunpack.c.l.b16 %v75
  %v228 = vunpack.c.h.b16 %v75
  %v229 = vunpack.c.l.b16 %v76
  %v230 = vunpack.c.h.b16 %v76
  %v231 = vunpack.c.l.b16 %v77
  %v232 = vunpack.c.h.b16 %v77
  %v233 = vunpack.c.l.b16 %v78
  %v234 = vunpack.c.h.b16 %v78
  %v235 = vunpack.c.l.b16 %v79
  %v236 = vunpack.c.h.b16 %v79
  %v237 = vunpack.c.l.b16 %v80
  %v238 = vunpack.c.h.b16 %v80
  %v239 = vunpack.c.l.b16 %v81
  %v240 = vunpack.c.h.b16 %v81
  %v241 = vunpack.c.l.b16 %v82
  %v242 = vunpack.c.h.b16 %v82
  %v243 = vpack.c.b16 %v183, %v179
  %v244 = vpack.c.b16 %v184, %v180
  %v245 = vpack.c.b16 %v185, %v181
  %v246 = vpack.c.b16 %v186, %v182
  %v247 = vpack.c.b16 %v191, %v187
  %v248 = vpack.c.b16 %v192, %v188
  %v249 = vpack.c.b16 %v193, %v189
  %v250 = vpack.c.b16 %v194, %v190
  %v251 = vpack.c.b16 %v199, %v195
  %v252 = vpack.c.b16 %v200, %v196
  %v253 = vpack.c.b16 %v201, %v197
  %v254 = vpack.c.b16 %v202, %v198
  %v255 = vpack.c.b16 %v207, %v203
  %v256 = vpack.c.b16 %v208, %v204
  %v257 = vpack.c.b16 %v209, %v205
  %v258 = vpack.c.b16 %v210, %v206
  %v259 = vpack.c.b16 %v215, %v211
  %v260 = vpack.c.b16 %v216, %v212
  %v261 = vpack.c.b16 %v217, %v213
  %v262 = vpack.c.b16 %v218, %v214
  %v263 = vpack.c.b16 %v223, %v219
  %v264 = vpack.c.b16 %v224, %v220
  %v265 = vpack.c.b16 %v225, %v221
  %v266 = vpack.c.b16 %v226, %v222
  %v267 = vpack.c.b16 %v231, %v227
  %v268 = vpack.c.b16 %v232, %v228
  %v269 = vpack.c.b16 %v233, %v229
  %v270 = vpack.c.b16 %v234, %v230
  %v271 = vpack.c.b16 %v239, %v235
  %v272 = vpack.c.b16 %v240, %v236
  %v273 = vpack.c.b16 %v241, %v237
  %v274 = vpack.c.b16 %v242, %v238
  %v371 = vunpack.c.l.b16 %v83
  %v372 = vunpack.c.l.b16 %v84
  %v373 = vunpack.c.l.b16 %v85
  %v374 = vunpack.c.l.b16 %v86
  %v375 = vunpack.c.l.b16 %v87
  %v376 = vunpack.c.l.b16 %v88
  %v377 = vunpack.c.l.b16 %v89
  %v378 = vunpack.c.l.b16 %v90
  %v379 = vunpack.c.l.b16 %v91
  %v380 = vunpack.c.l.b16 %v92
  %v381 = vunpack.c.l.b16 %v93
  %v382 = vunpack.c.l.b16 %v94
  %v383 = vunpack.c.l.b16 %v95
  %v384 = vunpack.c.l.b16 %v96
  %v385 = vunpack.c.l.b16 %v97
  %v386 = vunpack.c.l.b16 %v98
  %v387 = vunpack.c.l.b16 %v99
  %v388 = vunpack.c.l.b16 %v100
  %v389 = vunpack.c.l.b16 %v101
  %v390 = vunpack.c.l.b16 %v102
  %v391 = vunpack.c.l.b16 %v103
  %v392 = vunpack.c.l.b16 %v104
  %v393 = vunpack.c.l.b16 %v105
  %v394 = vunpack.c.l.b16 %v106
  %v395 = vunpack.c.l.b16 %v107
  %v396 = vunpack.c.l.b16 %v108
  %v397 = vunpack.c.l.b16 %v109
  %v398 = vunpack.c.l.b16 %v110
  %v399 = vunpack.c.l.b16 %v111
  %v400 = vunpack.c.l.b16 %v112
  %v401 = vunpack.c.l.b16 %v113
  %v402 = vunpack.c.l.b16 %v114
  %v403 = vunpack.c.l.b16 %v115
  %v404 = vunpack.c.l.b16 %v116
  %v405 = vunpack.c.l.b16 %v117
  %v406 = vunpack.c.l.b16 %v118
  %v407 = vunpack.c.l.b16 %v119
  %v408 = vunpack.c.l.b16 %v120
  %v409 = vunpack.c.l.b16 %v121
  %v410 = vunpack.c.l.b16 %v122
  %v411 = vunpack.c.l.b16 %v123
  %v412 = vunpack.c.l.b16 %v124
  %v413 = vunpack.c.l.b16 %v125
  %v414 = vunpack.c.l.b16 %v126
  %v415 = vunpack.c.l.b16 %v127
  %v416 = vunpack.c.l.b16 %v128
  %v417 = vunpack.c.l.b16 %v129
  %v418 = vunpack.c.l.b16 %v130
  %v419 = vunpack.c.l.b16 %v131
  %v420 = vunpack.c.l.b16 %v132
  %v421 = vunpack.c.l.b16 %v133
  %v422 = vunpack.c.l.b16 %v134
  %v423 = vunpack.c.l.b16 %v135
  %v424 = vunpack.c.l.b16 %v136
  %v425 = vunpack.c.l.b16 %v137
  %v426 = vunpack.c.l.b16 %v138
  %v427 = vunpack.c.l.b16 %v139
  %v428 = vunpack.c.l.b16 %v140
  %v429 = vunpack.c.l.b16 %v141
  %v430 = vunpack.c.l.b16 %v142
  %v431 = vunpack.c.l.b16 %v143
  %v432 = vunpack.c.l.b16 %v144
  %v433 = vunpack.c.l.b16 %v145
  %v434 = vunpack.c.l.b16 %v146
  %v435 = vpack.c.b16 %v372, %v371
  %v436 = vpack.c.b16 %v374, %v373
  %v437 = vpack.c.b16 %v376, %v375
  %v438 = vpack.c.b16 %v378, %v377
  %v439 = vpack.c.b16 %v380, %v379
  %v440 = vpack.c.b16 %v382, %v381
  %v441 = vpack.c.b16 %v384, %v383
  %v442 = vpack.c.b16 %v386, %v385
  %v443 = vpack.c.b16 %v388, %v387
  %v444 = vpack.c.b16 %v390, %v389
  %v445 = vpack.c.b16 %v392, %v391
  %v446 = vpack.c.b16 %v394, %v393
  %v447 = vpack.c.b16 %v396, %v395
  %v448 = vpack.c.b16 %v398, %v397
  %v449 = vpack.c.b16 %v400, %v399
  %v450 = vpack.c.b16 %v402, %v401
  %v451 = vpack.c.b16 %v404, %v403
  %v452 = vpack.c.b16 %v406, %v405
  %v453 = vpack.c.b16 %v408, %v407
  %v454 = vpack.c.b16 %v410, %v409
  %v455 = vpack.c.b16 %v412, %v411
  %v456 = vpack.c.b16 %v414, %v413
  %v457 = vpack.c.b16 %v416, %v415
  %v458 = vpack.c.b16 %v418, %v417
  %v459 = vpack.c.b16 %v420, %v419
  %v460 = vpack.c.b16 %v422, %v421
  %v461 = vpack.c.b16 %v424, %v423
  %v462 = vpack.c.b16 %v426, %v425
  %v463 = vpack.c.b16 %v428, %v427
  %v464 = vpack.c.b16 %v430, %v429
  %v465 = vpack.c.b16 %v432, %v431
  %v466 = vpack.c.b16 %v434, %v433
  %499 = vmatprep.subr.bf16.mxu0 0
  %500 = vmatpush1.bf16.msra.mxu0 %v442
  %501 = vmatprep.subr.bf16.mxu0 0
  %502 = vmatpush1.bf16.msra.mxu0 %v441
  %503 = vmatprep.subr.bf16.mxu0 0
  %504 = vmatpush1.bf16.msra.mxu0 %v440
  %505 = vmatprep.subr.bf16.mxu0 0
  %506 = vmatpush1.bf16.msra.mxu0 %v439
  %507 = vmatprep.subr.bf16.mxu0 0
  %508 = vmatpush1.bf16.msra.mxu0 %v438
  %509 = vmatprep.subr.bf16.mxu0 0
  %510 = vmatpush1.bf16.msra.mxu0 %v437
  %511 = vmatprep.subr.bf16.mxu0 0
  %512 = vmatpush1.bf16.msra.mxu0 %v436
  %513 = vmatprep.subr.bf16.mxu0 0
  %514 = vmatpush1.bf16.msra.mxu0 %v435
  %515 = vmatprep.subr.bf16.mxu0 0
  %516 = vmatpush2.bf16.msra.mxu0 %v450
  %517 = vmatprep.subr.bf16.mxu0 0
  %518 = vmatpush2.bf16.msra.mxu0 %v449
  %519 = vmatprep.subr.bf16.mxu0 0
  %520 = vmatpush2.bf16.msra.mxu0 %v448
  %521 = vmatprep.subr.bf16.mxu0 0
  %522 = vmatpush2.bf16.msra.mxu0 %v447
  %523 = vmatprep.subr.bf16.mxu0 0
  %524 = vmatpush2.bf16.msra.mxu0 %v446
  %525 = vmatprep.subr.bf16.mxu0 0
  %526 = vmatpush2.bf16.msra.mxu0 %v445
  %527 = vmatprep.subr.bf16.mxu0 0
  %528 = vmatpush2.bf16.msra.mxu0 %v444
  %529 = vmatprep.subr.bf16.mxu0 0
  %530 = vmatpush2.bf16.msra.mxu0 %v443
  %531 = vmatprep.mubr.bf16.mxu0 %v244
  %532 = vmatmul.mubr.bf16.gmra.mxu0 %v243
  %v533 = vpop.f32.mrf.mxu0
  %v534 = vadd.f32 0.0, %v533
  %v535 = vpop.f32.mrf.mxu0
  %v536 = vpop.f32.mrf.mxu0
  %v537 = vadd.f32 0.0, %v536
  %v538 = vpop.f32.mrf.mxu0
  %539 = vmatprep.mubr.bf16.mxu0 %v248
  %540 = vmatmul.mubr.bf16.gmra.mxu0 %v247
  %v541 = vpop.f32.mrf.mxu0
  %v542 = vadd.f32 0.0, %v541
  %v543 = vpop.f32.mrf.mxu0
  %v544 = vpop.f32.mrf.mxu0
  %v545 = vadd.f32 0.0, %v544
  %v546 = vpop.f32.mrf.mxu0
  %547 = vmatprep.mubr.bf16.mxu0 %v252
  %548 = vmatmul.mubr.bf16.gmra.mxu0 %v251
  %v549 = vpop.f32.mrf.mxu0
  %v550 = vadd.f32 0.0, %v549
  %v551 = vpop.f32.mrf.mxu0
  %v552 = vpop.f32.mrf.mxu0
  %v553 = vadd.f32 0.0, %v552
  %v554 = vpop.f32.mrf.mxu0
  %555 = vmatprep.mubr.bf16.mxu0 %v256
  %556 = vmatmul.mubr.bf16.gmra.mxu0 %v255
  %v557 = vpop.f32.mrf.mxu0
  %v558 = vadd.f32 0.0, %v557
  %v559 = vpop.f32.mrf.mxu0
  %v560 = vpop.f32.mrf.mxu0
  %v561 = vadd.f32 0.0, %v560
  %v562 = vpop.f32.mrf.mxu0
  %563 = vmatprep.mubr.bf16.mxu0 %v260
  %564 = vmatmul.mubr.bf16.gmra.mxu0 %v259
  %v565 = vpop.f32.mrf.mxu0
  %v566 = vadd.f32 0.0, %v565
  %v567 = vpop.f32.mrf.mxu0
  %v568 = vpop.f32.mrf.mxu0
  %v569 = vadd.f32 0.0, %v568
  %v570 = vpop.f32.mrf.mxu0
  %571 = vmatprep.mubr.bf16.mxu0 %v264
  %572 = vmatmul.mubr.bf16.gmra.mxu0 %v263
  %v573 = vpop.f32.mrf.mxu0
  %v574 = vadd.f32 0.0, %v573
  %v575 = vpop.f32.mrf.mxu0
  %v576 = vpop.f32.mrf.mxu0
  %v577 = vadd.f32 0.0, %v576
  %v578 = vpop.f32.mrf.mxu0
  %579 = vmatprep.mubr.bf16.mxu0 %v268
  %580 = vmatmul.mubr.bf16.gmra.mxu0 %v267
  %v581 = vpop.f32.mrf.mxu0
  %v582 = vadd.f32 0.0, %v581
  %v583 = vpop.f32.mrf.mxu0
  %v584 = vpop.f32.mrf.mxu0
  %v585 = vadd.f32 0.0, %v584
  %v586 = vpop.f32.mrf.mxu0
  %587 = vmatprep.mubr.bf16.mxu0 %v272
  %588 = vmatmul.mubr.bf16.gmra.mxu0 %v271
  %v589 = vpop.f32.mrf.mxu0
  %v590 = vadd.f32 0.0, %v589
  %v591 = vpop.f32.mrf.mxu0
  %v592 = vpop.f32.mrf.mxu0
  %v593 = vadd.f32 0.0, %v592
  %v594 = vpop.f32.mrf.mxu0
  %595 = vdwg.mxu0
  %596 = vmatprep.subr.bf16.mxu0 0
  %597 = vmatpush1.bf16.msra.mxu0 %v458
  %598 = vmatprep.subr.bf16.mxu0 0
  %599 = vmatpush1.bf16.msra.mxu0 %v457
  %600 = vmatprep.subr.bf16.mxu0 0
  %601 = vmatpush1.bf16.msra.mxu0 %v456
  %602 = vmatprep.subr.bf16.mxu0 0
  %603 = vmatpush1.bf16.msra.mxu0 %v455
  %604 = vmatprep.subr.bf16.mxu0 0
  %605 = vmatpush1.bf16.msra.mxu0 %v454
  %606 = vmatprep.subr.bf16.mxu0 0
  %607 = vmatpush1.bf16.msra.mxu0 %v453
  %608 = vmatprep.subr.bf16.mxu0 0
  %609 = vmatpush1.bf16.msra.mxu0 %v452
  %610 = vmatprep.subr.bf16.mxu0 0
  %611 = vmatpush1.bf16.msra.mxu0 %v451
  %612 = vmatprep.subr.bf16.mxu0 0
  %613 = vmatpush2.bf16.msra.mxu0 %v466
  %614 = vmatprep.subr.bf16.mxu0 0
  %615 = vmatpush2.bf16.msra.mxu0 %v465
  %616 = vmatprep.subr.bf16.mxu0 0
  %617 = vmatpush2.bf16.msra.mxu0 %v464
  %618 = vmatprep.subr.bf16.mxu0 0
  %619 = vmatpush2.bf16.msra.mxu0 %v463
  %620 = vmatprep.subr.bf16.mxu0 0
  %621 = vmatpush2.bf16.msra.mxu0 %v462
  %622 = vmatprep.subr.bf16.mxu0 0
  %623 = vmatpush2.bf16.msra.mxu0 %v461
  %624 = vmatprep.subr.bf16.mxu0 0
  %625 = vmatpush2.bf16.msra.mxu0 %v460
  %626 = vmatprep.subr.bf16.mxu0 0
  %627 = vmatpush2.bf16.msra.mxu0 %v459
  %628 = vmatprep.mubr.bf16.mxu0 %v246
  %629 = vmatmul.mubr.bf16.gmra.mxu0 %v245
  %v630 = vpop.f32.mrf.mxu0
  %v631 = vadd.f32 %v534, %v630
  %v632 = vpop.f32.mrf.mxu0
  %v633 = vpop.f32.mrf.mxu0
  %v634 = vadd.f32 %v537, %v633
  %v635 = vpop.f32.mrf.mxu0
  %636 = vmatprep.mubr.bf16.mxu0 %v250
  %637 = vmatmul.mubr.bf16.gmra.mxu0 %v249
  %v638 = vpop.f32.mrf.mxu0
  %v639 = vadd.f32 %v542, %v638
  %v640 = vpop.f32.mrf.mxu0
  %v641 = vpop.f32.mrf.mxu0
  %v642 = vadd.f32 %v545, %v641
  %v643 = vpop.f32.mrf.mxu0
  %644 = vmatprep.mubr.bf16.mxu0 %v254
  %645 = vmatmul.mubr.bf16.gmra.mxu0 %v253
  %v646 = vpop.f32.mrf.mxu0
  %v647 = vadd.f32 %v550, %v646
  %v648 = vpop.f32.mrf.mxu0
  %v649 = vpop.f32.mrf.mxu0
  %v650 = vadd.f32 %v553, %v649
  %v651 = vpop.f32.mrf.mxu0
  %652 = vmatprep.mubr.bf16.mxu0 %v258
  %653 = vmatmul.mubr.bf16.gmra.mxu0 %v257
  %v654 = vpop.f32.mrf.mxu0
  %v655 = vadd.f32 %v558, %v654
  %v656 = vpop.f32.mrf.mxu0
  %v657 = vpop.f32.mrf.mxu0
  %v658 = vadd.f32 %v561, %v657
  %v659 = vpop.f32.mrf.mxu0
  %660 = vmatprep.mubr.bf16.mxu0 %v262
  %661 = vmatmul.mubr.bf16.gmra.mxu0 %v261
  %v662 = vpop.f32.mrf.mxu0
  %v663 = vadd.f32 %v566, %v662
  %v664 = vpop.f32.mrf.mxu0
  %v665 = vpop.f32.mrf.mxu0
  %v666 = vadd.f32 %v569, %v665
  %v667 = vpop.f32.mrf.mxu0
  %668 = vmatprep.mubr.bf16.mxu0 %v266
  %669 = vmatmul.mubr.bf16.gmra.mxu0 %v265
  %v670 = vpop.f32.mrf.mxu0
  %v671 = vadd.f32 %v574, %v670
  %v672 = vpop.f32.mrf.mxu0
  %v673 = vpop.f32.mrf.mxu0
  %v674 = vadd.f32 %v577, %v673
  %v675 = vpop.f32.mrf.mxu0
  %676 = vmatprep.mubr.bf16.mxu0 %v270
  %677 = vmatmul.mubr.bf16.gmra.mxu0 %v269
  %v678 = vpop.f32.mrf.mxu0
  %v679 = vadd.f32 %v582, %v678
  %v680 = vpop.f32.mrf.mxu0
  %v681 = vpop.f32.mrf.mxu0
  %v682 = vadd.f32 %v585, %v681
  %v683 = vpop.f32.mrf.mxu0
  %684 = vmatprep.mubr.bf16.mxu0 %v274
  %685 = vmatmul.mubr.bf16.gmra.mxu0 %v273
  %v686 = vpop.f32.mrf.mxu0
  %v687 = vadd.f32 %v590, %v686
  %v688 = vpop.f32.mrf.mxu0
  %v689 = vpop.f32.mrf.mxu0
  %v690 = vadd.f32 %v593, %v689
  %v691 = vpop.f32.mrf.mxu0
  %692 = vdwg.mxu0
  %v693 = vadd.f32 %v35, %v631
  %v694 = vadd.f32 %v36, %v634
  %v695 = vadd.f32 %v37, %v639
  %v696 = vadd.f32 %v38, %v642
  %v697 = vadd.f32 %v39, %v647
  %v698 = vadd.f32 %v40, %v650
  %v699 = vadd.f32 %v41, %v655
  %v700 = vadd.f32 %v42, %v658
  %v701 = vadd.f32 %v43, %v663
  %v702 = vadd.f32 %v44, %v666
  %v703 = vadd.f32 %v45, %v671
  %v704 = vadd.f32 %v46, %v674
  %v705 = vadd.f32 %v47, %v679
  %v706 = vadd.f32 %v48, %v682
  %v707 = vadd.f32 %v49, %v687
  %v708 = vadd.f32 %v50, %v690
  %709 = vst [vmem:[#allocation2] sm:$0xff] %v693
  %710 = vst [vmem:[#allocation2 + $0x8] sm:$0xff] %v694
  %711 = vst [vmem:[#allocation2 + $0x10] sm:$0xff] %v695
  %712 = vst [vmem:[#allocation2 + $0x18] sm:$0xff] %v696
  %713 = vst [vmem:[#allocation2 + $0x20] sm:$0xff] %v697
  %714 = vst [vmem:[#allocation2 + $0x28] sm:$0xff] %v698
  %715 = vst [vmem:[#allocation2 + $0x30] sm:$0xff] %v699
  %716 = vst [vmem:[#allocation2 + $0x38] sm:$0xff] %v700
  %717 = vst [vmem:[#allocation2 + $0x40] sm:$0xff] %v701
  %718 = vst [vmem:[#allocation2 + $0x48] sm:$0xff] %v702
  %719 = vst [vmem:[#allocation2 + $0x50] sm:$0xff] %v703
  %720 = vst [vmem:[#allocation2 + $0x58] sm:$0xff] %v704
  %721 = vst [vmem:[#allocation2 + $0x60] sm:$0xff] %v705
  %722 = vst [vmem:[#allocation2 + $0x68] sm:$0xff] %v706
  %723 = vst [vmem:[#allocation2 + $0x70] sm:$0xff] %v707
  %724 = vst [vmem:[#allocation2 + $0x78] sm:$0xff] %v708
  // Predicated region
  $region18: #{discrete_vae_forward.6} parent=0 // pred_check
    %p725 = pneg %p15
  $region19: #{discrete_vae_forward.6} parent=0 // pred_check_branch
    %727 = sbr.rel (%p725) target = $region21
  $region20: #{discrete_vae_forward.6} parent=0 // pred_region
    %v728 = vld [vmem:[#allocation2] sm:$0xff]
    %v729 = vld [vmem:[#allocation2 + $0x8] sm:$0xff]
    %v730 = vld [vmem:[#allocation2 + $0x10] sm:$0xff]
    %v731 = vld [vmem:[#allocation2 + $0x18] sm:$0xff]
    %v732 = vld [vmem:[#allocation2 + $0x20] sm:$0xff]
    %v733 = vld [vmem:[#allocation2 + $0x28] sm:$0xff]
    %v734 = vld [vmem:[#allocation2 + $0x30] sm:$0xff]
    %v735 = vld [vmem:[#allocation2 + $0x38] sm:$0xff]
    %v736 = vld [vmem:[#allocation2 + $0x40] sm:$0xff]
    %v737 = vld [vmem:[#allocation2 + $0x48] sm:$0xff]
    %v738 = vld [vmem:[#allocation2 + $0x50] sm:$0xff]
    %v739 = vld [vmem:[#allocation2 + $0x58] sm:$0xff]
    %v740 = vld [vmem:[#allocation2 + $0x60] sm:$0xff]
    %v741 = vld [vmem:[#allocation2 + $0x68] sm:$0xff]
    %v742 = vld [vmem:[#allocation2 + $0x70] sm:$0xff]
    %v743 = vld [vmem:[#allocation2 + $0x78] sm:$0xff]
    %v744 = vld [vmem:[%s2] sm:$0x1]
    %v746 = vlaneseq
    %v747 = vshrl.u32 %v746, 7
    %v748 = vsub.s32 0, %v747
    %v749 = vrot.slane %v744, %v748
    %v751 = vadd.f32 %v728, %v749
    %v752 = vadd.f32 %v729, %v749
    %v753 = vadd.f32 %v730, %v749
    %v754 = vadd.f32 %v731, %v749
    %v755 = vadd.f32 %v732, %v749
    %v756 = vadd.f32 %v733, %v749
    %v757 = vadd.f32 %v734, %v749
    %v758 = vadd.f32 %v735, %v749
    %v759 = vadd.f32 %v736, %v749
    %v760 = vadd.f32 %v737, %v749
    %v761 = vadd.f32 %v738, %v749
    %v762 = vadd.f32 %v739, %v749
    %v763 = vadd.f32 %v740, %v749
    %v764 = vadd.f32 %v741, %v749
    %v765 = vadd.f32 %v742, %v749
    %v766 = vadd.f32 %v743, %v749
    %vm767 = vcmp.ge.f32.partialorder %v751, 0.0
    %vm768 = vcmp.ge.f32.partialorder %v752, 0.0
    %vm769 = vcmp.ge.f32.partialorder %v753, 0.0
    %vm770 = vcmp.ge.f32.partialorder %v754, 0.0
    %vm771 = vcmp.ge.f32.partialorder %v755, 0.0
    %vm772 = vcmp.ge.f32.partialorder %v756, 0.0
    %vm773 = vcmp.ge.f32.partialorder %v757, 0.0
    %vm774 = vcmp.ge.f32.partialorder %v758, 0.0
    %vm775 = vcmp.ge.f32.partialorder %v759, 0.0
    %vm776 = vcmp.ge.f32.partialorder %v760, 0.0
    %vm777 = vcmp.ge.f32.partialorder %v761, 0.0
    %vm778 = vcmp.ge.f32.partialorder %v762, 0.0
    %vm779 = vcmp.ge.f32.partialorder %v763, 0.0
    %vm780 = vcmp.ge.f32.partialorder %v764, 0.0
    %vm781 = vcmp.ge.f32.partialorder %v765, 0.0
    %vm782 = vcmp.ge.f32.partialorder %v766, 0.0
    %v783 = vmul.f32 %v751, 0.2
    %v784 = vmul.f32 %v752, 0.2
    %v785 = vmul.f32 %v753, 0.2
    %v786 = vmul.f32 %v754, 0.2
    %v787 = vmul.f32 %v755, 0.2
    %v788 = vmul.f32 %v756, 0.2
    %v789 = vmul.f32 %v757, 0.2
    %v790 = vmul.f32 %v758, 0.2
    %v791 = vmul.f32 %v759, 0.2
    %v792 = vmul.f32 %v760, 0.2
    %v793 = vmul.f32 %v761, 0.2
    %v794 = vmul.f32 %v762, 0.2
    %v795 = vmul.f32 %v763, 0.2
    %v796 = vmul.f32 %v764, 0.2
    %v797 = vmul.f32 %v765, 0.2
    %v798 = vmul.f32 %v766, 0.2
    %v799 = vsel %vm767, %v751, %v783
    %v800 = vsel %vm768, %v752, %v784
    %v801 = vsel %vm769, %v753, %v785
    %v802 = vsel %vm770, %v754, %v786
    %v803 = vsel %vm771, %v755, %v787
    %v804 = vsel %vm772, %v756, %v788
    %v805 = vsel %vm773, %v757, %v789
    %v806 = vsel %vm774, %v758, %v790
    %v807 = vsel %vm775, %v759, %v791
    %v808 = vsel %vm776, %v760, %v792
    %v809 = vsel %vm777, %v761, %v793
    %v810 = vsel %vm778, %v762, %v794
    %v811 = vsel %vm779, %v763, %v795
    %v812 = vsel %vm780, %v764, %v796
    %v813 = vsel %vm781, %v765, %v797
    %v814 = vsel %vm782, %v766, %v798
    %v815 = vpack.c.bf16 %v800, %v799
    %v816 = vpack.c.bf16 %v802, %v801
    %v817 = vpack.c.bf16 %v804, %v803
    %v818 = vpack.c.bf16 %v806, %v805
    %v819 = vpack.c.bf16 %v808, %v807
    %v820 = vpack.c.bf16 %v810, %v809
    %v821 = vpack.c.bf16 %v812, %v811
    %v822 = vpack.c.bf16 %v814, %v813
    %v831 = vunpack.c.l.b16 %v815
    %v832 = vunpack.c.h.b16 %v815
    %v833 = vunpack.c.l.b16 %v816
    %v834 = vunpack.c.h.b16 %v816
    %v835 = vunpack.c.l.b16 %v817
    %v836 = vunpack.c.h.b16 %v817
    %v837 = vunpack.c.l.b16 %v818
    %v838 = vunpack.c.h.b16 %v818
    %v839 = vunpack.c.l.b16 %v819
    %v840 = vunpack.c.h.b16 %v819
    %v841 = vunpack.c.l.b16 %v820
    %v842 = vunpack.c.h.b16 %v820
    %v843 = vunpack.c.l.b16 %v821
    %v844 = vunpack.c.h.b16 %v821
    %v845 = vunpack.c.l.b16 %v822
    %v846 = vunpack.c.h.b16 %v822
    %v847 = vpack.c.b16 %v831, %v831
    %v848 = vpack.c.b16 %v832, %v832
    %v849 = vpack.c.b16 %v833, %v833
    %v850 = vpack.c.b16 %v834, %v834
    %v851 = vpack.c.b16 %v835, %v835
    %v852 = vpack.c.b16 %v836, %v836
    %v853 = vpack.c.b16 %v837, %v837
    %v854 = vpack.c.b16 %v838, %v838
    %v855 = vpack.c.b16 %v839, %v839
    %v856 = vpack.c.b16 %v840, %v840
    %v857 = vpack.c.b16 %v841, %v841
    %v858 = vpack.c.b16 %v842, %v842
    %v859 = vpack.c.b16 %v843, %v843
    %v860 = vpack.c.b16 %v844, %v844
    %v861 = vpack.c.b16 %v845, %v845
    %v862 = vpack.c.b16 %v846, %v846
    %879 = vst [vmem:[%s3] sm:$0xf] %v847
    %880 = vst [vmem:[%s3 + $0x4] sm:$0xf] %v848
    %881 = vst [vmem:[%s3 + $0x8] sm:$0xf] %v849
    %882 = vst [vmem:[%s3 + $0xc] sm:$0xf] %v850
    %883 = vst [vmem:[%s3 + $0x10] sm:$0xf] %v851
    %884 = vst [vmem:[%s3 + $0x14] sm:$0xf] %v852
    %885 = vst [vmem:[%s3 + $0x18] sm:$0xf] %v853
    %886 = vst [vmem:[%s3 + $0x1c] sm:$0xf] %v854
    %887 = vst [vmem:[%s3 + $0x20] sm:$0xf] %v855
    %888 = vst [vmem:[%s3 + $0x24] sm:$0xf] %v856
    %889 = vst [vmem:[%s3 + $0x28] sm:$0xf] %v857
    %890 = vst [vmem:[%s3 + $0x2c] sm:$0xf] %v858
    %891 = vst [vmem:[%s3 + $0x30] sm:$0xf] %v859
    %892 = vst [vmem:[%s3 + $0x34] sm:$0xf] %v860
    %893 = vst [vmem:[%s3 + $0x38] sm:$0xf] %v861
    %894 = vst [vmem:[%s3 + $0x3c] sm:$0xf] %v862
  $region21: #{discrete_vae_forward.6} parent=0 // pred_fallthru
    _
  // Predicated region
  $region22: #{discrete_vae_forward.6} parent=0 // pred_check
    _
  $region23: #{discrete_vae_forward.6} parent=0 // pred_check_branch
    %896 = sbr.rel (0) target = $region25
  $region24: #{discrete_vae_forward.6} parent=0 // pred_region
    _
  $region25: #{discrete_vae_forward.6} parent=0 // pred_fallthru
    _
  // Predicated region
  $region26: #{discrete_vae_forward.6} parent=0 // pred_check
    _
  $region27: #{discrete_vae_forward.6} parent=0 // pred_check_branch
    %898 = sbr.rel (0) target = $region29
  $region28: #{discrete_vae_forward.6} parent=0 // pred_region
    _
  $region29: #{discrete_vae_forward.6} parent=0 // pred_fallthru
    _

// kernel: discrete_vae_forward.8
$region0: #{discrete_vae_forward.8}
  #allocation0 [shape = 'u32[]', space=smem, size = 0x4, offset = 0x4, fixed_abs, tag = 'smem constant byte address 0x4 - core index']
  #allocation1 [shape = 'u32[144,128]{1,0:T(1,128)}', space=vmem, size = 0x12000, scoped, tag = 'internal scratch']
  #allocation2 [shape = 'f32[32,128]{1,0:T(8,128)}', space=vmem, size = 0x4000, scoped, tag = 'scratch operand']
  %s0 = inlined_call_operand.vmem [shape: bf16[32,128], index: 0, kind: input, shape index: {}]
  %s1 = inlined_call_operand.vmem [shape: bf16[128,128], index: 1, kind: input, shape index: {}]
  %s2 = inlined_call_operand.vmem [shape: f32[1,128], index: 2, kind: input, shape index: {}]
  %s3 = inlined_call_operand.vmem [shape: f32[32,128], index: 3, kind: output, shape index: {}]
  %s4 = sld [smem:[#allocation0]]
  $region30: #{discrete_vae_forward.8} parent=0
    _
  %s6 = ssub.s32 1, %s4
  %s7 = scalar_select 0, %s6, %s4
  // Predicated region
  $region2: #{discrete_vae_forward.8} parent=0 // pred_check
    _
  $region3: #{discrete_vae_forward.8} parent=0 // pred_check_branch
    %9 = sbr.rel (0) target = $region5
  $region4: #{discrete_vae_forward.8} parent=0 // pred_region
    _
  $region5: #{discrete_vae_forward.8} parent=0 // pred_fallthru
    _
  // Predicated region
  $region6: #{discrete_vae_forward.8} parent=0 // pred_check
    _
  $region7: #{discrete_vae_forward.8} parent=0 // pred_check_branch
    %11 = sbr.rel (0) target = $region9
  $region8: #{discrete_vae_forward.8} parent=0 // pred_region
    _
  $region9: #{discrete_vae_forward.8} parent=0 // pred_fallthru
    _
  // Predicated region
  $region10: #{discrete_vae_forward.8} parent=0 // pred_check
    _
  $region11: #{discrete_vae_forward.8} parent=0 // pred_check_branch
    %13 = sbr.rel (0) target = $region13
  $region12: #{discrete_vae_forward.8} parent=0 // pred_region
    _
  $region13: #{discrete_vae_forward.8} parent=0 // pred_fallthru
    _
  %p15 = scmp.eq.s32.totalorder 0, 0
  // Predicated region
  $region14: #{discrete_vae_forward.8} parent=0 // pred_check
    %p16 = pneg %p15
  $region15: #{discrete_vae_forward.8} parent=0 // pred_check_branch
    %18 = sbr.rel (%p16) target = $region17
  $region16: #{discrete_vae_forward.8} parent=0 // pred_region
    %19 = vst [vmem:[#allocation2] sm:$0xff] 0.0
    %20 = vst [vmem:[#allocation2 + $0x8] sm:$0xff] 0.0
    %21 = vst [vmem:[#allocation2 + $0x10] sm:$0xff] 0.0
    %22 = vst [vmem:[#allocation2 + $0x18] sm:$0xff] 0.0
  $region17: #{discrete_vae_forward.8} parent=0 // pred_fallthru
    _
  %v23 = vld [vmem:[#allocation2] sm:$0xff]
  %v24 = vld [vmem:[#allocation2 + $0x8] sm:$0xff]
  %v25 = vld [vmem:[#allocation2 + $0x10] sm:$0xff]
  %v26 = vld [vmem:[#allocation2 + $0x18] sm:$0xff]
  %v27 = vld [vmem:[%s0] sm:$0xf]
  %v28 = vld [vmem:[%s0 + $0x4] sm:$0xf]
  %v29 = vld [vmem:[%s0 + $0x8] sm:$0xf]
  %v30 = vld [vmem:[%s0 + $0xc] sm:$0xf]
  %v31 = vld [vmem:[%s1] sm:$0xf]
  %v32 = vld [vmem:[%s1 + $0x4] sm:$0xf]
  %v33 = vld [vmem:[%s1 + $0x8] sm:$0xf]
  %v34 = vld [vmem:[%s1 + $0xc] sm:$0xf]
  %v35 = vld [vmem:[%s1 + $0x10] sm:$0xf]
  %v36 = vld [vmem:[%s1 + $0x14] sm:$0xf]
  %v37 = vld [vmem:[%s1 + $0x18] sm:$0xf]
  %v38 = vld [vmem:[%s1 + $0x1c] sm:$0xf]
  %v39 = vld [vmem:[%s1 + $0x20] sm:$0xf]
  %v40 = vld [vmem:[%s1 + $0x24] sm:$0xf]
  %v41 = vld [vmem:[%s1 + $0x28] sm:$0xf]
  %v42 = vld [vmem:[%s1 + $0x2c] sm:$0xf]
  %v43 = vld [vmem:[%s1 + $0x30] sm:$0xf]
  %v44 = vld [vmem:[%s1 + $0x34] sm:$0xf]
  %v45 = vld [vmem:[%s1 + $0x38] sm:$0xf]
  %v46 = vld [vmem:[%s1 + $0x3c] sm:$0xf]
  %v51 = vunpack.c.l.b16 %v27
  %v52 = vunpack.c.l.b16 %v28
  %v53 = vunpack.c.l.b16 %v29
  %v54 = vunpack.c.l.b16 %v30
  %v55 = vpack.c.b16 %v52, %v51
  %v56 = vpack.c.b16 %v54, %v53
  %v75 = vunpack.c.l.b16 %v31
  %v76 = vunpack.c.l.b16 %v32
  %v77 = vunpack.c.l.b16 %v33
  %v78 = vunpack.c.l.b16 %v34
  %v79 = vunpack.c.l.b16 %v35
  %v80 = vunpack.c.l.b16 %v36
  %v81 = vunpack.c.l.b16 %v37
  %v82 = vunpack.c.l.b16 %v38
  %v83 = vunpack.c.l.b16 %v39
  %v84 = vunpack.c.l.b16 %v40
  %v85 = vunpack.c.l.b16 %v41
  %v86 = vunpack.c.l.b16 %v42
  %v87 = vunpack.c.l.b16 %v43
  %v88 = vunpack.c.l.b16 %v44
  %v89 = vunpack.c.l.b16 %v45
  %v90 = vunpack.c.l.b16 %v46
  %v91 = vpack.c.b16 %v76, %v75
  %v92 = vpack.c.b16 %v78, %v77
  %v93 = vpack.c.b16 %v80, %v79
  %v94 = vpack.c.b16 %v82, %v81
  %v95 = vpack.c.b16 %v84, %v83
  %v96 = vpack.c.b16 %v86, %v85
  %v97 = vpack.c.b16 %v88, %v87
  %v98 = vpack.c.b16 %v90, %v89
  %107 = vmatprep.subr.bf16.mxu0 0
  %108 = vmatpush1.bf16.msra.mxu0 %v98
  %109 = vmatprep.subr.bf16.mxu0 0
  %110 = vmatpush1.bf16.msra.mxu0 %v97
  %111 = vmatprep.subr.bf16.mxu0 0
  %112 = vmatpush1.bf16.msra.mxu0 %v96
  %113 = vmatprep.subr.bf16.mxu0 0
  %114 = vmatpush1.bf16.msra.mxu0 %v95
  %115 = vmatprep.subr.bf16.mxu0 0
  %116 = vmatpush1.bf16.msra.mxu0 %v94
  %117 = vmatprep.subr.bf16.mxu0 0
  %118 = vmatpush1.bf16.msra.mxu0 %v93
  %119 = vmatprep.subr.bf16.mxu0 0
  %120 = vmatpush1.bf16.msra.mxu0 %v92
  %121 = vmatprep.subr.bf16.mxu0 0
  %122 = vmatpush1.bf16.msra.mxu0 %v91
  %123 = vmatprep.subr.bf16.mxu0 0
  %124 = vmatpush2.bf16.msra.mxu0 0
  %125 = vmatprep.subr.bf16.mxu0 0
  %126 = vmatpush2.bf16.msra.mxu0 0
  %127 = vmatprep.subr.bf16.mxu0 0
  %128 = vmatpush2.bf16.msra.mxu0 0
  %129 = vmatprep.subr.bf16.mxu0 0
  %130 = vmatpush2.bf16.msra.mxu0 0
  %131 = vmatprep.subr.bf16.mxu0 0
  %132 = vmatpush2.bf16.msra.mxu0 0
  %133 = vmatprep.subr.bf16.mxu0 0
  %134 = vmatpush2.bf16.msra.mxu0 0
  %135 = vmatprep.subr.bf16.mxu0 0
  %136 = vmatpush2.bf16.msra.mxu0 0
  %137 = vmatprep.subr.bf16.mxu0 0
  %138 = vmatpush2.bf16.msra.mxu0 0
  %139 = vmatprep.mubr.bf16.mxu0 0
  %140 = vmatmul.mubr.bf16.gmra.mxu0 %v55
  %v141 = vpop.f32.mrf.mxu0
  %v142 = vadd.f32 0.0, %v141
  %v143 = vpop.f32.mrf.mxu0
  %v144 = vpop.f32.mrf.mxu0
  %v145 = vadd.f32 0.0, %v144
  %v146 = vpop.f32.mrf.mxu0
  %147 = vmatprep.mubr.bf16.mxu0 0
  %148 = vmatmul.mubr.bf16.gmra.mxu0 %v56
  %v149 = vpop.f32.mrf.mxu0
  %v150 = vadd.f32 0.0, %v149
  %v151 = vpop.f32.mrf.mxu0
  %v152 = vpop.f32.mrf.mxu0
  %v153 = vadd.f32 0.0, %v152
  %v154 = vpop.f32.mrf.mxu0
  %155 = vdwg.mxu0
  %v156 = vadd.f32 %v23, %v142
  %v157 = vadd.f32 %v24, %v145
  %v158 = vadd.f32 %v25, %v150
  %v159 = vadd.f32 %v26, %v153
  %160 = vst [vmem:[#allocation2] sm:$0xff] %v156
  %161 = vst [vmem:[#allocation2 + $0x8] sm:$0xff] %v157
  %162 = vst [vmem:[#allocation2 + $0x10] sm:$0xff] %v158
  %163 = vst [vmem:[#allocation2 + $0x18] sm:$0xff] %v159
  // Predicated region
  $region18: #{discrete_vae_forward.8} parent=0 // pred_check
    %p164 = pneg %p15
  $region19: #{discrete_vae_forward.8} parent=0 // pred_check_branch
    %166 = sbr.rel (%p164) target = $region21
  $region20: #{discrete_vae_forward.8} parent=0 // pred_region
    %v167 = vld [vmem:[#allocation2] sm:$0xff]
    %v168 = vld [vmem:[#allocation2 + $0x8] sm:$0xff]
    %v169 = vld [vmem:[#allocation2 + $0x10] sm:$0xff]
    %v170 = vld [vmem:[#allocation2 + $0x18] sm:$0xff]
    %v171 = vld [vmem:[%s2] sm:$0x1]
    %v173 = vlaneseq
    %v174 = vshrl.u32 %v173, 7
    %v175 = vsub.s32 0, %v174
    %v176 = vrot.slane %v171, %v175
    %v178 = vadd.f32 %v167, %v176
    %v179 = vadd.f32 %v168, %v176
    %v180 = vadd.f32 %v169, %v176
    %v181 = vadd.f32 %v170, %v176
    %182 = vst [vmem:[%s3] sm:$0xff] %v178
    %183 = vst [vmem:[%s3 + $0x8] sm:$0xff] %v179
    %184 = vst [vmem:[%s3 + $0x10] sm:$0xff] %v180
    %185 = vst [vmem:[%s3 + $0x18] sm:$0xff] %v181
  $region21: #{discrete_vae_forward.8} parent=0 // pred_fallthru
    _
  // Predicated region
  $region22: #{discrete_vae_forward.8} parent=0 // pred_check
    _
  $region23: #{discrete_vae_forward.8} parent=0 // pred_check_branch
    %187 = sbr.rel (0) target = $region25
  $region24: #{discrete_vae_forward.8} parent=0 // pred_region
    _
  $region25: #{discrete_vae_forward.8} parent=0 // pred_fallthru
    _
  // Predicated region
  $region26: #{discrete_vae_forward.8} parent=0 // pred_check
    _
  $region27: #{discrete_vae_forward.8} parent=0 // pred_check_branch
    %189 = sbr.rel (0) target = $region29
  $region28: #{discrete_vae_forward.8} parent=0 // pred_region
    _
  $region29: #{discrete_vae_forward.8} parent=0 // pred_fallthru
    _

// kernel: discrete_vae_forward.7
$region0: #{discrete_vae_forward.7}
  #allocation0 [shape = 'u32[]', space=smem, size = 0x4, offset = 0x4, fixed_abs, tag = 'smem constant byte address 0x4 - core index']
  #allocation1 [shape = 'u32[144,128]{1,0:T(1,128)}', space=vmem, size = 0x12000, scoped, tag = 'internal scratch']
  #allocation2 [shape = 'f32[32,128]{1,0:T(8,128)}', space=vmem, size = 0x4000, scoped, tag = 'scratch operand']
  %s0 = inlined_call_operand.vmem [shape: bf16[32,2048], index: 0, kind: input, shape index: {}]
  %s1 = inlined_call_operand.vmem [shape: bf16[2048,128], index: 1, kind: input, shape index: {}]
  %s2 = inlined_call_operand.vmem [shape: f32[1,128], index: 2, kind: input, shape index: {}]
  %s3 = inlined_call_operand.vmem [shape: bf16[32,128], index: 3, kind: output, shape index: {}]
  %s4 = sld [smem:[#allocation0]]
  $region76: #{discrete_vae_forward.7} parent=0
    _
  %s6 = ssub.s32 1, %s4
  %s7 = scalar_select 0, %s6, %s4
  $region1: #{discrete_vae_forward.7} parent=0
    #allocation3 [shape = 'u8[131072]{0}', space=vmem, size = 0x20000, scoped, tag = 'input window, operand 0']
    loop: start=0, step=1, limit=4
    $region2: #{discrete_vae_forward.7} parent=1 // loop_pre_header
      _
    $region3: #{discrete_vae_forward.7} parent=1 // loop_header
      %s9 = sphi 0, %s13
      %p10 = scmp.ge.s32.totalorder %s9, 4
      %s16 = sphi 0, %s35
      %s17 = sphi 0, %s31
      %s18 = sphi 0, %s27
      %s19 = sphi 0, %s16
      %s20 = sphi 0, %s17
      %s21 = sphi 0, %s18
      %s22 = sphi 0, %s19
      %s23 = sphi 0, %s20
      %s24 = sphi 0, %s21
      %s40 = sphi 0, %s42
      %s43 = sphi 0, %s40
      %s44 = sphi 0, %s43
      %s60 = sphi 0, %s44
      %s68 = sphi 0, %s70
      %s71 = sphi 0, %s68
      %s72 = sphi 0, %s71
      %s88 = sphi 0, %s72
      %s94 = sphi 0, %s96
      %s97 = sphi 0, %s94
      %s98 = sphi 0, %s97
      %s114 = sphi 0, %s98
      %s122 = sphi 0, %s124
      %s125 = sphi 0, %s122
      %s126 = sphi 0, %s125
      %s142 = sphi 0, %s126
    $region4: #{discrete_vae_forward.7} parent=1 // loop_header_branch
      %12 = sbr.rel (%p10) target = $region8
    $region5: #{discrete_vae_forward.7} parent=1 // loop_body
      %s14 = ssub.s32 %s9, 1
      %s15 = ssub.s32 %s9, 2
      %s25 = sadd.s32 1, %s18
      %p26 = scmp.ge.s32.totalorder %s25, 2
      %s27 = scalar_select %p26, 0, %s25
      %s28 = sadd.s32 1, %s17
      %s29 = scalar_select %p26, %s28, %s17
      %p30 = scmp.ge.s32.totalorder %s29, 1
      %s31 = scalar_select %p30, 0, %s29
      %s32 = sadd.s32 1, %s16
      %s33 = scalar_select %p30, %s32, %s16
      %p34 = scmp.ge.s32.totalorder %s33, 1
      %s35 = scalar_select %p34, 0, %s33
      %s36 = ssub.s32 %s16, %s35
      %s37 = ssub.s32 %s18, %s27
      %s38 = sor.u32 %s36, %s37
      %p39 = scmp.eq.s32.totalorder %s38, 0
      %s41 = sadd.s32 %s40, 1
      %s42 = scalar_select %p39, %s40, %s41
      %p45 = pneg %p39
      %p46 = scmp.eq.s32.totalorder %s9, 1
      %p47 = por %p45, %p46
      %p48 = scmp.ne.s32.totalorder %s40, %s43
      %p49 = scmp.eq.s32.totalorder %s9, 0
      %p50 = por %p48, %p49
      %p51 = scmp.ne.s32.totalorder %s40, %s43
      %p52 = scmp.eq.s32.totalorder %s14, 1
      %p53 = por %p51, %p52
      %p54 = scmp.ne.s32.totalorder %s43, %s44
      %p55 = scmp.eq.s32.totalorder %s14, 0
      %p56 = por %p54, %p55
      %p57 = scmp.ne.s32.totalorder %s43, %s44
      %p58 = scmp.eq.s32.totalorder %s15, 1
      %p59 = por %p57, %p58
      %p61 = scmp.ne.s32.totalorder %s44, %s60
      %p62 = scmp.eq.s32.totalorder %s15, 0
      %p63 = por %p61, %p62
      %s64 = ssub.s32 %s18, %s27
      %s65 = ssub.s32 %s17, %s31
      %s66 = sor.u32 %s64, %s65
      %p67 = scmp.eq.s32.totalorder %s66, 0
      %s69 = sadd.s32 %s68, 1
      %s70 = scalar_select %p67, %s68, %s69
      %p73 = pneg %p67
      %p74 = scmp.eq.s32.totalorder %s9, 1
      %p75 = por %p73, %p74
      %p76 = scmp.ne.s32.totalorder %s68, %s71
      %p77 = scmp.eq.s32.totalorder %s9, 0
      %p78 = por %p76, %p77
      %p79 = scmp.ne.s32.totalorder %s68, %s71
      %p80 = scmp.eq.s32.totalorder %s14, 1
      %p81 = por %p79, %p80
      %p82 = scmp.ne.s32.totalorder %s71, %s72
      %p83 = scmp.eq.s32.totalorder %s14, 0
      %p84 = por %p82, %p83
      %p85 = scmp.ne.s32.totalorder %s71, %s72
      %p86 = scmp.eq.s32.totalorder %s15, 1
      %p87 = por %p85, %p86
      %p89 = scmp.ne.s32.totalorder %s72, %s88
      %p90 = scmp.eq.s32.totalorder %s15, 0
      %p91 = por %p89, %p90
      %s92 = ssub.s32 %s17, %s31
      %p93 = scmp.eq.s32.totalorder %s92, 0
      %s95 = sadd.s32 %s94, 1
      %s96 = scalar_select %p93, %s94, %s95
      %p99 = pneg %p93
      %p100 = scmp.eq.s32.totalorder %s9, 1
      %p101 = por %p99, %p100
      %p102 = scmp.ne.s32.totalorder %s94, %s97
      %p103 = scmp.eq.s32.totalorder %s9, 0
      %p104 = por %p102, %p103
      %p105 = scmp.ne.s32.totalorder %s94, %s97
      %p106 = scmp.eq.s32.totalorder %s14, 1
      %p107 = por %p105, %p106
      %p108 = scmp.ne.s32.totalorder %s97, %s98
      %p109 = scmp.eq.s32.totalorder %s14, 0
      %p110 = por %p108, %p109
      %p111 = scmp.ne.s32.totalorder %s97, %s98
      %p112 = scmp.eq.s32.totalorder %s15, 1
      %p113 = por %p111, %p112
      %p115 = scmp.ne.s32.totalorder %s98, %s114
      %p116 = scmp.eq.s32.totalorder %s15, 0
      %p117 = por %p115, %p116
      %s118 = ssub.s32 %s16, %s35
      %s119 = ssub.s32 %s17, %s31
      %s120 = sor.u32 %s118, %s119
      %p121 = scmp.eq.s32.totalorder %s120, 0
      %s123 = sadd.s32 %s122, 1
      %s124 = scalar_select %p121, %s122, %s123
      %p127 = pneg %p121
      %p128 = scmp.eq.s32.totalorder %s9, 1
      %p129 = por %p127, %p128
      %p130 = scmp.ne.s32.totalorder %s122, %s125
      %p131 = scmp.eq.s32.totalorder %s9, 0
      %p132 = por %p130, %p131
      %p133 = scmp.ne.s32.totalorder %s122, %s125
      %p134 = scmp.eq.s32.totalorder %s14, 1
      %p135 = por %p133, %p134
      %p136 = scmp.ne.s32.totalorder %s125, %s126
      %p137 = scmp.eq.s32.totalorder %s14, 0
      %p138 = por %p136, %p137
      %p139 = scmp.ne.s32.totalorder %s125, %s126
      %p140 = scmp.eq.s32.totalorder %s15, 1
      %p141 = por %p139, %p140
      %p143 = scmp.ne.s32.totalorder %s126, %s142
      %p144 = scmp.eq.s32.totalorder %s15, 0
      %p145 = por %p143, %p144
      %p146 = scmp.le.s32.totalorder 1, %s9
      %p147 = scmp.lt.s32.totalorder %s9, 3
      %p148 = pnand %p146, %p147
      %p149 = pneg %p148
      // Predicated region
      $region9: #{discrete_vae_forward.7} parent=5 // pred_check
        _
      $region10: #{discrete_vae_forward.7} parent=5 // pred_check_branch
        %151 = sbr.rel (%p148) target = $region12
      $region11: #{discrete_vae_forward.7} parent=5 // pred_region
        %s152 = ssub.s32 %s9, 1
        // Predicated region
        $region13: #{discrete_vae_forward.7} parent=11 // pred_check
          %p153 = pneg %p110
        $region14: #{discrete_vae_forward.7} parent=11 // pred_check_branch
          %155 = sbr.rel (%p153) target = $region16
        $region15: #{discrete_vae_forward.7} parent=11 // pred_region
          %p156 = scmp.lt.s32.totalorder %s20, 0
          %s157 = scalar_select %p156, %s20, 0
          %s158 = scalar_lea.vmem %s2, %s157
        $region16: #{discrete_vae_forward.7} parent=11 // pred_fallthru
          _
      $region12: #{discrete_vae_forward.7} parent=5 // pred_fallthru
        _
      %p159 = scmp.lt.s32.totalorder %s9, 2
      // Predicated region
      $region17: #{discrete_vae_forward.7} parent=5 // pred_check
        %p160 = pneg %p159
      $region18: #{discrete_vae_forward.7} parent=5 // pred_check_branch
        %162 = sbr.rel (%p160) target = $region20
      $region19: #{discrete_vae_forward.7} parent=5 // pred_region
        // Predicated region
        $region21: #{discrete_vae_forward.7} parent=19 // pred_check
          %p163 = pneg %p50
        $region22: #{discrete_vae_forward.7} parent=19 // pred_check_branch
          %165 = sbr.rel (%p163) target = $region24
        $region23: #{discrete_vae_forward.7} parent=19 // pred_region
          %s166 = sand.u32 %s40, 1
          %s167 = sand.u32 %s40, 1
          %s168 = smul.addr %s167, 128
          %s169 = scalar_lea.vmem [#allocation3], %s168
          %s170 = smul.u32 4, %s16
          %s171 = smul.u32 8, %s18
          %s172 = smul.addr %s170, 16
          %s173 = sadd.s32 %s171, %s172
          %s174 = smul.addr %s173, 4
          %s175 = scalar_lea.vmem %s0, %s174
          // Predicated region
          $region25: #{discrete_vae_forward.7} parent=23 // pred_check
            _
          $region26: #{discrete_vae_forward.7} parent=23 // pred_check_branch
            %177 = sbr.rel (0) target = $region28
          $region27: #{discrete_vae_forward.7} parent=23 // pred_region
            // Predicated region
            $region29: #{discrete_vae_forward.7} parent=27 // pred_check
              _
            $region30: #{discrete_vae_forward.7} parent=27 // pred_check_branch
              %179 = sbr.rel (0) target = $region32
            $region31: #{discrete_vae_forward.7} parent=27 // pred_region
              loop: start=0, step=1, limit=1
              $region33: #{discrete_vae_forward.7} parent=31 // loop_pre_header
                _
              $region34: #{discrete_vae_forward.7} parent=31 // loop_header
                %s181 = sphi 0, %s185
                %p182 = scmp.ge.s32.totalorder %s181, 1
                %s186 = sphi %s175, %s175
                %s187 = sphi %s169, %s169
              $region35: #{discrete_vae_forward.7} parent=31 // loop_header_branch
                %184 = sbr.rel (%p182) target = $region39
              $region36: #{discrete_vae_forward.7} parent=31 // loop_body
                %v188 = vld [vmem:[%s186] sm:$0xff]
                %189 = vst [vmem:[%s187] sm:$0xff] %v188
                %v190 = vld [vmem:[%s186 + $0x8] sm:$0xff]
                %191 = vst [vmem:[%s187 + $0x8] sm:$0xff] %v190
                %v192 = vld [vmem:[%s186 + $0x10] sm:$0xff]
                %193 = vst [vmem:[%s187 + $0x10] sm:$0xff] %v192
                %v194 = vld [vmem:[%s186 + $0x18] sm:$0xff]
                %195 = vst [vmem:[%s187 + $0x18] sm:$0xff] %v194
                %v196 = vld [vmem:[%s186 + $0x40] sm:$0xff]
                %197 = vst [vmem:[%s187 + $0x20] sm:$0xff] %v196
                %v198 = vld [vmem:[%s186 + $0x48] sm:$0xff]
                %199 = vst [vmem:[%s187 + $0x28] sm:$0xff] %v198
                %v200 = vld [vmem:[%s186 + $0x50] sm:$0xff]
                %201 = vst [vmem:[%s187 + $0x30] sm:$0xff] %v200
                %v202 = vld [vmem:[%s186 + $0x58] sm:$0xff]
                %203 = vst [vmem:[%s187 + $0x38] sm:$0xff] %v202
                %v204 = vld [vmem:[%s186 + $0x80] sm:$0xff]
                %205 = vst [vmem:[%s187 + $0x40] sm:$0xff] %v204
                %v206 = vld [vmem:[%s186 + $0x88] sm:$0xff]
                %207 = vst [vmem:[%s187 + $0x48] sm:$0xff] %v206
                %v208 = vld [vmem:[%s186 + $0x90] sm:$0xff]
                %209 = vst [vmem:[%s187 + $0x50] sm:$0xff] %v208
                %v210 = vld [vmem:[%s186 + $0x98] sm:$0xff]
                %211 = vst [vmem:[%s187 + $0x58] sm:$0xff] %v210
                %v212 = vld [vmem:[%s186 + $0xc0] sm:$0xff]
                %213 = vst [vmem:[%s187 + $0x60] sm:$0xff] %v212
                %v214 = vld [vmem:[%s186 + $0xc8] sm:$0xff]
                %215 = vst [vmem:[%s187 + $0x68] sm:$0xff] %v214
                %v216 = vld [vmem:[%s186 + $0xd0] sm:$0xff]
                %217 = vst [vmem:[%s187 + $0x70] sm:$0xff] %v216
                %v218 = vld [vmem:[%s186 + $0xd8] sm:$0xff]
                %219 = vst [vmem:[%s187 + $0x78] sm:$0xff] %v218
              $region37: #{discrete_vae_forward.7} parent=31 // loop_footer
                %s185 = sadd.s32 1, %s181
              $region38: #{discrete_vae_forward.7} parent=31 // loop_footer_branch
                %180 = sbr.rel target = $region34
              $region39: #{discrete_vae_forward.7} parent=31 // loop_exit
                _
            $region32: #{discrete_vae_forward.7} parent=27 // pred_fallthru
              _
            // Predicated region
            $region40: #{discrete_vae_forward.7} parent=27 // pred_check
              _
            $region41: #{discrete_vae_forward.7} parent=27 // pred_check_branch
              %221 = sbr.rel target = $region43
            $region42: #{discrete_vae_forward.7} parent=27 // pred_region
              _
            $region43: #{discrete_vae_forward.7} parent=27 // pred_fallthru
              _
          $region28: #{discrete_vae_forward.7} parent=23 // pred_fallthru
            _
          %222 = vnop
        $region24: #{discrete_vae_forward.7} parent=19 // pred_fallthru
          _
        // Predicated region
        $region44: #{discrete_vae_forward.7} parent=19 // pred_check
          %p223 = pneg %p78
        $region45: #{discrete_vae_forward.7} parent=19 // pred_check_branch
          %225 = sbr.rel (%p223) target = $region47
        $region46: #{discrete_vae_forward.7} parent=19 // pred_region
          %s226 = smul.u32 128, %s18
          %p227 = scmp.lt.s32.totalorder %s226, 255
          %s228 = scalar_select %p227, %s226, 255
          %p229 = scmp.lt.s32.totalorder %s17, 0
          %s230 = scalar_select %p229, %s17, 0
          %s231 = sadd.s32 %s230, %s228
          %s232 = smul.addr %s231, 4
          %s233 = scalar_lea.vmem %s1, %s232
          %s234 = smul.u32 128, %s18
        $region47: #{discrete_vae_forward.7} parent=19 // pred_fallthru
          _
      $region20: #{discrete_vae_forward.7} parent=5 // pred_fallthru
        _
      %p235 = scmp.le.s32.totalorder 1, %s9
      %p236 = scmp.lt.s32.totalorder %s9, 3
      %p237 = pnand %p235, %p236
      %p238 = pneg %p237
      // Predicated region
      $region48: #{discrete_vae_forward.7} parent=5 // pred_check
        _
      $region49: #{discrete_vae_forward.7} parent=5 // pred_check_branch
        %240 = sbr.rel (%p237) target = $region51
      $region50: #{discrete_vae_forward.7} parent=5 // pred_region
        %s241 = ssub.s32 %s9, 1
        %s242 = sand.u32 %s43, 1
        %s243 = sand.u32 %s43, 1
        %s244 = smul.addr %s243, 128
        %s245 = scalar_lea.vmem [#allocation3], %s244
        // Predicated region
        $region52: #{discrete_vae_forward.7} parent=50 // pred_check
          %p246 = pneg %p56
        $region53: #{discrete_vae_forward.7} parent=50 // pred_check_branch
          %248 = sbr.rel (%p246) target = $region55
        $region54: #{discrete_vae_forward.7} parent=50 // pred_region
          _
        $region55: #{discrete_vae_forward.7} parent=50 // pred_fallthru
          _
        %s249 = sand.u32 %s43, 1
        %s250 = sand.u32 %s43, 1
        %s251 = smul.addr %s250, 128
        %s252 = scalar_lea.vmem [#allocation3], %s251
        %p253 = pneg %p56
        %p254 = pneg %p53
        %s255 = smul.u32 128, %s21
        %p256 = scmp.lt.s32.totalorder %s255, 255
        %s257 = scalar_select %p256, %s255, 255
        %p258 = scmp.lt.s32.totalorder %s20, 0
        %s259 = scalar_select %p258, %s20, 0
        %s260 = sadd.s32 %s259, %s257
        %s261 = smul.addr %s260, 4
        %s262 = scalar_lea.vmem %s1, %s261
        %p263 = pneg %p84
        %p264 = pneg %p81
        %p265 = scmp.lt.s32.totalorder %s20, 0
        %s266 = scalar_select %p265, %s20, 0
        %s267 = scalar_lea.vmem %s2, %s266
        %p268 = pneg %p110
        %p269 = pneg %p107
        %p270 = pneg %p138
        %p271 = pneg %p135
        %s272 = smul.u32 4, %s19
        %p273 = scmp.lt.s32.totalorder %s272, 3
        %s274 = scalar_select %p273, %s272, 3
        %p275 = scmp.lt.s32.totalorder %s20, 0
        %s276 = scalar_select %p275, %s20, 0
        %s277 = sadd.s32 %s276, %s274
        %s278 = smul.addr %s277, 4
        %s279 = scalar_lea.vmem %s3, %s278
        %s280 = smul.u32 4, %s19
        %s281 = smul.u32 8, %s21
        %s282 = smul.u32 128, %s21
        %p283 = scmp.lt.s32.totalorder %s282, 255
        %s284 = scalar_select %p283, %s282, 255
        %p285 = scmp.lt.s32.totalorder %s20, 0
        %s286 = scalar_select %p285, %s20, 0
        %s287 = sadd.s32 %s286, %s284
        %s288 = smul.addr %s287, 4
        %s289 = scalar_lea.vmem %s1, %s288
        %s290 = smul.u32 128, %s21
        %p291 = scmp.lt.s32.totalorder %s20, 0
        %s292 = scalar_select %p291, %s20, 0
        %s293 = scalar_lea.vmem %s2, %s292
        %s294 = smul.u32 4, %s19
        %p295 = scmp.lt.s32.totalorder %s294, 3
        %s296 = scalar_select %p295, %s294, 3
        %p297 = scmp.lt.s32.totalorder %s20, 0
        %s298 = scalar_select %p297, %s20, 0
        %s299 = sadd.s32 %s298, %s296
        %s300 = smul.addr %s299, 4
        %s301 = scalar_lea.vmem %s3, %s300
        %s302 = smul.u32 4, %s19
        %p304 = scmp.eq.s32.totalorder %s21, 0
        // Predicated region
        $region56: #{discrete_vae_forward.7} parent=50 // pred_check
          %p305 = pneg %p304
        $region57: #{discrete_vae_forward.7} parent=50 // pred_check_branch
          %307 = sbr.rel (%p305) target = $region59
        $region58: #{discrete_vae_forward.7} parent=50 // pred_region
          %308 = vst [vmem:[#allocation2] sm:$0xff] 0.0
          %309 = vst [vmem:[#allocation2 + $0x8] sm:$0xff] 0.0
          %310 = vst [vmem:[#allocation2 + $0x10] sm:$0xff] 0.0
          %311 = vst [vmem:[#allocation2 + $0x18] sm:$0xff] 0.0
        $region59: #{discrete_vae_forward.7} parent=50 // pred_fallthru
          _
        %v312 = vld [vmem:[#allocation2] sm:$0xff]
        %v313 = vld [vmem:[#allocation2 + $0x8] sm:$0xff]
        %v314 = vld [vmem:[#allocation2 + $0x10] sm:$0xff]
        %v315 = vld [vmem:[#allocation2 + $0x18] sm:$0xff]
        %v316 = vld [vmem:[%s245] sm:$0xff]
        %v317 = vld [vmem:[%s245 + $0x8] sm:$0xff]
        %v318 = vld [vmem:[%s245 + $0x10] sm:$0xff]
        %v319 = vld [vmem:[%s245 + $0x18] sm:$0xff]
        %v320 = vld [vmem:[%s245 + $0x20] sm:$0xff]
        %v321 = vld [vmem:[%s245 + $0x28] sm:$0xff]
        %v322 = vld [vmem:[%s245 + $0x30] sm:$0xff]
        %v323 = vld [vmem:[%s245 + $0x38] sm:$0xff]
        %v324 = vld [vmem:[%s245 + $0x40] sm:$0xff]
        %v325 = vld [vmem:[%s245 + $0x48] sm:$0xff]
        %v326 = vld [vmem:[%s245 + $0x50] sm:$0xff]
        %v327 = vld [vmem:[%s245 + $0x58] sm:$0xff]
        %v328 = vld [vmem:[%s245 + $0x60] sm:$0xff]
        %v329 = vld [vmem:[%s245 + $0x68] sm:$0xff]
        %v330 = vld [vmem:[%s245 + $0x70] sm:$0xff]
        %v331 = vld [vmem:[%s245 + $0x78] sm:$0xff]
        %v332 = vld [vmem:[%s289] sm:$0xf]
        %v333 = vld [vmem:[%s289 + $0x4] sm:$0xf]
        %v334 = vld [vmem:[%s289 + $0x8] sm:$0xf]
        %v335 = vld [vmem:[%s289 + $0xc] sm:$0xf]
        %v336 = vld [vmem:[%s289 + $0x10] sm:$0xf]
        %v337 = vld [vmem:[%s289 + $0x14] sm:$0xf]
        %v338 = vld [vmem:[%s289 + $0x18] sm:$0xf]
        %v339 = vld [vmem:[%s289 + $0x1c] sm:$0xf]
        %v340 = vld [vmem:[%s289 + $0x20] sm:$0xf]
        %v341 = vld [vmem:[%s289 + $0x24] sm:$0xf]
        %v342 = vld [vmem:[%s289 + $0x28] sm:$0xf]
        %v343 = vld [vmem:[%s289 + $0x2c] sm:$0xf]
        %v344 = vld [vmem:[%s289 + $0x30] sm:$0xf]
        %v345 = vld [vmem:[%s289 + $0x34] sm:$0xf]
        %v346 = vld [vmem:[%s289 + $0x38] sm:$0xf]
        %v347 = vld [vmem:[%s289 + $0x3c] sm:$0xf]
        %v348 = vld [vmem:[%s289 + $0x40] sm:$0xf]
        %v349 = vld [vmem:[%s289 + $0x44] sm:$0xf]
        %v350 = vld [vmem:[%s289 + $0x48] sm:$0xf]
        %v351 = vld [vmem:[%s289 + $0x4c] sm:$0xf]
        %v352 = vld [vmem:[%s289 + $0x50] sm:$0xf]
        %v353 = vld [vmem:[%s289 + $0x54] sm:$0xf]
        %v354 = vld [vmem:[%s289 + $0x58] sm:$0xf]
        %v355 = vld [vmem:[%s289 + $0x5c] sm:$0xf]
        %v356 = vld [vmem:[%s289 + $0x60] sm:$0xf]
        %v357 = vld [vmem:[%s289 + $0x64] sm:$0xf]
        %v358 = vld [vmem:[%s289 + $0x68] sm:$0xf]
        %v359 = vld [vmem:[%s289 + $0x6c] sm:$0xf]
        %v360 = vld [vmem:[%s289 + $0x70] sm:$0xf]
        %v361 = vld [vmem:[%s289 + $0x74] sm:$0xf]
        %v362 = vld [vmem:[%s289 + $0x78] sm:$0xf]
        %v363 = vld [vmem:[%s289 + $0x7c] sm:$0xf]
        %v364 = vld [vmem:[%s289 + $0x80] sm:$0xf]
        %v365 = vld [vmem:[%s289 + $0x84] sm:$0xf]
        %v366 = vld [vmem:[%s289 + $0x88] sm:$0xf]
        %v367 = vld [vmem:[%s289 + $0x8c] sm:$0xf]
        %v368 = vld [vmem:[%s289 + $0x90] sm:$0xf]
        %v369 = vld [vmem:[%s289 + $0x94] sm:$0xf]
        %v370 = vld [vmem:[%s289 + $0x98] sm:$0xf]
        %v371 = vld [vmem:[%s289 + $0x9c] sm:$0xf]
        %v372 = vld [vmem:[%s289 + $0xa0] sm:$0xf]
        %v373 = vld [vmem:[%s289 + $0xa4] sm:$0xf]
        %v374 = vld [vmem:[%s289 + $0xa8] sm:$0xf]
        %v375 = vld [vmem:[%s289 + $0xac] sm:$0xf]
        %v376 = vld [vmem:[%s289 + $0xb0] sm:$0xf]
        %v377 = vld [vmem:[%s289 + $0xb4] sm:$0xf]
        %v378 = vld [vmem:[%s289 + $0xb8] sm:$0xf]
        %v379 = vld [vmem:[%s289 + $0xbc] sm:$0xf]
        %v380 = vld [vmem:[%s289 + $0xc0] sm:$0xf]
        %v381 = vld [vmem:[%s289 + $0xc4] sm:$0xf]
        %v382 = vld [vmem:[%s289 + $0xc8] sm:$0xf]
        %v383 = vld [vmem:[%s289 + $0xcc] sm:$0xf]
        %v384 = vld [vmem:[%s289 + $0xd0] sm:$0xf]
        %v385 = vld [vmem:[%s289 + $0xd4] sm:$0xf]
        %v386 = vld [vmem:[%s289 + $0xd8] sm:$0xf]
        %v387 = vld [vmem:[%s289 + $0xdc] sm:$0xf]
        %v388 = vld [vmem:[%s289 + $0xe0] sm:$0xf]
        %v389 = vld [vmem:[%s289 + $0xe4] sm:$0xf]
        %v390 = vld [vmem:[%s289 + $0xe8] sm:$0xf]
        %v391 = vld [vmem:[%s289 + $0xec] sm:$0xf]
        %v392 = vld [vmem:[%s289 + $0xf0] sm:$0xf]
        %v393 = vld [vmem:[%s289 + $0xf4] sm:$0xf]
        %v394 = vld [vmem:[%s289 + $0xf8] sm:$0xf]
        %v395 = vld [vmem:[%s289 + $0xfc] sm:$0xf]
        %v396 = vld [vmem:[%s289 + $0x100] sm:$0xf]
        %v397 = vld [vmem:[%s289 + $0x104] sm:$0xf]
        %v398 = vld [vmem:[%s289 + $0x108] sm:$0xf]
        %v399 = vld [vmem:[%s289 + $0x10c] sm:$0xf]
        %v400 = vld [vmem:[%s289 + $0x110] sm:$0xf]
        %v401 = vld [vmem:[%s289 + $0x114] sm:$0xf]
        %v402 = vld [vmem:[%s289 + $0x118] sm:$0xf]
        %v403 = vld [vmem:[%s289 + $0x11c] sm:$0xf]
        %v404 = vld [vmem:[%s289 + $0x120] sm:$0xf]
        %v405 = vld [vmem:[%s289 + $0x124] sm:$0xf]
        %v406 = vld [vmem:[%s289 + $0x128] sm:$0xf]
        %v407 = vld [vmem:[%s289 + $0x12c] sm:$0xf]
        %v408 = vld [vmem:[%s289 + $0x130] sm:$0xf]
        %v409 = vld [vmem:[%s289 + $0x134] sm:$0xf]
        %v410 = vld [vmem:[%s289 + $0x138] sm:$0xf]
        %v411 = vld [vmem:[%s289 + $0x13c] sm:$0xf]
        %v412 = vld [vmem:[%s289 + $0x140] sm:$0xf]
        %v413 = vld [vmem:[%s289 + $0x144] sm:$0xf]
        %v414 = vld [vmem:[%s289 + $0x148] sm:$0xf]
        %v415 = vld [vmem:[%s289 + $0x14c] sm:$0xf]
        %v416 = vld [vmem:[%s289 + $0x150] sm:$0xf]
        %v417 = vld [vmem:[%s289 + $0x154] sm:$0xf]
        %v418 = vld [vmem:[%s289 + $0x158] sm:$0xf]
        %v419 = vld [vmem:[%s289 + $0x15c] sm:$0xf]
        %v420 = vld [vmem:[%s289 + $0x160] sm:$0xf]
        %v421 = vld [vmem:[%s289 + $0x164] sm:$0xf]
        %v422 = vld [vmem:[%s289 + $0x168] sm:$0xf]
        %v423 = vld [vmem:[%s289 + $0x16c] sm:$0xf]
        %v424 = vld [vmem:[%s289 + $0x170] sm:$0xf]
        %v425 = vld [vmem:[%s289 + $0x174] sm:$0xf]
        %v426 = vld [vmem:[%s289 + $0x178] sm:$0xf]
        %v427 = vld [vmem:[%s289 + $0x17c] sm:$0xf]
        %v428 = vld [vmem:[%s289 + $0x180] sm:$0xf]
        %v429 = vld [vmem:[%s289 + $0x184] sm:$0xf]
        %v430 = vld [vmem:[%s289 + $0x188] sm:$0xf]
        %v431 = vld [vmem:[%s289 + $0x18c] sm:$0xf]
        %v432 = vld [vmem:[%s289 + $0x190] sm:$0xf]
        %v433 = vld [vmem:[%s289 + $0x194] sm:$0xf]
        %v434 = vld [vmem:[%s289 + $0x198] sm:$0xf]
        %v435 = vld [vmem:[%s289 + $0x19c] sm:$0xf]
        %v436 = vld [vmem:[%s289 + $0x1a0] sm:$0xf]
        %v437 = vld [vmem:[%s289 + $0x1a4] sm:$0xf]
        %v438 = vld [vmem:[%s289 + $0x1a8] sm:$0xf]
        %v439 = vld [vmem:[%s289 + $0x1ac] sm:$0xf]
        %v440 = vld [vmem:[%s289 + $0x1b0] sm:$0xf]
        %v441 = vld [vmem:[%s289 + $0x1b4] sm:$0xf]
        %v442 = vld [vmem:[%s289 + $0x1b8] sm:$0xf]
        %v443 = vld [vmem:[%s289 + $0x1bc] sm:$0xf]
        %v444 = vld [vmem:[%s289 + $0x1c0] sm:$0xf]
        %v445 = vld [vmem:[%s289 + $0x1c4] sm:$0xf]
        %v446 = vld [vmem:[%s289 + $0x1c8] sm:$0xf]
        %v447 = vld [vmem:[%s289 + $0x1cc] sm:$0xf]
        %v448 = vld [vmem:[%s289 + $0x1d0] sm:$0xf]
        %v449 = vld [vmem:[%s289 + $0x1d4] sm:$0xf]
        %v450 = vld [vmem:[%s289 + $0x1d8] sm:$0xf]
        %v451 = vld [vmem:[%s289 + $0x1dc] sm:$0xf]
        %v452 = vld [vmem:[%s289 + $0x1e0] sm:$0xf]
        %v453 = vld [vmem:[%s289 + $0x1e4] sm:$0xf]
        %v454 = vld [vmem:[%s289 + $0x1e8] sm:$0xf]
        %v455 = vld [vmem:[%s289 + $0x1ec] sm:$0xf]
        %v456 = vld [vmem:[%s289 + $0x1f0] sm:$0xf]
        %v457 = vld [vmem:[%s289 + $0x1f4] sm:$0xf]
        %v458 = vld [vmem:[%s289 + $0x1f8] sm:$0xf]
        %v459 = vld [vmem:[%s289 + $0x1fc] sm:$0xf]
        %v476 = vunpack.c.l.b16 %v316
        %v477 = vunpack.c.h.b16 %v316
        %v478 = vunpack.c.l.b16 %v317
        %v479 = vunpack.c.h.b16 %v317
        %v480 = vunpack.c.l.b16 %v318
        %v481 = vunpack.c.h.b16 %v318
        %v482 = vunpack.c.l.b16 %v319
        %v483 = vunpack.c.h.b16 %v319
        %v484 = vunpack.c.l.b16 %v320
        %v485 = vunpack.c.h.b16 %v320
        %v486 = vunpack.c.l.b16 %v321
        %v487 = vunpack.c.h.b16 %v321
        %v488 = vunpack.c.l.b16 %v322
        %v489 = vunpack.c.h.b16 %v322
        %v490 = vunpack.c.l.b16 %v323
        %v491 = vunpack.c.h.b16 %v323
        %v492 = vunpack.c.l.b16 %v324
        %v493 = vunpack.c.h.b16 %v324
        %v494 = vunpack.c.l.b16 %v325
        %v495 = vunpack.c.h.b16 %v325
        %v496 = vunpack.c.l.b16 %v326
        %v497 = vunpack.c.h.b16 %v326
        %v498 = vunpack.c.l.b16 %v327
        %v499 = vunpack.c.h.b16 %v327
        %v500 = vunpack.c.l.b16 %v328
        %v501 = vunpack.c.h.b16 %v328
        %v502 = vunpack.c.l.b16 %v329
        %v503 = vunpack.c.h.b16 %v329
        %v504 = vunpack.c.l.b16 %v330
        %v505 = vunpack.c.h.b16 %v330
        %v506 = vunpack.c.l.b16 %v331
        %v507 = vunpack.c.h.b16 %v331
        %v508 = vpack.c.b16 %v484, %v476
        %v509 = vpack.c.b16 %v485, %v477
        %v510 = vpack.c.b16 %v486, %v478
        %v511 = vpack.c.b16 %v487, %v479
        %v512 = vpack.c.b16 %v488, %v480
        %v513 = vpack.c.b16 %v489, %v481
        %v514 = vpack.c.b16 %v490, %v482
        %v515 = vpack.c.b16 %v491, %v483
        %v516 = vpack.c.b16 %v500, %v492
        %v517 = vpack.c.b16 %v501, %v493
        %v518 = vpack.c.b16 %v502, %v494
        %v519 = vpack.c.b16 %v503, %v495
        %v520 = vpack.c.b16 %v504, %v496
        %v521 = vpack.c.b16 %v505, %v497
        %v522 = vpack.c.b16 %v506, %v498
        %v523 = vpack.c.b16 %v507, %v499
        %v668 = vunpack.c.l.b16 %v332
        %v669 = vunpack.c.l.b16 %v333
        %v670 = vunpack.c.l.b16 %v334
        %v671 = vunpack.c.l.b16 %v335
        %v672 = vunpack.c.l.b16 %v336
        %v673 = vunpack.c.l.b16 %v337
        %v674 = vunpack.c.l.b16 %v338
        %v675 = vunpack.c.l.b16 %v339
        %v676 = vunpack.c.l.b16 %v340
        %v677 = vunpack.c.l.b16 %v341
        %v678 = vunpack.c.l.b16 %v342
        %v679 = vunpack.c.l.b16 %v343
        %v680 = vunpack.c.l.b16 %v344
        %v681 = vunpack.c.l.b16 %v345
        %v682 = vunpack.c.l.b16 %v346
        %v683 = vunpack.c.l.b16 %v347
        %v684 = vunpack.c.l.b16 %v348
        %v685 = vunpack.c.l.b16 %v349
        %v686 = vunpack.c.l.b16 %v350
        %v687 = vunpack.c.l.b16 %v351
        %v688 = vunpack.c.l.b16 %v352
        %v689 = vunpack.c.l.b16 %v353
        %v690 = vunpack.c.l.b16 %v354
        %v691 = vunpack.c.l.b16 %v355
        %v692 = vunpack.c.l.b16 %v356
        %v693 = vunpack.c.l.b16 %v357
        %v694 = vunpack.c.l.b16 %v358
        %v695 = vunpack.c.l.b16 %v359
        %v696 = vunpack.c.l.b16 %v360
        %v697 = vunpack.c.l.b16 %v361
        %v698 = vunpack.c.l.b16 %v362
        %v699 = vunpack.c.l.b16 %v363
        %v700 = vunpack.c.l.b16 %v364
        %v701 = vunpack.c.l.b16 %v365
        %v702 = vunpack.c.l.b16 %v366
        %v703 = vunpack.c.l.b16 %v367
        %v704 = vunpack.c.l.b16 %v368
        %v705 = vunpack.c.l.b16 %v369
        %v706 = vunpack.c.l.b16 %v370
        %v707 = vunpack.c.l.b16 %v371
        %v708 = vunpack.c.l.b16 %v372
        %v709 = vunpack.c.l.b16 %v373
        %v710 = vunpack.c.l.b16 %v374
        %v711 = vunpack.c.l.b16 %v375
        %v712 = vunpack.c.l.b16 %v376
        %v713 = vunpack.c.l.b16 %v377
        %v714 = vunpack.c.l.b16 %v378
        %v715 = vunpack.c.l.b16 %v379
        %v716 = vunpack.c.l.b16 %v380
        %v717 = vunpack.c.l.b16 %v381
        %v718 = vunpack.c.l.b16 %v382
        %v719 = vunpack.c.l.b16 %v383
        %v720 = vunpack.c.l.b16 %v384
        %v721 = vunpack.c.l.b16 %v385
        %v722 = vunpack.c.l.b16 %v386
        %v723 = vunpack.c.l.b16 %v387
        %v724 = vunpack.c.l.b16 %v388
        %v725 = vunpack.c.l.b16 %v389
        %v726 = vunpack.c.l.b16 %v390
        %v727 = vunpack.c.l.b16 %v391
        %v728 = vunpack.c.l.b16 %v392
        %v729 = vunpack.c.l.b16 %v393
        %v730 = vunpack.c.l.b16 %v394
        %v731 = vunpack.c.l.b16 %v395
        %v732 = vunpack.c.l.b16 %v396
        %v733 = vunpack.c.l.b16 %v397
        %v734 = vunpack.c.l.b16 %v398
        %v735 = vunpack.c.l.b16 %v399
        %v736 = vunpack.c.l.b16 %v400
        %v737 = vunpack.c.l.b16 %v401
        %v738 = vunpack.c.l.b16 %v402
        %v739 = vunpack.c.l.b16 %v403
        %v740 = vunpack.c.l.b16 %v404
        %v741 = vunpack.c.l.b16 %v405
        %v742 = vunpack.c.l.b16 %v406
        %v743 = vunpack.c.l.b16 %v407
        %v744 = vunpack.c.l.b16 %v408
        %v745 = vunpack.c.l.b16 %v409
        %v746 = vunpack.c.l.b16 %v410
        %v747 = vunpack.c.l.b16 %v411
        %v748 = vunpack.c.l.b16 %v412
        %v749 = vunpack.c.l.b16 %v413
        %v750 = vunpack.c.l.b16 %v414
        %v751 = vunpack.c.l.b16 %v415
        %v752 = vunpack.c.l.b16 %v416
        %v753 = vunpack.c.l.b16 %v417
        %v754 = vunpack.c.l.b16 %v418
        %v755 = vunpack.c.l.b16 %v419
        %v756 = vunpack.c.l.b16 %v420
        %v757 = vunpack.c.l.b16 %v421
        %v758 = vunpack.c.l.b16 %v422
        %v759 = vunpack.c.l.b16 %v423
        %v760 = vunpack.c.l.b16 %v424
        %v761 = vunpack.c.l.b16 %v425
        %v762 = vunpack.c.l.b16 %v426
        %v763 = vunpack.c.l.b16 %v427
        %v764 = vunpack.c.l.b16 %v428
        %v765 = vunpack.c.l.b16 %v429
        %v766 = vunpack.c.l.b16 %v430
        %v767 = vunpack.c.l.b16 %v431
        %v768 = vunpack.c.l.b16 %v432
        %v769 = vunpack.c.l.b16 %v433
        %v770 = vunpack.c.l.b16 %v434
        %v771 = vunpack.c.l.b16 %v435
        %v772 = vunpack.c.l.b16 %v436
        %v773 = vunpack.c.l.b16 %v437
        %v774 = vunpack.c.l.b16 %v438
        %v775 = vunpack.c.l.b16 %v439
        %v776 = vunpack.c.l.b16 %v440
        %v777 = vunpack.c.l.b16 %v441
        %v778 = vunpack.c.l.b16 %v442
        %v779 = vunpack.c.l.b16 %v443
        %v780 = vunpack.c.l.b16 %v444
        %v781 = vunpack.c.l.b16 %v445
        %v782 = vunpack.c.l.b16 %v446
        %v783 = vunpack.c.l.b16 %v447
        %v784 = vunpack.c.l.b16 %v448
        %v785 = vunpack.c.l.b16 %v449
        %v786 = vunpack.c.l.b16 %v450
        %v787 = vunpack.c.l.b16 %v451
        %v788 = vunpack.c.l.b16 %v452
        %v789 = vunpack.c.l.b16 %v453
        %v790 = vunpack.c.l.b16 %v454
        %v791 = vunpack.c.l.b16 %v455
        %v792 = vunpack.c.l.b16 %v456
        %v793 = vunpack.c.l.b16 %v457
        %v794 = vunpack.c.l.b16 %v458
        %v795 = vunpack.c.l.b16 %v459
        %v796 = vpack.c.b16 %v669, %v668
        %v797 = vpack.c.b16 %v671, %v670
        %v798 = vpack.c.b16 %v673, %v672
        %v799 = vpack.c.b16 %v675, %v674
        %v800 = vpack.c.b16 %v677, %v676
        %v801 = vpack.c.b16 %v679, %v678
        %v802 = vpack.c.b16 %v681, %v680
        %v803 = vpack.c.b16 %v683, %v682
        %v804 = vpack.c.b16 %v685, %v684
        %v805 = vpack.c.b16 %v687, %v686
        %v806 = vpack.c.b16 %v689, %v688
        %v807 = vpack.c.b16 %v691, %v690
        %v808 = vpack.c.b16 %v693, %v692
        %v809 = vpack.c.b16 %v695, %v694
        %v810 = vpack.c.b16 %v697, %v696
        %v811 = vpack.c.b16 %v699, %v698
        %v812 = vpack.c.b16 %v701, %v700
        %v813 = vpack.c.b16 %v703, %v702
        %v814 = vpack.c.b16 %v705, %v704
        %v815 = vpack.c.b16 %v707, %v706
        %v816 = vpack.c.b16 %v709, %v708
        %v817 = vpack.c.b16 %v711, %v710
        %v818 = vpack.c.b16 %v713, %v712
        %v819 = vpack.c.b16 %v715, %v714
        %v820 = vpack.c.b16 %v717, %v716
        %v821 = vpack.c.b16 %v719, %v718
        %v822 = vpack.c.b16 %v721, %v720
        %v823 = vpack.c.b16 %v723, %v722
        %v824 = vpack.c.b16 %v725, %v724
        %v825 = vpack.c.b16 %v727, %v726
        %v826 = vpack.c.b16 %v729, %v728
        %v827 = vpack.c.b16 %v731, %v730
        %v828 = vpack.c.b16 %v733, %v732
        %v829 = vpack.c.b16 %v735, %v734
        %v830 = vpack.c.b16 %v737, %v736
        %v831 = vpack.c.b16 %v739, %v738
        %v832 = vpack.c.b16 %v741, %v740
        %v833 = vpack.c.b16 %v743, %v742
        %v834 = vpack.c.b16 %v745, %v744
        %v835 = vpack.c.b16 %v747, %v746
        %v836 = vpack.c.b16 %v749, %v748
        %v837 = vpack.c.b16 %v751, %v750
        %v838 = vpack.c.b16 %v753, %v752
        %v839 = vpack.c.b16 %v755, %v754
        %v840 = vpack.c.b16 %v757, %v756
        %v841 = vpack.c.b16 %v759, %v758
        %v842 = vpack.c.b16 %v761, %v760
        %v843 = vpack.c.b16 %v763, %v762
        %v844 = vpack.c.b16 %v765, %v764
        %v845 = vpack.c.b16 %v767, %v766
        %v846 = vpack.c.b16 %v769, %v768
        %v847 = vpack.c.b16 %v771, %v770
        %v848 = vpack.c.b16 %v773, %v772
        %v849 = vpack.c.b16 %v775, %v774
        %v850 = vpack.c.b16 %v777, %v776
        %v851 = vpack.c.b16 %v779, %v778
        %v852 = vpack.c.b16 %v781, %v780
        %v853 = vpack.c.b16 %v783, %v782
        %v854 = vpack.c.b16 %v785, %v784
        %v855 = vpack.c.b16 %v787, %v786
        %v856 = vpack.c.b16 %v789, %v788
        %v857 = vpack.c.b16 %v791, %v790
        %v858 = vpack.c.b16 %v793, %v792
        %v859 = vpack.c.b16 %v795, %v794
        %924 = vmatprep.subr.bf16.mxu0 0
        %925 = vmatpush1.bf16.msra.mxu0 %v803
        %926 = vmatprep.subr.bf16.mxu0 0
        %927 = vmatpush1.bf16.msra.mxu0 %v802
        %928 = vmatprep.subr.bf16.mxu0 0
        %929 = vmatpush1.bf16.msra.mxu0 %v801
        %930 = vmatprep.subr.bf16.mxu0 0
        %931 = vmatpush1.bf16.msra.mxu0 %v800
        %932 = vmatprep.subr.bf16.mxu0 0
        %933 = vmatpush1.bf16.msra.mxu0 %v799
        %934 = vmatprep.subr.bf16.mxu0 0
        %935 = vmatpush1.bf16.msra.mxu0 %v798
        %936 = vmatprep.subr.bf16.mxu0 0
        %937 = vmatpush1.bf16.msra.mxu0 %v797
        %938 = vmatprep.subr.bf16.mxu0 0
        %939 = vmatpush1.bf16.msra.mxu0 %v796
        %940 = vmatprep.subr.bf16.mxu0 0
        %941 = vmatpush2.bf16.msra.mxu0 %v811
        %942 = vmatprep.subr.bf16.mxu0 0
        %943 = vmatpush2.bf16.msra.mxu0 %v810
        %944 = vmatprep.subr.bf16.mxu0 0
        %945 = vmatpush2.bf16.msra.mxu0 %v809
        %946 = vmatprep.subr.bf16.mxu0 0
        %947 = vmatpush2.bf16.msra.mxu0 %v808
        %948 = vmatprep.subr.bf16.mxu0 0
        %949 = vmatpush2.bf16.msra.mxu0 %v807
        %950 = vmatprep.subr.bf16.mxu0 0
        %951 = vmatpush2.bf16.msra.mxu0 %v806
        %952 = vmatprep.subr.bf16.mxu0 0
        %953 = vmatpush2.bf16.msra.mxu0 %v805
        %954 = vmatprep.subr.bf16.mxu0 0
        %955 = vmatpush2.bf16.msra.mxu0 %v804
        %956 = vmatprep.mubr.bf16.mxu0 %v509
        %957 = vmatmul.mubr.bf16.gmra.mxu0 %v508
        %v958 = vpop.f32.mrf.mxu0
        %v959 = vadd.f32 0.0, %v958
        %v960 = vpop.f32.mrf.mxu0
        %v961 = vpop.f32.mrf.mxu0
        %v962 = vadd.f32 0.0, %v961
        %v963 = vpop.f32.mrf.mxu0
        %964 = vmatprep.mubr.bf16.mxu0 %v517
        %965 = vmatmul.mubr.bf16.gmra.mxu0 %v516
        %v966 = vpop.f32.mrf.mxu0
        %v967 = vadd.f32 0.0, %v966
        %v968 = vpop.f32.mrf.mxu0
        %v969 = vpop.f32.mrf.mxu0
        %v970 = vadd.f32 0.0, %v969
        %v971 = vpop.f32.mrf.mxu0
        %972 = vdwg.mxu0
        %973 = vmatprep.subr.bf16.mxu0 0
        %974 = vmatpush1.bf16.msra.mxu0 %v819
        %975 = vmatprep.subr.bf16.mxu0 0
        %976 = vmatpush1.bf16.msra.mxu0 %v818
        %977 = vmatprep.subr.bf16.mxu0 0
        %978 = vmatpush1.bf16.msra.mxu0 %v817
        %979 = vmatprep.subr.bf16.mxu0 0
        %980 = vmatpush1.bf16.msra.mxu0 %v816
        %981 = vmatprep.subr.bf16.mxu0 0
        %982 = vmatpush1.bf16.msra.mxu0 %v815
        %983 = vmatprep.subr.bf16.mxu0 0
        %984 = vmatpush1.bf16.msra.mxu0 %v814
        %985 = vmatprep.subr.bf16.mxu0 0
        %986 = vmatpush1.bf16.msra.mxu0 %v813
        %987 = vmatprep.subr.bf16.mxu0 0
        %988 = vmatpush1.bf16.msra.mxu0 %v812
        %989 = vmatprep.subr.bf16.mxu0 0
        %990 = vmatpush2.bf16.msra.mxu0 %v827
        %991 = vmatprep.subr.bf16.mxu0 0
        %992 = vmatpush2.bf16.msra.mxu0 %v826
        %993 = vmatprep.subr.bf16.mxu0 0
        %994 = vmatpush2.bf16.msra.mxu0 %v825
        %995 = vmatprep.subr.bf16.mxu0 0
        %996 = vmatpush2.bf16.msra.mxu0 %v824
        %997 = vmatprep.subr.bf16.mxu0 0
        %998 = vmatpush2.bf16.msra.mxu0 %v823
        %999 = vmatprep.subr.bf16.mxu0 0
        %1000 = vmatpush2.bf16.msra.mxu0 %v822
        %1001 = vmatprep.subr.bf16.mxu0 0
        %1002 = vmatpush2.bf16.msra.mxu0 %v821
        %1003 = vmatprep.subr.bf16.mxu0 0
        %1004 = vmatpush2.bf16.msra.mxu0 %v820
        %1005 = vmatprep.mubr.bf16.mxu0 %v511
        %1006 = vmatmul.mubr.bf16.gmra.mxu0 %v510
        %v1007 = vpop.f32.mrf.mxu0
        %v1008 = vadd.f32 %v959, %v1007
        %v1009 = vpop.f32.mrf.mxu0
        %v1010 = vpop.f32.mrf.mxu0
        %v1011 = vadd.f32 %v962, %v1010
        %v1012 = vpop.f32.mrf.mxu0
        %1013 = vmatprep.mubr.bf16.mxu0 %v519
        %1014 = vmatmul.mubr.bf16.gmra.mxu0 %v518
        %v1015 = vpop.f32.mrf.mxu0
        %v1016 = vadd.f32 %v967, %v1015
        %v1017 = vpop.f32.mrf.mxu0
        %v1018 = vpop.f32.mrf.mxu0
        %v1019 = vadd.f32 %v970, %v1018
        %v1020 = vpop.f32.mrf.mxu0
        %1021 = vdwg.mxu0
        %1022 = vmatprep.subr.bf16.mxu0 0
        %1023 = vmatpush1.bf16.msra.mxu0 %v835
        %1024 = vmatprep.subr.bf16.mxu0 0
        %1025 = vmatpush1.bf16.msra.mxu0 %v834
        %1026 = vmatprep.subr.bf16.mxu0 0
        %1027 = vmatpush1.bf16.msra.mxu0 %v833
        %1028 = vmatprep.subr.bf16.mxu0 0
        %1029 = vmatpush1.bf16.msra.mxu0 %v832
        %1030 = vmatprep.subr.bf16.mxu0 0
        %1031 = vmatpush1.bf16.msra.mxu0 %v831
        %1032 = vmatprep.subr.bf16.mxu0 0
        %1033 = vmatpush1.bf16.msra.mxu0 %v830
        %1034 = vmatprep.subr.bf16.mxu0 0
        %1035 = vmatpush1.bf16.msra.mxu0 %v829
        %1036 = vmatprep.subr.bf16.mxu0 0
        %1037 = vmatpush1.bf16.msra.mxu0 %v828
        %1038 = vmatprep.subr.bf16.mxu0 0
        %1039 = vmatpush2.bf16.msra.mxu0 %v843
        %1040 = vmatprep.subr.bf16.mxu0 0
        %1041 = vmatpush2.bf16.msra.mxu0 %v842
        %1042 = vmatprep.subr.bf16.mxu0 0
        %1043 = vmatpush2.bf16.msra.mxu0 %v841
        %1044 = vmatprep.subr.bf16.mxu0 0
        %1045 = vmatpush2.bf16.msra.mxu0 %v840
        %1046 = vmatprep.subr.bf16.mxu0 0
        %1047 = vmatpush2.bf16.msra.mxu0 %v839
        %1048 = vmatprep.subr.bf16.mxu0 0
        %1049 = vmatpush2.bf16.msra.mxu0 %v838
        %1050 = vmatprep.subr.bf16.mxu0 0
        %1051 = vmatpush2.bf16.msra.mxu0 %v837
        %1052 = vmatprep.subr.bf16.mxu0 0
        %1053 = vmatpush2.bf16.msra.mxu0 %v836
        %1054 = vmatprep.mubr.bf16.mxu0 %v513
        %1055 = vmatmul.mubr.bf16.gmra.mxu0 %v512
        %v1056 = vpop.f32.mrf.mxu0
        %v1057 = vadd.f32 %v1008, %v1056
        %v1058 = vpop.f32.mrf.mxu0
        %v1059 = vpop.f32.mrf.mxu0
        %v1060 = vadd.f32 %v1011, %v1059
        %v1061 = vpop.f32.mrf.mxu0
        %1062 = vmatprep.mubr.bf16.mxu0 %v521
        %1063 = vmatmul.mubr.bf16.gmra.mxu0 %v520
        %v1064 = vpop.f32.mrf.mxu0
        %v1065 = vadd.f32 %v1016, %v1064
        %v1066 = vpop.f32.mrf.mxu0
        %v1067 = vpop.f32.mrf.mxu0
        %v1068 = vadd.f32 %v1019, %v1067
        %v1069 = vpop.f32.mrf.mxu0
        %1070 = vdwg.mxu0
        %1071 = vmatprep.subr.bf16.mxu0 0
        %1072 = vmatpush1.bf16.msra.mxu0 %v851
        %1073 = vmatprep.subr.bf16.mxu0 0
        %1074 = vmatpush1.bf16.msra.mxu0 %v850
        %1075 = vmatprep.subr.bf16.mxu0 0
        %1076 = vmatpush1.bf16.msra.mxu0 %v849
        %1077 = vmatprep.subr.bf16.mxu0 0
        %1078 = vmatpush1.bf16.msra.mxu0 %v848
        %1079 = vmatprep.subr.bf16.mxu0 0
        %1080 = vmatpush1.bf16.msra.mxu0 %v847
        %1081 = vmatprep.subr.bf16.mxu0 0
        %1082 = vmatpush1.bf16.msra.mxu0 %v846
        %1083 = vmatprep.subr.bf16.mxu0 0
        %1084 = vmatpush1.bf16.msra.mxu0 %v845
        %1085 = vmatprep.subr.bf16.mxu0 0
        %1086 = vmatpush1.bf16.msra.mxu0 %v844
        %1087 = vmatprep.subr.bf16.mxu0 0
        %1088 = vmatpush2.bf16.msra.mxu0 %v859
        %1089 = vmatprep.subr.bf16.mxu0 0
        %1090 = vmatpush2.bf16.msra.mxu0 %v858
        %1091 = vmatprep.subr.bf16.mxu0 0
        %1092 = vmatpush2.bf16.msra.mxu0 %v857
        %1093 = vmatprep.subr.bf16.mxu0 0
        %1094 = vmatpush2.bf16.msra.mxu0 %v856
        %1095 = vmatprep.subr.bf16.mxu0 0
        %1096 = vmatpush2.bf16.msra.mxu0 %v855
        %1097 = vmatprep.subr.bf16.mxu0 0
        %1098 = vmatpush2.bf16.msra.mxu0 %v854
        %1099 = vmatprep.subr.bf16.mxu0 0
        %1100 = vmatpush2.bf16.msra.mxu0 %v853
        %1101 = vmatprep.subr.bf16.mxu0 0
        %1102 = vmatpush2.bf16.msra.mxu0 %v852
        %1103 = vmatprep.mubr.bf16.mxu0 %v515
        %1104 = vmatmul.mubr.bf16.gmra.mxu0 %v514
        %v1105 = vpop.f32.mrf.mxu0
        %v1106 = vadd.f32 %v1057, %v1105
        %v1107 = vpop.f32.mrf.mxu0
        %v1108 = vpop.f32.mrf.mxu0
        %v1109 = vadd.f32 %v1060, %v1108
        %v1110 = vpop.f32.mrf.mxu0
        %1111 = vmatprep.mubr.bf16.mxu0 %v523
        %1112 = vmatmul.mubr.bf16.gmra.mxu0 %v522
        %v1113 = vpop.f32.mrf.mxu0
        %v1114 = vadd.f32 %v1065, %v1113
        %v1115 = vpop.f32.mrf.mxu0
        %v1116 = vpop.f32.mrf.mxu0
        %v1117 = vadd.f32 %v1068, %v1116
        %v1118 = vpop.f32.mrf.mxu0
        %1119 = vdwg.mxu0
        %v1120 = vadd.f32 %v312, %v1106
        %v1121 = vadd.f32 %v313, %v1109
        %v1122 = vadd.f32 %v314, %v1114
        %v1123 = vadd.f32 %v315, %v1117
        %1124 = vst [vmem:[#allocation2] sm:$0xff] %v1120
        %1125 = vst [vmem:[#allocation2 + $0x8] sm:$0xff] %v1121
        %1126 = vst [vmem:[#allocation2 + $0x10] sm:$0xff] %v1122
        %1127 = vst [vmem:[#allocation2 + $0x18] sm:$0xff] %v1123
        %p1128 = scmp.eq.s32.totalorder %s21, 1
        // Predicated region
        $region60: #{discrete_vae_forward.7} parent=50 // pred_check
          %p1129 = pneg %p1128
        $region61: #{discrete_vae_forward.7} parent=50 // pred_check_branch
          %1131 = sbr.rel (%p1129) target = $region63
        $region62: #{discrete_vae_forward.7} parent=50 // pred_region
          %v1132 = vld [vmem:[#allocation2] sm:$0xff]
          %v1133 = vld [vmem:[#allocation2 + $0x8] sm:$0xff]
          %v1134 = vld [vmem:[#allocation2 + $0x10] sm:$0xff]
          %v1135 = vld [vmem:[#allocation2 + $0x18] sm:$0xff]
          %v1136 = vld [vmem:[%s293] sm:$0x1]
          %v1138 = vlaneseq
          %v1139 = vshrl.u32 %v1138, 7
          %v1140 = vsub.s32 0, %v1139
          %v1141 = vrot.slane %v1136, %v1140
          %v1143 = vadd.f32 %v1132, %v1141
          %v1144 = vadd.f32 %v1133, %v1141
          %v1145 = vadd.f32 %v1134, %v1141
          %v1146 = vadd.f32 %v1135, %v1141
          %vm1147 = vcmp.ge.f32.partialorder %v1143, 0.0
          %vm1148 = vcmp.ge.f32.partialorder %v1144, 0.0
          %vm1149 = vcmp.ge.f32.partialorder %v1145, 0.0
          %vm1150 = vcmp.ge.f32.partialorder %v1146, 0.0
          %v1151 = vmul.f32 %v1143, 0.2
          %v1152 = vmul.f32 %v1144, 0.2
          %v1153 = vmul.f32 %v1145, 0.2
          %v1154 = vmul.f32 %v1146, 0.2
          %v1155 = vsel %vm1147, %v1143, %v1151
          %v1156 = vsel %vm1148, %v1144, %v1152
          %v1157 = vsel %vm1149, %v1145, %v1153
          %v1158 = vsel %vm1150, %v1146, %v1154
          %v1159 = vpack.c.bf16 %v1156, %v1155
          %v1160 = vpack.c.bf16 %v1158, %v1157
          %v1163 = vunpack.c.l.b16 %v1159
          %v1164 = vunpack.c.h.b16 %v1159
          %v1165 = vunpack.c.l.b16 %v1160
          %v1166 = vunpack.c.h.b16 %v1160
          %v1167 = vpack.c.b16 %v1163, %v1163
          %v1168 = vpack.c.b16 %v1164, %v1164
          %v1169 = vpack.c.b16 %v1165, %v1165
          %v1170 = vpack.c.b16 %v1166, %v1166
          %1175 = vst [vmem:[%s301] sm:$0xf] %v1167
          %1176 = vst [vmem:[%s301 + $0x4] sm:$0xf] %v1168
          %1177 = vst [vmem:[%s301 + $0x8] sm:$0xf] %v1169
          %1178 = vst [vmem:[%s301 + $0xc] sm:$0xf] %v1170
        $region63: #{discrete_vae_forward.7} parent=50 // pred_fallthru
          _
        %s1179 = smul.u32 4, %s19
        %p1180 = scmp.lt.s32.totalorder %s1179, 3
        %s1181 = scalar_select %p1180, %s1179, 3
        %p1182 = scmp.lt.s32.totalorder %s20, 0
        %s1183 = scalar_select %p1182, %s20, 0
        %s1184 = sadd.s32 %s1183, %s1181
        %s1185 = smul.addr %s1184, 4
        %s1186 = scalar_lea.vmem %s3, %s1185
        // Predicated region
        $region64: #{discrete_vae_forward.7} parent=50 // pred_check
          %p1187 = pneg %p135
        $region65: #{discrete_vae_forward.7} parent=50 // pred_check_branch
          %1189 = sbr.rel (%p1187) target = $region67
        $region66: #{discrete_vae_forward.7} parent=50 // pred_region
          %s1190 = smul.u32 4, %s19
        $region67: #{discrete_vae_forward.7} parent=50 // pred_fallthru
          _
        // Predicated region
        $region68: #{discrete_vae_forward.7} parent=50 // pred_check
          %p1191 = pneg %p135
        $region69: #{discrete_vae_forward.7} parent=50 // pred_check_branch
          %1193 = sbr.rel (%p1191) target = $region71
        $region70: #{discrete_vae_forward.7} parent=50 // pred_region
          %s1194 = smul.u32 4, %s19
          %p1195 = scmp.lt.s32.totalorder %s1194, 3
          %s1196 = scalar_select %p1195, %s1194, 3
          %p1197 = scmp.lt.s32.totalorder %s20, 0
          %s1198 = scalar_select %p1197, %s20, 0
          %s1199 = sadd.s32 %s1198, %s1196
          %s1200 = smul.addr %s1199, 4
          %s1201 = scalar_lea.vmem %s3, %s1200
        $region71: #{discrete_vae_forward.7} parent=50 // pred_fallthru
          _
      $region51: #{discrete_vae_forward.7} parent=5 // pred_fallthru
        _
      %p1202 = scmp.le.s32.totalorder 2, %s9
      // Predicated region
      $region72: #{discrete_vae_forward.7} parent=5 // pred_check
        %p1203 = pneg %p1202
      $region73: #{discrete_vae_forward.7} parent=5 // pred_check_branch
        %1205 = sbr.rel (%p1203) target = $region75
      $region74: #{discrete_vae_forward.7} parent=5 // pred_region
        %s1206 = ssub.s32 %s9, 2
      $region75: #{discrete_vae_forward.7} parent=5 // pred_fallthru
        _
    $region6: #{discrete_vae_forward.7} parent=1 // loop_footer
      %s13 = sadd.s32 1, %s9
    $region7: #{discrete_vae_forward.7} parent=1 // loop_footer_branch
      %8 = sbr.rel target = $region3
    $region8: #{discrete_vae_forward.7} parent=1 // loop_exit
      _

// kernel: discrete_vae_forward.9
$region0: #{discrete_vae_forward.9}
  #allocation0 [shape = 'u32[]', space=smem, size = 0x4, offset = 0x4, fixed_abs, tag = 'smem constant byte address 0x4 - core index']
  #allocation1 [shape = 'u32[144,128]{1,0:T(1,128)}', space=vmem, size = 0x12000, scoped, tag = 'internal scratch']
  %s0 = inlined_call_operand.vmem [shape: f32[32,128], index: 0, kind: input, shape index: {}]
  %s1 = inlined_call_operand.vmem [shape: bf16[32,128], index: 1, kind: output, shape index: {0}]
  %s2 = inlined_call_operand.hbm [shape: f32[1,128], index: 2, kind: output, shape index: {1}]
  %3 = xla_tuple %s1, %s2
  %s4 = sld [smem:[#allocation0]]
  $region22: #{discrete_vae_forward.9} parent=0
    _
  %s6 = ssub.s32 1, %s4
  %s7 = scalar_select 0, %s6, %s4
  $region1: #{discrete_vae_forward.9} parent=0
    #allocation2 [shape = 'u8[512]{0}', space=vmem, size = 0x400, scoped, tag = 'output window, operand 1, single buffered']
    #allocation3 [shape = 's32[1]{0}', space=sflag, size = 0x4, scoped, tag = 'scoped memory for discrete_vae_forward.9']
    %8 = vsyncpa [#allocation3], 0
    // Predicated region
    $region2: #{discrete_vae_forward.9} parent=1 // pred_check
      _
    $region3: #{discrete_vae_forward.9} parent=1 // pred_check_branch
      %10 = sbr.rel (0) target = $region5
    $region4: #{discrete_vae_forward.9} parent=1 // pred_region
      _
    $region5: #{discrete_vae_forward.9} parent=1 // pred_fallthru
      _
    %v11 = vld [vmem:[%s0] sm:$0xff]
    %v12 = vld [vmem:[%s0 + $0x8] sm:$0xff]
    %v13 = vld [vmem:[%s0 + $0x10] sm:$0xff]
    %v14 = vld [vmem:[%s0 + $0x18] sm:$0xff]
    %15 = vmax.xlane.f32.xlu0 %v11
    %v16 = vpop.xlane.xlu0 %15
    %17 = vmax.xlane.f32.xlu0 %v12
    %v18 = vpop.xlane.xlu0 %17
    %19 = vmax.xlane.f32.xlu0 %v13
    %v20 = vpop.xlane.xlu0 %19
    %21 = vmax.xlane.f32.xlu0 %v14
    %v22 = vpop.xlane.xlu0 %21
    %v23 = vsub.f32 %v11, %v16
    %v24 = vsub.f32 %v12, %v18
    %v25 = vsub.f32 %v13, %v20
    %v26 = vsub.f32 %v14, %v22
    %v27 = vmul.f32 %v23, 1.442695
    %v28 = vpow.pop %v27
    %v29 = vmul.f32 %v24, 1.442695
    %v30 = vpow.pop %v29
    %v31 = vmul.f32 %v25, 1.442695
    %v32 = vpow.pop %v31
    %v33 = vmul.f32 %v26, 1.442695
    %v34 = vpow.pop %v33
    %35 = vadd.xlane.f32.xlu0 %v28
    %v36 = vpop.xlane.xlu0 %35
    %37 = vadd.xlane.f32.xlu0 %v30
    %v38 = vpop.xlane.xlu0 %37
    %39 = vadd.xlane.f32.xlu0 %v32
    %v40 = vpop.xlane.xlu0 %39
    %41 = vadd.xlane.f32.xlu0 %v34
    %v42 = vpop.xlane.xlu0 %41
    %v43 = vrcp.pop %v36
    %v44 = vrcp.pop %v38
    %v45 = vrcp.pop %v40
    %v46 = vrcp.pop %v42
    %v47 = vmul.f32 %v28, %v43
    %v48 = vmul.f32 %v30, %v44
    %v49 = vmul.f32 %v32, %v45
    %v50 = vmul.f32 %v34, %v46
    %v51 = vpack.c.bf16 %v48, %v47
    %v52 = vpack.c.bf16 %v50, %v49
    %v55 = vunpack.c.l.b16 %v51
    %v56 = vunpack.c.h.b16 %v51
    %v57 = vunpack.c.l.b16 %v52
    %v58 = vunpack.c.h.b16 %v52
    %v59 = vpack.c.b16 %v55, %v55
    %v60 = vpack.c.b16 %v56, %v56
    %v61 = vpack.c.b16 %v57, %v57
    %v62 = vpack.c.b16 %v58, %v58
    %67 = vst [vmem:[%s1] sm:$0xf] %v59
    %68 = vst [vmem:[%s1 + $0x4] sm:$0xf] %v60
    %69 = vst [vmem:[%s1 + $0x8] sm:$0xf] %v61
    %70 = vst [vmem:[%s1 + $0xc] sm:$0xf] %v62
    %v71 = vlog2.pop %v36
    %v72 = vmul.f32 %v71, 0.6931472
    %v73 = vlog2.pop %v38
    %v74 = vmul.f32 %v73, 0.6931472
    %v75 = vlog2.pop %v40
    %v76 = vmul.f32 %v75, 0.6931472
    %v77 = vlog2.pop %v42
    %v78 = vmul.f32 %v77, 0.6931472
    %v79 = vsub.f32 %v23, %v72
    %v80 = vsub.f32 %v24, %v74
    %v81 = vsub.f32 %v25, %v76
    %v82 = vsub.f32 %v26, %v78
    %v83 = vsub.f32 -4.8520303, %v79
    %v84 = vsub.f32 -4.8520303, %v80
    %v85 = vsub.f32 -4.8520303, %v81
    %v86 = vsub.f32 -4.8520303, %v82
    %v87 = vadd.f32 %v83, %v84
    %v88 = vadd.f32 %v87, %v85
    %v89 = vadd.f32 %v88, %v86
    %90 = vadd.xlane.f32.xlu0 %v89
    %v91 = vpop.xlane.xlu0 %90
    %v92 = vrot.slane %v91, 4
    %v93 = vadd.f32 %v91, %v92
    %v94 = vrot.slane %v93, 2
    %v95 = vadd.f32 %v93, %v94
    %v96 = vrot.slane %v95, 1
    %v97 = vadd.f32 %v95, %v96
    %s98 = vtos %v97
    %s99 = smul.f32 %s98, 0.0078125
    %v100 = vstv %s99
    %v101 = vadd.f32 %v100, 0.0
    %102 = vst [vmem:[#allocation2] sm:$0x1] %v101
    // Predicated region
    $region6: #{discrete_vae_forward.9} parent=1 // pred_check
      _
    $region7: #{discrete_vae_forward.9} parent=1 // pred_check_branch
      %104 = sbr.rel (0) target = $region9
    $region8: #{discrete_vae_forward.9} parent=1 // pred_region
      _
    $region9: #{discrete_vae_forward.9} parent=1 // pred_fallthru
      _
    // Predicated region
    $region10: #{discrete_vae_forward.9} parent=1 // pred_check
      _
    $region11: #{discrete_vae_forward.9} parent=1 // pred_check_branch
      %106 = sbr.rel (0) target = $region13
    $region12: #{discrete_vae_forward.9} parent=1 // pred_region
      %s108 = ssub.s32 16, 16
      %109 = vsyncadd [#allocation3], %s108
      %s111 = sshll.u32 [#allocation2], 4
      %s112 = int_to_ptr.vmem [resolvable:$true] %s111
      %114 = dma.vmem_to_hbm [thread:$0]  %s112, 16, %s2, [#allocation3]
    $region13: #{discrete_vae_forward.9} parent=1 // pred_fallthru
      _
    // Predicated region
    $region14: #{discrete_vae_forward.9} parent=1 // pred_check
      _
    $region15: #{discrete_vae_forward.9} parent=1 // pred_check_branch
      %116 = sbr.rel (0) target = $region17
    $region16: #{discrete_vae_forward.9} parent=1 // pred_region
      _
    $region17: #{discrete_vae_forward.9} parent=1 // pred_fallthru
      _
    // Predicated region
    $region18: #{discrete_vae_forward.9} parent=1 // pred_check
      _
    $region19: #{discrete_vae_forward.9} parent=1 // pred_check_branch
      %118 = sbr.rel (0) target = $region21
    $region20: #{discrete_vae_forward.9} parent=1 // pred_region
      %119 = dma.done [#allocation3], 16
    $region21: #{discrete_vae_forward.9} parent=1 // pred_fallthru
      _
    %120 = vsyncpa [#allocation3], 1

// kernel: discrete_vae_forward.10
$region0: #{discrete_vae_forward.10}
  #allocation0 [shape = 'u32[]', space=smem, size = 0x4, offset = 0x4, fixed_abs, tag = 'smem constant byte address 0x4 - core index']
  #allocation1 [shape = 'u32[144,128]{1,0:T(1,128)}', space=vmem, size = 0x12000, scoped, tag = 'internal scratch']
  #allocation2 [shape = 'f32[32,256]{1,0:T(8,128)}', space=vmem, size = 0x8000, scoped, tag = 'scratch operand']
  %s0 = inlined_call_operand.vmem [shape: bf16[32,1152], index: 0, kind: input, shape index: {}]
  %s1 = inlined_call_operand.vmem [shape: bf16[1152,512], index: 1, kind: input, shape index: {}]
  %s2 = inlined_call_operand.vmem [shape: f32[1,512], index: 2, kind: input, shape index: {}]
  %s3 = inlined_call_operand.vmem [shape: bf16[32,512], index: 3, kind: output, shape index: {}]
  %s4 = sld [smem:[#allocation0]]
  $region151: #{discrete_vae_forward.10} parent=0
    _
  %s6 = ssub.s32 1, %s4
  %s7 = scalar_select 0, %s6, %s4
  $region1: #{discrete_vae_forward.10} parent=0
    #allocation3 [shape = 'u8[49152]{0}', space=vmem, size = 0xc000, scoped, tag = 'input window, operand 0']
    #allocation4 [shape = 'u8[393216]{0}', space=vmem, size = 0x60000, scoped, tag = 'input window, operand 1']
    #allocation5 [shape = 'u8[32768]{0}', space=vmem, size = 0x8000, scoped, tag = 'output window, operand 0']
    loop: start=0, step=1, limit=8
    $region2: #{discrete_vae_forward.10} parent=1 // loop_pre_header
      _
    $region3: #{discrete_vae_forward.10} parent=1 // loop_header
      %s9 = sphi 0, %s13
      %p10 = scmp.ge.s32.totalorder %s9, 8
      %s16 = sphi 0, %s35
      %s17 = sphi 0, %s31
      %s18 = sphi 0, %s27
      %s19 = sphi 0, %s16
      %s20 = sphi 0, %s17
      %s21 = sphi 0, %s18
      %s22 = sphi 0, %s19
      %s23 = sphi 0, %s20
      %s24 = sphi 0, %s21
      %s40 = sphi 0, %s42
      %s43 = sphi 0, %s40
      %s44 = sphi 0, %s43
      %s60 = sphi 0, %s44
      %s68 = sphi 0, %s70
      %s71 = sphi 0, %s68
      %s72 = sphi 0, %s71
      %s88 = sphi 0, %s72
      %s94 = sphi 0, %s96
      %s97 = sphi 0, %s94
      %s98 = sphi 0, %s97
      %s114 = sphi 0, %s98
      %s122 = sphi 0, %s124
      %s125 = sphi 0, %s122
      %s126 = sphi 0, %s125
      %s142 = sphi 0, %s126
    $region4: #{discrete_vae_forward.10} parent=1 // loop_header_branch
      %12 = sbr.rel (%p10) target = $region8
    $region5: #{discrete_vae_forward.10} parent=1 // loop_body
      %s14 = ssub.s32 %s9, 1
      %s15 = ssub.s32 %s9, 2
      %s25 = sadd.s32 1, %s18
      %p26 = scmp.ge.s32.totalorder %s25, 3
      %s27 = scalar_select %p26, 0, %s25
      %s28 = sadd.s32 1, %s17
      %s29 = scalar_select %p26, %s28, %s17
      %p30 = scmp.ge.s32.totalorder %s29, 2
      %s31 = scalar_select %p30, 0, %s29
      %s32 = sadd.s32 1, %s16
      %s33 = scalar_select %p30, %s32, %s16
      %p34 = scmp.ge.s32.totalorder %s33, 1
      %s35 = scalar_select %p34, 0, %s33
      %s36 = ssub.s32 %s16, %s35
      %s37 = ssub.s32 %s18, %s27
      %s38 = sor.u32 %s36, %s37
      %p39 = scmp.eq.s32.totalorder %s38, 0
      %s41 = sadd.s32 %s40, 1
      %s42 = scalar_select %p39, %s40, %s41
      %p45 = pneg %p39
      %p46 = scmp.eq.s32.totalorder %s9, 5
      %p47 = por %p45, %p46
      %p48 = scmp.ne.s32.totalorder %s40, %s43
      %p49 = scmp.eq.s32.totalorder %s9, 0
      %p50 = por %p48, %p49
      %p51 = scmp.ne.s32.totalorder %s40, %s43
      %p52 = scmp.eq.s32.totalorder %s14, 5
      %p53 = por %p51, %p52
      %p54 = scmp.ne.s32.totalorder %s43, %s44
      %p55 = scmp.eq.s32.totalorder %s14, 0
      %p56 = por %p54, %p55
      %p57 = scmp.ne.s32.totalorder %s43, %s44
      %p58 = scmp.eq.s32.totalorder %s15, 5
      %p59 = por %p57, %p58
      %p61 = scmp.ne.s32.totalorder %s44, %s60
      %p62 = scmp.eq.s32.totalorder %s15, 0
      %p63 = por %p61, %p62
      %s64 = ssub.s32 %s18, %s27
      %s65 = ssub.s32 %s17, %s31
      %s66 = sor.u32 %s64, %s65
      %p67 = scmp.eq.s32.totalorder %s66, 0
      %s69 = sadd.s32 %s68, 1
      %s70 = scalar_select %p67, %s68, %s69
      %p73 = pneg %p67
      %p74 = scmp.eq.s32.totalorder %s9, 5
      %p75 = por %p73, %p74
      %p76 = scmp.ne.s32.totalorder %s68, %s71
      %p77 = scmp.eq.s32.totalorder %s9, 0
      %p78 = por %p76, %p77
      %p79 = scmp.ne.s32.totalorder %s68, %s71
      %p80 = scmp.eq.s32.totalorder %s14, 5
      %p81 = por %p79, %p80
      %p82 = scmp.ne.s32.totalorder %s71, %s72
      %p83 = scmp.eq.s32.totalorder %s14, 0
      %p84 = por %p82, %p83
      %p85 = scmp.ne.s32.totalorder %s71, %s72
      %p86 = scmp.eq.s32.totalorder %s15, 5
      %p87 = por %p85, %p86
      %p89 = scmp.ne.s32.totalorder %s72, %s88
      %p90 = scmp.eq.s32.totalorder %s15, 0
      %p91 = por %p89, %p90
      %s92 = ssub.s32 %s17, %s31
      %p93 = scmp.eq.s32.totalorder %s92, 0
      %s95 = sadd.s32 %s94, 1
      %s96 = scalar_select %p93, %s94, %s95
      %p99 = pneg %p93
      %p100 = scmp.eq.s32.totalorder %s9, 5
      %p101 = por %p99, %p100
      %p102 = scmp.ne.s32.totalorder %s94, %s97
      %p103 = scmp.eq.s32.totalorder %s9, 0
      %p104 = por %p102, %p103
      %p105 = scmp.ne.s32.totalorder %s94, %s97
      %p106 = scmp.eq.s32.totalorder %s14, 5
      %p107 = por %p105, %p106
      %p108 = scmp.ne.s32.totalorder %s97, %s98
      %p109 = scmp.eq.s32.totalorder %s14, 0
      %p110 = por %p108, %p109
      %p111 = scmp.ne.s32.totalorder %s97, %s98
      %p112 = scmp.eq.s32.totalorder %s15, 5
      %p113 = por %p111, %p112
      %p115 = scmp.ne.s32.totalorder %s98, %s114
      %p116 = scmp.eq.s32.totalorder %s15, 0
      %p117 = por %p115, %p116
      %s118 = ssub.s32 %s16, %s35
      %s119 = ssub.s32 %s17, %s31
      %s120 = sor.u32 %s118, %s119
      %p121 = scmp.eq.s32.totalorder %s120, 0
      %s123 = sadd.s32 %s122, 1
      %s124 = scalar_select %p121, %s122, %s123
      %p127 = pneg %p121
      %p128 = scmp.eq.s32.totalorder %s9, 5
      %p129 = por %p127, %p128
      %p130 = scmp.ne.s32.totalorder %s122, %s125
      %p131 = scmp.eq.s32.totalorder %s9, 0
      %p132 = por %p130, %p131
      %p133 = scmp.ne.s32.totalorder %s122, %s125
      %p134 = scmp.eq.s32.totalorder %s14, 5
      %p135 = por %p133, %p134
      %p136 = scmp.ne.s32.totalorder %s125, %s126
      %p137 = scmp.eq.s32.totalorder %s14, 0
      %p138 = por %p136, %p137
      %p139 = scmp.ne.s32.totalorder %s125, %s126
      %p140 = scmp.eq.s32.totalorder %s15, 5
      %p141 = por %p139, %p140
      %p143 = scmp.ne.s32.totalorder %s126, %s142
      %p144 = scmp.eq.s32.totalorder %s15, 0
      %p145 = por %p143, %p144
      %p146 = scmp.le.s32.totalorder 1, %s9
      %p147 = scmp.lt.s32.totalorder %s9, 7
      %p148 = pnand %p146, %p147
      %p149 = pneg %p148
      // Predicated region
      $region9: #{discrete_vae_forward.10} parent=5 // pred_check
        _
      $region10: #{discrete_vae_forward.10} parent=5 // pred_check_branch
        %151 = sbr.rel (%p148) target = $region12
      $region11: #{discrete_vae_forward.10} parent=5 // pred_region
        %s152 = ssub.s32 %s9, 1
      $region12: #{discrete_vae_forward.10} parent=5 // pred_fallthru
        _
      %p153 = scmp.lt.s32.totalorder %s9, 6
      // Predicated region
      $region13: #{discrete_vae_forward.10} parent=5 // pred_check
        %p154 = pneg %p153
      $region14: #{discrete_vae_forward.10} parent=5 // pred_check_branch
        %156 = sbr.rel (%p154) target = $region16
      $region15: #{discrete_vae_forward.10} parent=5 // pred_region
        // Predicated region
        $region17: #{discrete_vae_forward.10} parent=15 // pred_check
          %p157 = pneg %p50
        $region18: #{discrete_vae_forward.10} parent=15 // pred_check_branch
          %159 = sbr.rel (%p157) target = $region20
        $region19: #{discrete_vae_forward.10} parent=15 // pred_region
          %s160 = sand.u32 %s40, 1
          %s161 = sand.u32 %s40, 1
          %s162 = smul.addr %s161, 48
          %s163 = scalar_lea.vmem [#allocation3], %s162
          %s164 = smul.u32 4, %s16
          %s165 = smul.u32 3, %s18
          %s166 = smul.addr %s164, 9
          %s167 = sadd.s32 %s165, %s166
          %s168 = smul.addr %s167, 4
          %s169 = scalar_lea.vmem %s0, %s168
          // Predicated region
          $region21: #{discrete_vae_forward.10} parent=19 // pred_check
            _
          $region22: #{discrete_vae_forward.10} parent=19 // pred_check_branch
            %171 = sbr.rel (0) target = $region24
          $region23: #{discrete_vae_forward.10} parent=19 // pred_region
            // Predicated region
            $region25: #{discrete_vae_forward.10} parent=23 // pred_check
              _
            $region26: #{discrete_vae_forward.10} parent=23 // pred_check_branch
              %173 = sbr.rel (0) target = $region28
            $region27: #{discrete_vae_forward.10} parent=23 // pred_region
              %s174 = scalar_lea.vmem %s169, 8
              %s175 = scalar_lea.vmem %s163, 8 [#allocation3]
              loop: start=0, step=1, limit=1
              $region29: #{discrete_vae_forward.10} parent=27 // loop_pre_header
                _
              $region30: #{discrete_vae_forward.10} parent=27 // loop_header
                %s177 = sphi 0, %s181
                %p178 = scmp.ge.s32.totalorder %s177, 1
                %s182 = sphi %s169, %s169
                %s183 = sphi %s163, %s163
              $region31: #{discrete_vae_forward.10} parent=27 // loop_header_branch
                %180 = sbr.rel (%p178) target = $region35
              $region32: #{discrete_vae_forward.10} parent=27 // loop_body
                %v184 = vld [vmem:[%s182] sm:$0xff]
                %185 = vst [vmem:[%s183] sm:$0xff] %v184
                %v186 = vld [vmem:[%s182 + $0x24] sm:$0xff]
                %187 = vst [vmem:[%s183 + $0xc] sm:$0xff] %v186
                %v188 = vld [vmem:[%s182 + $0x48] sm:$0xff]
                %189 = vst [vmem:[%s183 + $0x18] sm:$0xff] %v188
                %v190 = vld [vmem:[%s182 + $0x6c] sm:$0xff]
                %191 = vst [vmem:[%s183 + $0x24] sm:$0xff] %v190
              $region33: #{discrete_vae_forward.10} parent=27 // loop_footer
                %s181 = sadd.s32 1, %s177
              $region34: #{discrete_vae_forward.10} parent=27 // loop_footer_branch
                %176 = sbr.rel target = $region30
              $region35: #{discrete_vae_forward.10} parent=27 // loop_exit
                _
              %s193 = ssub.s32 16, 1
              loop: start=0, step=1, limit=1
              $region36: #{discrete_vae_forward.10} parent=27 // loop_pre_header
                _
              $region37: #{discrete_vae_forward.10} parent=27 // loop_header
                %s195 = sphi 0, %s199
                %p196 = scmp.ge.s32.totalorder %s195, 1
                %s200 = sphi %s174, %s174
                %s201 = sphi %s175, %s175
              $region38: #{discrete_vae_forward.10} parent=27 // loop_header_branch
                %198 = sbr.rel (%p196) target = $region42
              $region39: #{discrete_vae_forward.10} parent=27 // loop_body
                %v202 = vld [vmem:[%s200] sm:%s193]
                %203 = vst [vmem:[%s201] sm:%s193] %v202
                %v204 = vld [vmem:[%s200 + $0x24] sm:%s193]
                %205 = vst [vmem:[%s201 + $0xc] sm:%s193] %v204
                %v206 = vld [vmem:[%s200 + $0x48] sm:%s193]
                %207 = vst [vmem:[%s201 + $0x18] sm:%s193] %v206
                %v208 = vld [vmem:[%s200 + $0x6c] sm:%s193]
                %209 = vst [vmem:[%s201 + $0x24] sm:%s193] %v208
              $region40: #{discrete_vae_forward.10} parent=27 // loop_footer
                %s199 = sadd.s32 1, %s195
              $region41: #{discrete_vae_forward.10} parent=27 // loop_footer_branch
                %194 = sbr.rel target = $region37
              $region42: #{discrete_vae_forward.10} parent=27 // loop_exit
                _
            $region28: #{discrete_vae_forward.10} parent=23 // pred_fallthru
              _
          $region24: #{discrete_vae_forward.10} parent=19 // pred_fallthru
            _
          %210 = vnop
        $region20: #{discrete_vae_forward.10} parent=15 // pred_fallthru
          _
        // Predicated region
        $region43: #{discrete_vae_forward.10} parent=15 // pred_check
          %p211 = pneg %p78
        $region44: #{discrete_vae_forward.10} parent=15 // pred_check_branch
          %213 = sbr.rel (%p211) target = $region46
        $region45: #{discrete_vae_forward.10} parent=15 // pred_region
          %s214 = sand.u32 %s68, 1
          %s215 = sand.u32 %s68, 1
          %s216 = smul.addr %s215, 384
          %s217 = scalar_lea.vmem [#allocation4], %s216
          %s218 = smul.u32 48, %s18
          %s219 = smul.u32 2, %s17
          %s220 = smul.addr %s218, 4
          %s221 = sadd.s32 %s219, %s220
          %s222 = smul.addr %s221, 4
          %s223 = scalar_lea.vmem %s1, %s222
          // Predicated region
          $region47: #{discrete_vae_forward.10} parent=45 // pred_check
            _
          $region48: #{discrete_vae_forward.10} parent=45 // pred_check_branch
            %225 = sbr.rel (0) target = $region50
          $region49: #{discrete_vae_forward.10} parent=45 // pred_region
            // Predicated region
            $region51: #{discrete_vae_forward.10} parent=49 // pred_check
              _
            $region52: #{discrete_vae_forward.10} parent=49 // pred_check_branch
              %227 = sbr.rel (0) target = $region54
            $region53: #{discrete_vae_forward.10} parent=49 // pred_region
              // Predicated region
              $region66: #{discrete_vae_forward.10} parent=53 // pred_check
                _
              $region67: #{discrete_vae_forward.10} parent=53 // pred_check_branch
                %337 = sbr.rel (0) target = $region69
              $region68: #{discrete_vae_forward.10} parent=53 // pred_region
                loop: start=0, step=1, limit=1
                $region70: #{discrete_vae_forward.10} parent=68 // loop_pre_header
                  _
                $region71: #{discrete_vae_forward.10} parent=68 // loop_header
                  %s339 = sphi 0, %s343
                  %p340 = scmp.ge.s32.totalorder %s339, 1
                  %s344 = sphi %s223, %s223
                  %s345 = sphi %s217, %s217
                $region72: #{discrete_vae_forward.10} parent=68 // loop_header_branch
                  %342 = sbr.rel (%p340) target = $region76
                $region73: #{discrete_vae_forward.10} parent=68 // loop_body
                  %v346 = vld [vmem:[%s344] sm:$0xff]
                  %347 = vst [vmem:[%s345] sm:$0xff] %v346
                  %v348 = vld [vmem:[%s344 + $0x10] sm:$0xff]
                  %349 = vst [vmem:[%s345 + $0x8] sm:$0xff] %v348
                  %v350 = vld [vmem:[%s344 + $0x20] sm:$0xff]
                  %351 = vst [vmem:[%s345 + $0x10] sm:$0xff] %v350
                  %v352 = vld [vmem:[%s344 + $0x30] sm:$0xff]
                  %353 = vst [vmem:[%s345 + $0x18] sm:$0xff] %v352
                  %v354 = vld [vmem:[%s344 + $0x40] sm:$0xff]
                  %355 = vst [vmem:[%s345 + $0x20] sm:$0xff] %v354
                  %v356 = vld [vmem:[%s344 + $0x50] sm:$0xff]
                  %357 = vst [vmem:[%s345 + $0x28] sm:$0xff] %v356
                  %v358 = vld [vmem:[%s344 + $0x60] sm:$0xff]
                  %359 = vst [vmem:[%s345 + $0x30] sm:$0xff] %v358
                  %v360 = vld [vmem:[%s344 + $0x70] sm:$0xff]
                  %361 = vst [vmem:[%s345 + $0x38] sm:$0xff] %v360
                  %v362 = vld [vmem:[%s344 + $0x80] sm:$0xff]
                  %363 = vst [vmem:[%s345 + $0x40] sm:$0xff] %v362
                  %v364 = vld [vmem:[%s344 + $0x90] sm:$0xff]
                  %365 = vst [vmem:[%s345 + $0x48] sm:$0xff] %v364
                  %v366 = vld [vmem:[%s344 + $0xa0] sm:$0xff]
                  %367 = vst [vmem:[%s345 + $0x50] sm:$0xff] %v366
                  %v368 = vld [vmem:[%s344 + $0xb0] sm:$0xff]
                  %369 = vst [vmem:[%s345 + $0x58] sm:$0xff] %v368
                  %v370 = vld [vmem:[%s344 + $0xc0] sm:$0xff]
                  %371 = vst [vmem:[%s345 + $0x60] sm:$0xff] %v370
                  %v372 = vld [vmem:[%s344 + $0xd0] sm:$0xff]
                  %373 = vst [vmem:[%s345 + $0x68] sm:$0xff] %v372
                  %v374 = vld [vmem:[%s344 + $0xe0] sm:$0xff]
                  %375 = vst [vmem:[%s345 + $0x70] sm:$0xff] %v374
                  %v376 = vld [vmem:[%s344 + $0xf0] sm:$0xff]
                  %377 = vst [vmem:[%s345 + $0x78] sm:$0xff] %v376
                  %v378 = vld [vmem:[%s344 + $0x100] sm:$0xff]
                  %379 = vst [vmem:[%s345 + $0x80] sm:$0xff] %v378
                  %v380 = vld [vmem:[%s344 + $0x110] sm:$0xff]
                  %381 = vst [vmem:[%s345 + $0x88] sm:$0xff] %v380
                  %v382 = vld [vmem:[%s344 + $0x120] sm:$0xff]
                  %383 = vst [vmem:[%s345 + $0x90] sm:$0xff] %v382
                  %v384 = vld [vmem:[%s344 + $0x130] sm:$0xff]
                  %385 = vst [vmem:[%s345 + $0x98] sm:$0xff] %v384
                  %v386 = vld [vmem:[%s344 + $0x140] sm:$0xff]
                  %387 = vst [vmem:[%s345 + $0xa0] sm:$0xff] %v386
                  %v388 = vld [vmem:[%s344 + $0x150] sm:$0xff]
                  %389 = vst [vmem:[%s345 + $0xa8] sm:$0xff] %v388
                  %v390 = vld [vmem:[%s344 + $0x160] sm:$0xff]
                  %391 = vst [vmem:[%s345 + $0xb0] sm:$0xff] %v390
                  %v392 = vld [vmem:[%s344 + $0x170] sm:$0xff]
                  %393 = vst [vmem:[%s345 + $0xb8] sm:$0xff] %v392
                  %v394 = vld [vmem:[%s344 + $0x180] sm:$0xff]
                  %395 = vst [vmem:[%s345 + $0xc0] sm:$0xff] %v394
                  %v396 = vld [vmem:[%s344 + $0x190] sm:$0xff]
                  %397 = vst [vmem:[%s345 + $0xc8] sm:$0xff] %v396
                  %v398 = vld [vmem:[%s344 + $0x1a0] sm:$0xff]
                  %399 = vst [vmem:[%s345 + $0xd0] sm:$0xff] %v398
                  %v400 = vld [vmem:[%s344 + $0x1b0] sm:$0xff]
                  %401 = vst [vmem:[%s345 + $0xd8] sm:$0xff] %v400
                  %v402 = vld [vmem:[%s344 + $0x1c0] sm:$0xff]
                  %403 = vst [vmem:[%s345 + $0xe0] sm:$0xff] %v402
                  %v404 = vld [vmem:[%s344 + $0x1d0] sm:$0xff]
                  %405 = vst [vmem:[%s345 + $0xe8] sm:$0xff] %v404
                  %v406 = vld [vmem:[%s344 + $0x1e0] sm:$0xff]
                  %407 = vst [vmem:[%s345 + $0xf0] sm:$0xff] %v406
                  %v408 = vld [vmem:[%s344 + $0x1f0] sm:$0xff]
                  %409 = vst [vmem:[%s345 + $0xf8] sm:$0xff] %v408
                  %v410 = vld [vmem:[%s344 + $0x200] sm:$0xff]
                  %411 = vst [vmem:[%s345 + $0x100] sm:$0xff] %v410
                  %v412 = vld [vmem:[%s344 + $0x210] sm:$0xff]
                  %413 = vst [vmem:[%s345 + $0x108] sm:$0xff] %v412
                  %v414 = vld [vmem:[%s344 + $0x220] sm:$0xff]
                  %415 = vst [vmem:[%s345 + $0x110] sm:$0xff] %v414
                  %v416 = vld [vmem:[%s344 + $0x230] sm:$0xff]
                  %417 = vst [vmem:[%s345 + $0x118] sm:$0xff] %v416
                  %v418 = vld [vmem:[%s344 + $0x240] sm:$0xff]
                  %419 = vst [vmem:[%s345 + $0x120] sm:$0xff] %v418
                  %v420 = vld [vmem:[%s344 + $0x250] sm:$0xff]
                  %421 = vst [vmem:[%s345 + $0x128] sm:$0xff] %v420
                  %v422 = vld [vmem:[%s344 + $0x260] sm:$0xff]
                  %423 = vst [vmem:[%s345 + $0x130] sm:$0xff] %v422
                  %v424 = vld [vmem:[%s344 + $0x270] sm:$0xff]
                  %425 = vst [vmem:[%s345 + $0x138] sm:$0xff] %v424
                  %v426 = vld [vmem:[%s344 + $0x280] sm:$0xff]
                  %427 = vst [vmem:[%s345 + $0x140] sm:$0xff] %v426
                  %v428 = vld [vmem:[%s344 + $0x290] sm:$0xff]
                  %429 = vst [vmem:[%s345 + $0x148] sm:$0xff] %v428
                  %v430 = vld [vmem:[%s344 + $0x2a0] sm:$0xff]
                  %431 = vst [vmem:[%s345 + $0x150] sm:$0xff] %v430
                  %v432 = vld [vmem:[%s344 + $0x2b0] sm:$0xff]
                  %433 = vst [vmem:[%s345 + $0x158] sm:$0xff] %v432
                  %v434 = vld [vmem:[%s344 + $0x2c0] sm:$0xff]
                  %435 = vst [vmem:[%s345 + $0x160] sm:$0xff] %v434
                  %v436 = vld [vmem:[%s344 + $0x2d0] sm:$0xff]
                  %437 = vst [vmem:[%s345 + $0x168] sm:$0xff] %v436
                  %v438 = vld [vmem:[%s344 + $0x2e0] sm:$0xff]
                  %439 = vst [vmem:[%s345 + $0x170] sm:$0xff] %v438
                  %v440 = vld [vmem:[%s344 + $0x2f0] sm:$0xff]
                  %441 = vst [vmem:[%s345 + $0x178] sm:$0xff] %v440
                $region74: #{discrete_vae_forward.10} parent=68 // loop_footer
                  %s343 = sadd.s32 1, %s339
                $region75: #{discrete_vae_forward.10} parent=68 // loop_footer_branch
                  %338 = sbr.rel target = $region71
                $region76: #{discrete_vae_forward.10} parent=68 // loop_exit
                  _
              $region69: #{discrete_vae_forward.10} parent=53 // pred_fallthru
                _
              // Predicated region
              $region77: #{discrete_vae_forward.10} parent=53 // pred_check
                _
              $region78: #{discrete_vae_forward.10} parent=53 // pred_check_branch
                %443 = sbr.rel target = $region80
              $region79: #{discrete_vae_forward.10} parent=53 // pred_region
                _
              $region80: #{discrete_vae_forward.10} parent=53 // pred_fallthru
                _
            $region54: #{discrete_vae_forward.10} parent=49 // pred_fallthru
              _
            // Predicated region
            $region55: #{discrete_vae_forward.10} parent=49 // pred_check
              _
            $region56: #{discrete_vae_forward.10} parent=49 // pred_check_branch
              %229 = sbr.rel target = $region58
            $region57: #{discrete_vae_forward.10} parent=49 // pred_region
              %s231 = ssub.s32 256, 1
              loop: start=0, step=1, limit=1
              $region59: #{discrete_vae_forward.10} parent=57 // loop_pre_header
                _
              $region60: #{discrete_vae_forward.10} parent=57 // loop_header
                %s233 = sphi 0, %s237
                %p234 = scmp.ge.s32.totalorder %s233, 1
                %s238 = sphi %s223, %s223
                %s239 = sphi %s217, %s217
              $region61: #{discrete_vae_forward.10} parent=57 // loop_header_branch
                %236 = sbr.rel (%p234) target = $region65
              $region62: #{discrete_vae_forward.10} parent=57 // loop_body
                %v240 = vld [vmem:[%s238] sm:%s231]
                %241 = vst [vmem:[%s239] sm:%s231] %v240
                %v242 = vld [vmem:[%s238 + $0x10] sm:%s231]
                %243 = vst [vmem:[%s239 + $0x8] sm:%s231] %v242
                %v244 = vld [vmem:[%s238 + $0x20] sm:%s231]
                %245 = vst [vmem:[%s239 + $0x10] sm:%s231] %v244
                %v246 = vld [vmem:[%s238 + $0x30] sm:%s231]
                %247 = vst [vmem:[%s239 + $0x18] sm:%s231] %v246
                %v248 = vld [vmem:[%s238 + $0x40] sm:%s231]
                %249 = vst [vmem:[%s239 + $0x20] sm:%s231] %v248
                %v250 = vld [vmem:[%s238 + $0x50] sm:%s231]
                %251 = vst [vmem:[%s239 + $0x28] sm:%s231] %v250
                %v252 = vld [vmem:[%s238 + $0x60] sm:%s231]
                %253 = vst [vmem:[%s239 + $0x30] sm:%s231] %v252
                %v254 = vld [vmem:[%s238 + $0x70] sm:%s231]
                %255 = vst [vmem:[%s239 + $0x38] sm:%s231] %v254
                %v256 = vld [vmem:[%s238 + $0x80] sm:%s231]
                %257 = vst [vmem:[%s239 + $0x40] sm:%s231] %v256
                %v258 = vld [vmem:[%s238 + $0x90] sm:%s231]
                %259 = vst [vmem:[%s239 + $0x48] sm:%s231] %v258
                %v260 = vld [vmem:[%s238 + $0xa0] sm:%s231]
                %261 = vst [vmem:[%s239 + $0x50] sm:%s231] %v260
                %v262 = vld [vmem:[%s238 + $0xb0] sm:%s231]
                %263 = vst [vmem:[%s239 + $0x58] sm:%s231] %v262
                %v264 = vld [vmem:[%s238 + $0xc0] sm:%s231]
                %265 = vst [vmem:[%s239 + $0x60] sm:%s231] %v264
                %v266 = vld [vmem:[%s238 + $0xd0] sm:%s231]
                %267 = vst [vmem:[%s239 + $0x68] sm:%s231] %v266
                %v268 = vld [vmem:[%s238 + $0xe0] sm:%s231]
                %269 = vst [vmem:[%s239 + $0x70] sm:%s231] %v268
                %v270 = vld [vmem:[%s238 + $0xf0] sm:%s231]
                %271 = vst [vmem:[%s239 + $0x78] sm:%s231] %v270
                %v272 = vld [vmem:[%s238 + $0x100] sm:%s231]
                %273 = vst [vmem:[%s239 + $0x80] sm:%s231] %v272
                %v274 = vld [vmem:[%s238 + $0x110] sm:%s231]
                %275 = vst [vmem:[%s239 + $0x88] sm:%s231] %v274
                %v276 = vld [vmem:[%s238 + $0x120] sm:%s231]
                %277 = vst [vmem:[%s239 + $0x90] sm:%s231] %v276
                %v278 = vld [vmem:[%s238 + $0x130] sm:%s231]
                %279 = vst [vmem:[%s239 + $0x98] sm:%s231] %v278
                %v280 = vld [vmem:[%s238 + $0x140] sm:%s231]
                %281 = vst [vmem:[%s239 + $0xa0] sm:%s231] %v280
                %v282 = vld [vmem:[%s238 + $0x150] sm:%s231]
                %283 = vst [vmem:[%s239 + $0xa8] sm:%s231] %v282
                %v284 = vld [vmem:[%s238 + $0x160] sm:%s231]
                %285 = vst [vmem:[%s239 + $0xb0] sm:%s231] %v284
                %v286 = vld [vmem:[%s238 + $0x170] sm:%s231]
                %287 = vst [vmem:[%s239 + $0xb8] sm:%s231] %v286
                %v288 = vld [vmem:[%s238 + $0x180] sm:%s231]
                %289 = vst [vmem:[%s239 + $0xc0] sm:%s231] %v288
                %v290 = vld [vmem:[%s238 + $0x190] sm:%s231]
                %291 = vst [vmem:[%s239 + $0xc8] sm:%s231] %v290
                %v292 = vld [vmem:[%s238 + $0x1a0] sm:%s231]
                %293 = vst [vmem:[%s239 + $0xd0] sm:%s231] %v292
                %v294 = vld [vmem:[%s238 + $0x1b0] sm:%s231]
                %295 = vst [vmem:[%s239 + $0xd8] sm:%s231] %v294
                %v296 = vld [vmem:[%s238 + $0x1c0] sm:%s231]
                %297 = vst [vmem:[%s239 + $0xe0] sm:%s231] %v296
                %v298 = vld [vmem:[%s238 + $0x1d0] sm:%s231]
                %299 = vst [vmem:[%s239 + $0xe8] sm:%s231] %v298
                %v300 = vld [vmem:[%s238 + $0x1e0] sm:%s231]
                %301 = vst [vmem:[%s239 + $0xf0] sm:%s231] %v300
                %v302 = vld [vmem:[%s238 + $0x1f0] sm:%s231]
                %303 = vst [vmem:[%s239 + $0xf8] sm:%s231] %v302
                %v304 = vld [vmem:[%s238 + $0x200] sm:%s231]
                %305 = vst [vmem:[%s239 + $0x100] sm:%s231] %v304
                %v306 = vld [vmem:[%s238 + $0x210] sm:%s231]
                %307 = vst [vmem:[%s239 + $0x108] sm:%s231] %v306
                %v308 = vld [vmem:[%s238 + $0x220] sm:%s231]
                %309 = vst [vmem:[%s239 + $0x110] sm:%s231] %v308
                %v310 = vld [vmem:[%s238 + $0x230] sm:%s231]
                %311 = vst [vmem:[%s239 + $0x118] sm:%s231] %v310
                %v312 = vld [vmem:[%s238 + $0x240] sm:%s231]
                %313 = vst [vmem:[%s239 + $0x120] sm:%s231] %v312
                %v314 = vld [vmem:[%s238 + $0x250] sm:%s231]
                %315 = vst [vmem:[%s239 + $0x128] sm:%s231] %v314
                %v316 = vld [vmem:[%s238 + $0x260] sm:%s231]
                %317 = vst [vmem:[%s239 + $0x130] sm:%s231] %v316
                %v318 = vld [vmem:[%s238 + $0x270] sm:%s231]
                %319 = vst [vmem:[%s239 + $0x138] sm:%s231] %v318
                %v320 = vld [vmem:[%s238 + $0x280] sm:%s231]
                %321 = vst [vmem:[%s239 + $0x140] sm:%s231] %v320
                %v322 = vld [vmem:[%s238 + $0x290] sm:%s231]
                %323 = vst [vmem:[%s239 + $0x148] sm:%s231] %v322
                %v324 = vld [vmem:[%s238 + $0x2a0] sm:%s231]
                %325 = vst [vmem:[%s239 + $0x150] sm:%s231] %v324
                %v326 = vld [vmem:[%s238 + $0x2b0] sm:%s231]
                %327 = vst [vmem:[%s239 + $0x158] sm:%s231] %v326
                %v328 = vld [vmem:[%s238 + $0x2c0] sm:%s231]
                %329 = vst [vmem:[%s239 + $0x160] sm:%s231] %v328
                %v330 = vld [vmem:[%s238 + $0x2d0] sm:%s231]
                %331 = vst [vmem:[%s239 + $0x168] sm:%s231] %v330
                %v332 = vld [vmem:[%s238 + $0x2e0] sm:%s231]
                %333 = vst [vmem:[%s239 + $0x170] sm:%s231] %v332
                %v334 = vld [vmem:[%s238 + $0x2f0] sm:%s231]
                %335 = vst [vmem:[%s239 + $0x178] sm:%s231] %v334
              $region63: #{discrete_vae_forward.10} parent=57 // loop_footer
                %s237 = sadd.s32 1, %s233
              $region64: #{discrete_vae_forward.10} parent=57 // loop_footer_branch
                %232 = sbr.rel target = $region60
              $region65: #{discrete_vae_forward.10} parent=57 // loop_exit
                _
            $region58: #{discrete_vae_forward.10} parent=49 // pred_fallthru
              _
          $region50: #{discrete_vae_forward.10} parent=45 // pred_fallthru
            _
          %444 = vnop
        $region46: #{discrete_vae_forward.10} parent=15 // pred_fallthru
          _
        // Predicated region
        $region81: #{discrete_vae_forward.10} parent=15 // pred_check
          %p445 = pneg %p104
        $region82: #{discrete_vae_forward.10} parent=15 // pred_check_branch
          %447 = sbr.rel (%p445) target = $region84
        $region83: #{discrete_vae_forward.10} parent=15 // pred_region
          %s448 = smul.u32 2, %s17
          %p449 = scmp.lt.s32.totalorder %s448, 3
          %s450 = scalar_select %p449, %s448, 3
          %s451 = scalar_lea.vmem %s2, %s450
          %s452 = smul.u32 2, %s17
        $region84: #{discrete_vae_forward.10} parent=15 // pred_fallthru
          _
      $region16: #{discrete_vae_forward.10} parent=5 // pred_fallthru
        _
      %p453 = scmp.le.s32.totalorder 1, %s9
      %p454 = scmp.lt.s32.totalorder %s9, 7
      %p455 = pnand %p453, %p454
      %p456 = pneg %p455
      // Predicated region
      $region85: #{discrete_vae_forward.10} parent=5 // pred_check
        _
      $region86: #{discrete_vae_forward.10} parent=5 // pred_check_branch
        %458 = sbr.rel (%p455) target = $region88
      $region87: #{discrete_vae_forward.10} parent=5 // pred_region
        %s459 = ssub.s32 %s9, 1
        %s460 = sand.u32 %s43, 1
        %s461 = sand.u32 %s43, 1
        %s462 = smul.addr %s461, 48
        %s463 = scalar_lea.vmem [#allocation3], %s462
        // Predicated region
        $region89: #{discrete_vae_forward.10} parent=87 // pred_check
          %p464 = pneg %p56
        $region90: #{discrete_vae_forward.10} parent=87 // pred_check_branch
          %466 = sbr.rel (%p464) target = $region92
        $region91: #{discrete_vae_forward.10} parent=87 // pred_region
          _
        $region92: #{discrete_vae_forward.10} parent=87 // pred_fallthru
          _
        %s467 = sand.u32 %s71, 1
        %s468 = sand.u32 %s71, 1
        %s469 = smul.addr %s468, 384
        %s470 = scalar_lea.vmem [#allocation4], %s469
        // Predicated region
        $region93: #{discrete_vae_forward.10} parent=87 // pred_check
          %p471 = pneg %p84
        $region94: #{discrete_vae_forward.10} parent=87 // pred_check_branch
          %473 = sbr.rel (%p471) target = $region96
        $region95: #{discrete_vae_forward.10} parent=87 // pred_region
          _
        $region96: #{discrete_vae_forward.10} parent=87 // pred_fallthru
          _
        %s474 = sand.u32 %s43, 1
        %s475 = sand.u32 %s43, 1
        %s476 = smul.addr %s475, 48
        %s477 = scalar_lea.vmem [#allocation3], %s476
        %p478 = pneg %p56
        %p479 = pneg %p53
        %s480 = sand.u32 %s71, 1
        %s481 = sand.u32 %s71, 1
        %s482 = smul.addr %s481, 384
        %s483 = scalar_lea.vmem [#allocation4], %s482
        %p484 = pneg %p84
        %p485 = pneg %p81
        %s486 = smul.u32 2, %s20
        %p487 = scmp.lt.s32.totalorder %s486, 3
        %s488 = scalar_select %p487, %s486, 3
        %s489 = scalar_lea.vmem %s2, %s488
        %p490 = pneg %p110
        %p491 = pneg %p107
        %p492 = pneg %p138
        %p493 = pneg %p135
        %s494 = sand.u32 %s125, 1
        %s495 = sand.u32 %s125, 1
        %s496 = smul.addr %s495, 32
        %s497 = scalar_lea.vmem [#allocation5], %s496
        %s498 = smul.u32 4, %s19
        %s499 = smul.u32 3, %s21
        %s500 = smul.u32 48, %s21
        %s501 = smul.u32 2, %s20
        %s502 = smul.u32 2, %s20
        %p503 = scmp.lt.s32.totalorder %s502, 3
        %s504 = scalar_select %p503, %s502, 3
        %s505 = scalar_lea.vmem %s2, %s504
        %s506 = smul.u32 2, %s20
        %s507 = smul.u32 4, %s19
        %s508 = smul.u32 2, %s20
        %p510 = scmp.eq.s32.totalorder %s21, 0
        // Predicated region
        $region97: #{discrete_vae_forward.10} parent=87 // pred_check
          %p511 = pneg %p510
        $region98: #{discrete_vae_forward.10} parent=87 // pred_check_branch
          %513 = sbr.rel (%p511) target = $region100
        $region99: #{discrete_vae_forward.10} parent=87 // pred_region
          %514 = vst [vmem:[#allocation2] sm:$0xff] 0.0
          %515 = vst [vmem:[#allocation2 + $0x8] sm:$0xff] 0.0
          %516 = vst [vmem:[#allocation2 + $0x10] sm:$0xff] 0.0
          %517 = vst [vmem:[#allocation2 + $0x18] sm:$0xff] 0.0
          %518 = vst [vmem:[#allocation2 + $0x20] sm:$0xff] 0.0
          %519 = vst [vmem:[#allocation2 + $0x28] sm:$0xff] 0.0
          %520 = vst [vmem:[#allocation2 + $0x30] sm:$0xff] 0.0
          %521 = vst [vmem:[#allocation2 + $0x38] sm:$0xff] 0.0
        $region100: #{discrete_vae_forward.10} parent=87 // pred_fallthru
          _
        %v522 = vld [vmem:[#allocation2] sm:$0xff]
        %v523 = vld [vmem:[#allocation2 + $0x8] sm:$0xff]
        %v524 = vld [vmem:[#allocation2 + $0x10] sm:$0xff]
        %v525 = vld [vmem:[#allocation2 + $0x18] sm:$0xff]
        %v526 = vld [vmem:[#allocation2 + $0x20] sm:$0xff]
        %v527 = vld [vmem:[#allocation2 + $0x28] sm:$0xff]
        %v528 = vld [vmem:[#allocation2 + $0x30] sm:$0xff]
        %v529 = vld [vmem:[#allocation2 + $0x38] sm:$0xff]
        %v530 = vld [vmem:[%s463] sm:$0xff]
        %v531 = vld [vmem:[%s463 + $0x8] sm:$0xf]
        %v532 = vld [vmem:[%s463 + $0xc] sm:$0xff]
        %v533 = vld [vmem:[%s463 + $0x14] sm:$0xf]
        %v534 = vld [vmem:[%s463 + $0x18] sm:$0xff]
        %v535 = vld [vmem:[%s463 + $0x20] sm:$0xf]
        %v536 = vld [vmem:[%s463 + $0x24] sm:$0xff]
        %v537 = vld [vmem:[%s463 + $0x2c] sm:$0xf]
        %v538 = vld [vmem:[%s470] sm:$0xff]
        %v539 = vld [vmem:[%s470 + $0x8] sm:$0xff]
        %v540 = vld [vmem:[%s470 + $0x10] sm:$0xff]
        %v541 = vld [vmem:[%s470 + $0x18] sm:$0xff]
        %v542 = vld [vmem:[%s470 + $0x20] sm:$0xff]
        %v543 = vld [vmem:[%s470 + $0x28] sm:$0xff]
        %v544 = vld [vmem:[%s470 + $0x30] sm:$0xff]
        %v545 = vld [vmem:[%s470 + $0x38] sm:$0xff]
        %v546 = vld [vmem:[%s470 + $0x40] sm:$0xff]
        %v547 = vld [vmem:[%s470 + $0x48] sm:$0xff]
        %v548 = vld [vmem:[%s470 + $0x50] sm:$0xff]
        %v549 = vld [vmem:[%s470 + $0x58] sm:$0xff]
        %v550 = vld [vmem:[%s470 + $0x60] sm:$0xff]
        %v551 = vld [vmem:[%s470 + $0x68] sm:$0xff]
        %v552 = vld [vmem:[%s470 + $0x70] sm:$0xff]
        %v553 = vld [vmem:[%s470 + $0x78] sm:$0xff]
        %v554 = vld [vmem:[%s470 + $0x80] sm:$0xff]
        %v555 = vld [vmem:[%s470 + $0x88] sm:$0xff]
        %v556 = vld [vmem:[%s470 + $0x90] sm:$0xff]
        %v557 = vld [vmem:[%s470 + $0x98] sm:$0xff]
        %v558 = vld [vmem:[%s470 + $0xa0] sm:$0xff]
        %v559 = vld [vmem:[%s470 + $0xa8] sm:$0xff]
        %v560 = vld [vmem:[%s470 + $0xb0] sm:$0xff]
        %v561 = vld [vmem:[%s470 + $0xb8] sm:$0xff]
        %v562 = vld [vmem:[%s470 + $0xc0] sm:$0xff]
        %v563 = vld [vmem:[%s470 + $0xc8] sm:$0xff]
        %v564 = vld [vmem:[%s470 + $0xd0] sm:$0xff]
        %v565 = vld [vmem:[%s470 + $0xd8] sm:$0xff]
        %v566 = vld [vmem:[%s470 + $0xe0] sm:$0xff]
        %v567 = vld [vmem:[%s470 + $0xe8] sm:$0xff]
        %v568 = vld [vmem:[%s470 + $0xf0] sm:$0xff]
        %v569 = vld [vmem:[%s470 + $0xf8] sm:$0xff]
        %v570 = vld [vmem:[%s470 + $0x100] sm:$0xff]
        %v571 = vld [vmem:[%s470 + $0x108] sm:$0xff]
        %v572 = vld [vmem:[%s470 + $0x110] sm:$0xff]
        %v573 = vld [vmem:[%s470 + $0x118] sm:$0xff]
        %v574 = vld [vmem:[%s470 + $0x120] sm:$0xff]
        %v575 = vld [vmem:[%s470 + $0x128] sm:$0xff]
        %v576 = vld [vmem:[%s470 + $0x130] sm:$0xff]
        %v577 = vld [vmem:[%s470 + $0x138] sm:$0xff]
        %v578 = vld [vmem:[%s470 + $0x140] sm:$0xff]
        %v579 = vld [vmem:[%s470 + $0x148] sm:$0xff]
        %v580 = vld [vmem:[%s470 + $0x150] sm:$0xff]
        %v581 = vld [vmem:[%s470 + $0x158] sm:$0xff]
        %v582 = vld [vmem:[%s470 + $0x160] sm:$0xff]
        %v583 = vld [vmem:[%s470 + $0x168] sm:$0xff]
        %v584 = vld [vmem:[%s470 + $0x170] sm:$0xff]
        %v585 = vld [vmem:[%s470 + $0x178] sm:$0xff]
        %v594 = vunpack.c.l.b16 %v530
        %v595 = vunpack.c.h.b16 %v530
        %v596 = vunpack.c.l.b16 %v531
        %v597 = vunpack.c.l.b16 %v532
        %v598 = vunpack.c.h.b16 %v532
        %v599 = vunpack.c.l.b16 %v533
        %v600 = vunpack.c.l.b16 %v534
        %v601 = vunpack.c.h.b16 %v534
        %v602 = vunpack.c.l.b16 %v535
        %v603 = vunpack.c.l.b16 %v536
        %v604 = vunpack.c.h.b16 %v536
        %v605 = vunpack.c.l.b16 %v537
        %v606 = vpack.c.b16 %v597, %v594
        %v607 = vpack.c.b16 %v598, %v595
        %v608 = vpack.c.b16 %v599, %v596
        %v609 = vpack.c.b16 %v603, %v600
        %v610 = vpack.c.b16 %v604, %v601
        %v611 = vpack.c.b16 %v605, %v602
        %v666 = vunpack.c.l.b16 %v538
        %v667 = vunpack.c.h.b16 %v538
        %v668 = vunpack.c.l.b16 %v539
        %v669 = vunpack.c.h.b16 %v539
        %v670 = vunpack.c.l.b16 %v540
        %v671 = vunpack.c.h.b16 %v540
        %v672 = vunpack.c.l.b16 %v541
        %v673 = vunpack.c.h.b16 %v541
        %v674 = vunpack.c.l.b16 %v542
        %v675 = vunpack.c.h.b16 %v542
        %v676 = vunpack.c.l.b16 %v543
        %v677 = vunpack.c.h.b16 %v543
        %v678 = vunpack.c.l.b16 %v544
        %v679 = vunpack.c.h.b16 %v544
        %v680 = vunpack.c.l.b16 %v545
        %v681 = vunpack.c.h.b16 %v545
        %v682 = vunpack.c.l.b16 %v546
        %v683 = vunpack.c.h.b16 %v546
        %v684 = vunpack.c.l.b16 %v547
        %v685 = vunpack.c.h.b16 %v547
        %v686 = vunpack.c.l.b16 %v548
        %v687 = vunpack.c.h.b16 %v548
        %v688 = vunpack.c.l.b16 %v549
        %v689 = vunpack.c.h.b16 %v549
        %v690 = vunpack.c.l.b16 %v550
        %v691 = vunpack.c.h.b16 %v550
        %v692 = vunpack.c.l.b16 %v551
        %v693 = vunpack.c.h.b16 %v551
        %v694 = vunpack.c.l.b16 %v552
        %v695 = vunpack.c.h.b16 %v552
        %v696 = vunpack.c.l.b16 %v553
        %v697 = vunpack.c.h.b16 %v553
        %v698 = vunpack.c.l.b16 %v554
        %v699 = vunpack.c.h.b16 %v554
        %v700 = vunpack.c.l.b16 %v555
        %v701 = vunpack.c.h.b16 %v555
        %v702 = vunpack.c.l.b16 %v556
        %v703 = vunpack.c.h.b16 %v556
        %v704 = vunpack.c.l.b16 %v557
        %v705 = vunpack.c.h.b16 %v557
        %v706 = vunpack.c.l.b16 %v558
        %v707 = vunpack.c.h.b16 %v558
        %v708 = vunpack.c.l.b16 %v559
        %v709 = vunpack.c.h.b16 %v559
        %v710 = vunpack.c.l.b16 %v560
        %v711 = vunpack.c.h.b16 %v560
        %v712 = vunpack.c.l.b16 %v561
        %v713 = vunpack.c.h.b16 %v561
        %v714 = vunpack.c.l.b16 %v562
        %v715 = vunpack.c.h.b16 %v562
        %v716 = vunpack.c.l.b16 %v563
        %v717 = vunpack.c.h.b16 %v563
        %v718 = vunpack.c.l.b16 %v564
        %v719 = vunpack.c.h.b16 %v564
        %v720 = vunpack.c.l.b16 %v565
        %v721 = vunpack.c.h.b16 %v565
        %v722 = vunpack.c.l.b16 %v566
        %v723 = vunpack.c.h.b16 %v566
        %v724 = vunpack.c.l.b16 %v567
        %v725 = vunpack.c.h.b16 %v567
        %v726 = vunpack.c.l.b16 %v568
        %v727 = vunpack.c.h.b16 %v568
        %v728 = vunpack.c.l.b16 %v569
        %v729 = vunpack.c.h.b16 %v569
        %v730 = vunpack.c.l.b16 %v570
        %v731 = vunpack.c.h.b16 %v570
        %v732 = vunpack.c.l.b16 %v571
        %v733 = vunpack.c.h.b16 %v571
        %v734 = vunpack.c.l.b16 %v572
        %v735 = vunpack.c.h.b16 %v572
        %v736 = vunpack.c.l.b16 %v573
        %v737 = vunpack.c.h.b16 %v573
        %v738 = vunpack.c.l.b16 %v574
        %v739 = vunpack.c.h.b16 %v574
        %v740 = vunpack.c.l.b16 %v575
        %v741 = vunpack.c.h.b16 %v575
        %v742 = vunpack.c.l.b16 %v576
        %v743 = vunpack.c.h.b16 %v576
        %v744 = vunpack.c.l.b16 %v577
        %v745 = vunpack.c.h.b16 %v577
        %v746 = vunpack.c.l.b16 %v578
        %v747 = vunpack.c.h.b16 %v578
        %v748 = vunpack.c.l.b16 %v579
        %v749 = vunpack.c.h.b16 %v579
        %v750 = vunpack.c.l.b16 %v580
        %v751 = vunpack.c.h.b16 %v580
        %v752 = vunpack.c.l.b16 %v581
        %v753 = vunpack.c.h.b16 %v581
        %v754 = vunpack.c.l.b16 %v582
        %v755 = vunpack.c.h.b16 %v582
        %v756 = vunpack.c.l.b16 %v583
        %v757 = vunpack.c.h.b16 %v583
        %v758 = vunpack.c.l.b16 %v584
        %v759 = vunpack.c.h.b16 %v584
        %v760 = vunpack.c.l.b16 %v585
        %v761 = vunpack.c.h.b16 %v585
        %v762 = vpack.c.b16 %v668, %v666
        %v763 = vpack.c.b16 %v669, %v667
        %v764 = vpack.c.b16 %v672, %v670
        %v765 = vpack.c.b16 %v673, %v671
        %v766 = vpack.c.b16 %v676, %v674
        %v767 = vpack.c.b16 %v677, %v675
        %v768 = vpack.c.b16 %v680, %v678
        %v769 = vpack.c.b16 %v681, %v679
        %v770 = vpack.c.b16 %v684, %v682
        %v771 = vpack.c.b16 %v685, %v683
        %v772 = vpack.c.b16 %v688, %v686
        %v773 = vpack.c.b16 %v689, %v687
        %v774 = vpack.c.b16 %v692, %v690
        %v775 = vpack.c.b16 %v693, %v691
        %v776 = vpack.c.b16 %v696, %v694
        %v777 = vpack.c.b16 %v697, %v695
        %v778 = vpack.c.b16 %v700, %v698
        %v779 = vpack.c.b16 %v701, %v699
        %v780 = vpack.c.b16 %v704, %v702
        %v781 = vpack.c.b16 %v705, %v703
        %v782 = vpack.c.b16 %v708, %v706
        %v783 = vpack.c.b16 %v709, %v707
        %v784 = vpack.c.b16 %v712, %v710
        %v785 = vpack.c.b16 %v713, %v711
        %v786 = vpack.c.b16 %v716, %v714
        %v787 = vpack.c.b16 %v717, %v715
        %v788 = vpack.c.b16 %v720, %v718
        %v789 = vpack.c.b16 %v721, %v719
        %v790 = vpack.c.b16 %v724, %v722
        %v791 = vpack.c.b16 %v725, %v723
        %v792 = vpack.c.b16 %v728, %v726
        %v793 = vpack.c.b16 %v729, %v727
        %v794 = vpack.c.b16 %v732, %v730
        %v795 = vpack.c.b16 %v733, %v731
        %v796 = vpack.c.b16 %v736, %v734
        %v797 = vpack.c.b16 %v737, %v735
        %v798 = vpack.c.b16 %v740, %v738
        %v799 = vpack.c.b16 %v741, %v739
        %v800 = vpack.c.b16 %v744, %v742
        %v801 = vpack.c.b16 %v745, %v743
        %v802 = vpack.c.b16 %v748, %v746
        %v803 = vpack.c.b16 %v749, %v747
        %v804 = vpack.c.b16 %v752, %v750
        %v805 = vpack.c.b16 %v753, %v751
        %v806 = vpack.c.b16 %v756, %v754
        %v807 = vpack.c.b16 %v757, %v755
        %v808 = vpack.c.b16 %v760, %v758
        %v809 = vpack.c.b16 %v761, %v759
        %858 = vmatprep.subr.bf16.mxu0 %v777
        %859 = vmatpush1.bf16.msra.mxu0 %v776
        %860 = vmatprep.subr.bf16.mxu0 %v775
        %861 = vmatpush1.bf16.msra.mxu0 %v774
        %862 = vmatprep.subr.bf16.mxu0 %v773
        %863 = vmatpush1.bf16.msra.mxu0 %v772
        %864 = vmatprep.subr.bf16.mxu0 %v771
        %865 = vmatpush1.bf16.msra.mxu0 %v770
        %866 = vmatprep.subr.bf16.mxu0 %v769
        %867 = vmatpush1.bf16.msra.mxu0 %v768
        %868 = vmatprep.subr.bf16.mxu0 %v767
        %869 = vmatpush1.bf16.msra.mxu0 %v766
        %870 = vmatprep.subr.bf16.mxu0 %v765
        %871 = vmatpush1.bf16.msra.mxu0 %v764
        %872 = vmatprep.subr.bf16.mxu0 %v763
        %873 = vmatpush1.bf16.msra.mxu0 %v762
        %874 = vmatprep.subr.bf16.mxu0 %v793
        %875 = vmatpush2.bf16.msra.mxu0 %v792
        %876 = vmatprep.subr.bf16.mxu0 %v791
        %877 = vmatpush2.bf16.msra.mxu0 %v790
        %878 = vmatprep.subr.bf16.mxu0 %v789
        %879 = vmatpush2.bf16.msra.mxu0 %v788
        %880 = vmatprep.subr.bf16.mxu0 %v787
        %881 = vmatpush2.bf16.msra.mxu0 %v786
        %882 = vmatprep.subr.bf16.mxu0 %v785
        %883 = vmatpush2.bf16.msra.mxu0 %v784
        %884 = vmatprep.subr.bf16.mxu0 %v783
        %885 = vmatpush2.bf16.msra.mxu0 %v782
        %886 = vmatprep.subr.bf16.mxu0 %v781
        %887 = vmatpush2.bf16.msra.mxu0 %v780
        %888 = vmatprep.subr.bf16.mxu0 %v779
        %889 = vmatpush2.bf16.msra.mxu0 %v778
        %890 = vmatprep.mubr.bf16.mxu0 %v607
        %891 = vmatmul.mubr.bf16.gmra.mxu0 %v606
        %v892 = vpop.f32.mrf.mxu0
        %v893 = vadd.f32 0.0, %v892
        %v894 = vpop.f32.mrf.mxu0
        %v895 = vadd.f32 0.0, %v894
        %v896 = vpop.f32.mrf.mxu0
        %v897 = vadd.f32 0.0, %v896
        %v898 = vpop.f32.mrf.mxu0
        %v899 = vadd.f32 0.0, %v898
        %900 = vmatprep.mubr.bf16.mxu0 %v610
        %901 = vmatmul.mubr.bf16.gmra.mxu0 %v609
        %v902 = vpop.f32.mrf.mxu0
        %v903 = vadd.f32 0.0, %v902
        %v904 = vpop.f32.mrf.mxu0
        %v905 = vadd.f32 0.0, %v904
        %v906 = vpop.f32.mrf.mxu0
        %v907 = vadd.f32 0.0, %v906
        %v908 = vpop.f32.mrf.mxu0
        %v909 = vadd.f32 0.0, %v908
        %910 = vdwg.mxu0
        %911 = vmatprep.subr.bf16.mxu0 %v809
        %912 = vmatpush1.bf16.msra.mxu0 %v808
        %913 = vmatprep.subr.bf16.mxu0 %v807
        %914 = vmatpush1.bf16.msra.mxu0 %v806
        %915 = vmatprep.subr.bf16.mxu0 %v805
        %916 = vmatpush1.bf16.msra.mxu0 %v804
        %917 = vmatprep.subr.bf16.mxu0 %v803
        %918 = vmatpush1.bf16.msra.mxu0 %v802
        %919 = vmatprep.subr.bf16.mxu0 %v801
        %920 = vmatpush1.bf16.msra.mxu0 %v800
        %921 = vmatprep.subr.bf16.mxu0 %v799
        %922 = vmatpush1.bf16.msra.mxu0 %v798
        %923 = vmatprep.subr.bf16.mxu0 %v797
        %924 = vmatpush1.bf16.msra.mxu0 %v796
        %925 = vmatprep.subr.bf16.mxu0 %v795
        %926 = vmatpush1.bf16.msra.mxu0 %v794
        %927 = vmatprep.subr.bf16.mxu0 0
        %928 = vmatpush2.bf16.msra.mxu0 0
        %929 = vmatprep.subr.bf16.mxu0 0
        %930 = vmatpush2.bf16.msra.mxu0 0
        %931 = vmatprep.subr.bf16.mxu0 0
        %932 = vmatpush2.bf16.msra.mxu0 0
        %933 = vmatprep.subr.bf16.mxu0 0
        %934 = vmatpush2.bf16.msra.mxu0 0
        %935 = vmatprep.subr.bf16.mxu0 0
        %936 = vmatpush2.bf16.msra.mxu0 0
        %937 = vmatprep.subr.bf16.mxu0 0
        %938 = vmatpush2.bf16.msra.mxu0 0
        %939 = vmatprep.subr.bf16.mxu0 0
        %940 = vmatpush2.bf16.msra.mxu0 0
        %941 = vmatprep.subr.bf16.mxu0 0
        %942 = vmatpush2.bf16.msra.mxu0 0
        %943 = vmatprep.mubr.bf16.mxu0 0
        %944 = vmatmul.mubr.bf16.gmra.mxu0 %v608
        %v945 = vpop.f32.mrf.mxu0
        %v946 = vadd.f32 %v893, %v945
        %v947 = vpop.f32.mrf.mxu0
        %v948 = vadd.f32 %v895, %v947
        %v949 = vpop.f32.mrf.mxu0
        %v950 = vadd.f32 %v897, %v949
        %v951 = vpop.f32.mrf.mxu0
        %v952 = vadd.f32 %v899, %v951
        %953 = vmatprep.mubr.bf16.mxu0 0
        %954 = vmatmul.mubr.bf16.gmra.mxu0 %v611
        %v955 = vpop.f32.mrf.mxu0
        %v956 = vadd.f32 %v903, %v955
        %v957 = vpop.f32.mrf.mxu0
        %v958 = vadd.f32 %v905, %v957
        %v959 = vpop.f32.mrf.mxu0
        %v960 = vadd.f32 %v907, %v959
        %v961 = vpop.f32.mrf.mxu0
        %v962 = vadd.f32 %v909, %v961
        %963 = vdwg.mxu0
        %v964 = vadd.f32 %v522, %v946
        %v965 = vadd.f32 %v523, %v948
        %v966 = vadd.f32 %v524, %v950
        %v967 = vadd.f32 %v525, %v952
        %v968 = vadd.f32 %v526, %v956
        %v969 = vadd.f32 %v527, %v958
        %v970 = vadd.f32 %v528, %v960
        %v971 = vadd.f32 %v529, %v962
        %972 = vst [vmem:[#allocation2] sm:$0xff] %v964
        %973 = vst [vmem:[#allocation2 + $0x8] sm:$0xff] %v965
        %974 = vst [vmem:[#allocation2 + $0x10] sm:$0xff] %v966
        %975 = vst [vmem:[#allocation2 + $0x18] sm:$0xff] %v967
        %976 = vst [vmem:[#allocation2 + $0x20] sm:$0xff] %v968
        %977 = vst [vmem:[#allocation2 + $0x28] sm:$0xff] %v969
        %978 = vst [vmem:[#allocation2 + $0x30] sm:$0xff] %v970
        %979 = vst [vmem:[#allocation2 + $0x38] sm:$0xff] %v971
        %p980 = scmp.eq.s32.totalorder %s21, 2
        // Predicated region
        $region101: #{discrete_vae_forward.10} parent=87 // pred_check
          %p981 = pneg %p980
        $region102: #{discrete_vae_forward.10} parent=87 // pred_check_branch
          %983 = sbr.rel (%p981) target = $region104
        $region103: #{discrete_vae_forward.10} parent=87 // pred_region
          %v984 = vld [vmem:[#allocation2] sm:$0xff]
          %v985 = vld [vmem:[#allocation2 + $0x8] sm:$0xff]
          %v986 = vld [vmem:[#allocation2 + $0x10] sm:$0xff]
          %v987 = vld [vmem:[#allocation2 + $0x18] sm:$0xff]
          %v988 = vld [vmem:[#allocation2 + $0x20] sm:$0xff]
          %v989 = vld [vmem:[#allocation2 + $0x28] sm:$0xff]
          %v990 = vld [vmem:[#allocation2 + $0x30] sm:$0xff]
          %v991 = vld [vmem:[#allocation2 + $0x38] sm:$0xff]
          %v992 = vld [vmem:[%s505] sm:$0x3]
          %v994 = vlaneseq
          %v995 = vshrl.u32 %v994, 7
          %v996 = vsub.s32 0, %v995
          %v997 = vrot.slane %v992, %v996
          %v998 = vlaneseq
          %v999 = vshrl.u32 %v998, 7
          %v1000 = vsub.s32 1, %v999
          %v1001 = vrot.slane %v992, %v1000
          %v1004 = vadd.f32 %v984, %v997
          %v1005 = vadd.f32 %v985, %v1001
          %v1006 = vadd.f32 %v986, %v997
          %v1007 = vadd.f32 %v987, %v1001
          %v1008 = vadd.f32 %v988, %v997
          %v1009 = vadd.f32 %v989, %v1001
          %v1010 = vadd.f32 %v990, %v997
          %v1011 = vadd.f32 %v991, %v1001
          %vm1012 = vcmp.ge.f32.partialorder %v1004, 0.0
          %vm1013 = vcmp.ge.f32.partialorder %v1005, 0.0
          %vm1014 = vcmp.ge.f32.partialorder %v1006, 0.0
          %vm1015 = vcmp.ge.f32.partialorder %v1007, 0.0
          %vm1016 = vcmp.ge.f32.partialorder %v1008, 0.0
          %vm1017 = vcmp.ge.f32.partialorder %v1009, 0.0
          %vm1018 = vcmp.ge.f32.partialorder %v1010, 0.0
          %vm1019 = vcmp.ge.f32.partialorder %v1011, 0.0
          %v1020 = vmul.f32 %v1004, 0.2
          %v1021 = vmul.f32 %v1005, 0.2
          %v1022 = vmul.f32 %v1006, 0.2
          %v1023 = vmul.f32 %v1007, 0.2
          %v1024 = vmul.f32 %v1008, 0.2
          %v1025 = vmul.f32 %v1009, 0.2
          %v1026 = vmul.f32 %v1010, 0.2
          %v1027 = vmul.f32 %v1011, 0.2
          %v1028 = vsel %vm1012, %v1004, %v1020
          %v1029 = vsel %vm1013, %v1005, %v1021
          %v1030 = vsel %vm1014, %v1006, %v1022
          %v1031 = vsel %vm1015, %v1007, %v1023
          %v1032 = vsel %vm1016, %v1008, %v1024
          %v1033 = vsel %vm1017, %v1009, %v1025
          %v1034 = vsel %vm1018, %v1010, %v1026
          %v1035 = vsel %vm1019, %v1011, %v1027
          %v1036 = vpack.c.bf16 %v1030, %v1028
          %v1037 = vpack.c.bf16 %v1031, %v1029
          %v1038 = vpack.c.bf16 %v1034, %v1032
          %v1039 = vpack.c.bf16 %v1035, %v1033
          %v1044 = vunpack.c.l.b16 %v1036
          %v1045 = vunpack.c.l.b16 %v1037
          %v1046 = vunpack.c.h.b16 %v1036
          %v1047 = vunpack.c.h.b16 %v1037
          %v1048 = vunpack.c.l.b16 %v1038
          %v1049 = vunpack.c.l.b16 %v1039
          %v1050 = vunpack.c.h.b16 %v1038
          %v1051 = vunpack.c.h.b16 %v1039
          %v1052 = vpack.c.b16 %v1045, %v1044
          %v1053 = vpack.c.b16 %v1047, %v1046
          %v1054 = vpack.c.b16 %v1049, %v1048
          %v1055 = vpack.c.b16 %v1051, %v1050
          %1060 = vst [vmem:[%s497] sm:$0xff] %v1052
          %1061 = vst [vmem:[%s497 + $0x8] sm:$0xff] %v1053
          %1062 = vst [vmem:[%s497 + $0x10] sm:$0xff] %v1054
          %1063 = vst [vmem:[%s497 + $0x18] sm:$0xff] %v1055
        $region104: #{discrete_vae_forward.10} parent=87 // pred_fallthru
          _
        %s1064 = sand.u32 %s125, 1
        %s1065 = sand.u32 %s125, 1
        %s1066 = smul.addr %s1065, 32
        %s1067 = scalar_lea.vmem [#allocation5], %s1066
        // Predicated region
        $region105: #{discrete_vae_forward.10} parent=87 // pred_check
          %p1068 = pneg %p135
        $region106: #{discrete_vae_forward.10} parent=87 // pred_check_branch
          %1070 = sbr.rel (%p1068) target = $region108
        $region107: #{discrete_vae_forward.10} parent=87 // pred_region
          %s1071 = smul.u32 4, %s19
          %s1072 = smul.u32 2, %s20
          %s1073 = smul.addr %s1071, 4
          %s1074 = sadd.s32 %s1072, %s1073
          %s1075 = smul.addr %s1074, 4
          %s1076 = scalar_lea.vmem %s3, %s1075
          // Predicated region
          $region109: #{discrete_vae_forward.10} parent=107 // pred_check
            _
          $region110: #{discrete_vae_forward.10} parent=107 // pred_check_branch
            %1078 = sbr.rel (0) target = $region112
          $region111: #{discrete_vae_forward.10} parent=107 // pred_region
            // Predicated region
            $region113: #{discrete_vae_forward.10} parent=111 // pred_check
              _
            $region114: #{discrete_vae_forward.10} parent=111 // pred_check_branch
              %1080 = sbr.rel (0) target = $region116
            $region115: #{discrete_vae_forward.10} parent=111 // pred_region
              // Predicated region
              $region128: #{discrete_vae_forward.10} parent=115 // pred_check
                _
              $region129: #{discrete_vae_forward.10} parent=115 // pred_check_branch
                %1102 = sbr.rel (0) target = $region131
              $region130: #{discrete_vae_forward.10} parent=115 // pred_region
                loop: start=0, step=1, limit=1
                $region132: #{discrete_vae_forward.10} parent=130 // loop_pre_header
                  _
                $region133: #{discrete_vae_forward.10} parent=130 // loop_header
                  %s1104 = sphi 0, %s1108
                  %p1105 = scmp.ge.s32.totalorder %s1104, 1
                  %s1109 = sphi %s1067, %s1067
                  %s1110 = sphi %s1076, %s1076
                $region134: #{discrete_vae_forward.10} parent=130 // loop_header_branch
                  %1107 = sbr.rel (%p1105) target = $region138
                $region135: #{discrete_vae_forward.10} parent=130 // loop_body
                  %v1111 = vld [vmem:[%s1109] sm:$0xff]
                  %1112 = vst [vmem:[%s1110] sm:$0xff] %v1111
                  %v1113 = vld [vmem:[%s1109 + $0x8] sm:$0xff]
                  %1114 = vst [vmem:[%s1110 + $0x10] sm:$0xff] %v1113
                  %v1115 = vld [vmem:[%s1109 + $0x10] sm:$0xff]
                  %1116 = vst [vmem:[%s1110 + $0x20] sm:$0xff] %v1115
                  %v1117 = vld [vmem:[%s1109 + $0x18] sm:$0xff]
                  %1118 = vst [vmem:[%s1110 + $0x30] sm:$0xff] %v1117
                $region136: #{discrete_vae_forward.10} parent=130 // loop_footer
                  %s1108 = sadd.s32 1, %s1104
                $region137: #{discrete_vae_forward.10} parent=130 // loop_footer_branch
                  %1103 = sbr.rel target = $region133
                $region138: #{discrete_vae_forward.10} parent=130 // loop_exit
                  _
              $region131: #{discrete_vae_forward.10} parent=115 // pred_fallthru
                _
              // Predicated region
              $region139: #{discrete_vae_forward.10} parent=115 // pred_check
                _
              $region140: #{discrete_vae_forward.10} parent=115 // pred_check_branch
                %1120 = sbr.rel target = $region142
              $region141: #{discrete_vae_forward.10} parent=115 // pred_region
                _
              $region142: #{discrete_vae_forward.10} parent=115 // pred_fallthru
                _
            $region116: #{discrete_vae_forward.10} parent=111 // pred_fallthru
              _
            // Predicated region
            $region117: #{discrete_vae_forward.10} parent=111 // pred_check
              _
            $region118: #{discrete_vae_forward.10} parent=111 // pred_check_branch
              %1082 = sbr.rel target = $region120
            $region119: #{discrete_vae_forward.10} parent=111 // pred_region
              %s1084 = ssub.s32 256, 1
              loop: start=0, step=1, limit=1
              $region121: #{discrete_vae_forward.10} parent=119 // loop_pre_header
                _
              $region122: #{discrete_vae_forward.10} parent=119 // loop_header
                %s1086 = sphi 0, %s1090
                %p1087 = scmp.ge.s32.totalorder %s1086, 1
                %s1091 = sphi %s1067, %s1067
                %s1092 = sphi %s1076, %s1076
              $region123: #{discrete_vae_forward.10} parent=119 // loop_header_branch
                %1089 = sbr.rel (%p1087) target = $region127
              $region124: #{discrete_vae_forward.10} parent=119 // loop_body
                %v1093 = vld [vmem:[%s1091] sm:%s1084]
                %1094 = vst [vmem:[%s1092] sm:%s1084] %v1093
                %v1095 = vld [vmem:[%s1091 + $0x8] sm:%s1084]
                %1096 = vst [vmem:[%s1092 + $0x10] sm:%s1084] %v1095
                %v1097 = vld [vmem:[%s1091 + $0x10] sm:%s1084]
                %1098 = vst [vmem:[%s1092 + $0x20] sm:%s1084] %v1097
                %v1099 = vld [vmem:[%s1091 + $0x18] sm:%s1084]
                %1100 = vst [vmem:[%s1092 + $0x30] sm:%s1084] %v1099
              $region125: #{discrete_vae_forward.10} parent=119 // loop_footer
                %s1090 = sadd.s32 1, %s1086
              $region126: #{discrete_vae_forward.10} parent=119 // loop_footer_branch
                %1085 = sbr.rel target = $region122
              $region127: #{discrete_vae_forward.10} parent=119 // loop_exit
                _
            $region120: #{discrete_vae_forward.10} parent=111 // pred_fallthru
              _
          $region112: #{discrete_vae_forward.10} parent=107 // pred_fallthru
            _
          %1121 = vnop
        $region108: #{discrete_vae_forward.10} parent=87 // pred_fallthru
          _
      $region88: #{discrete_vae_forward.10} parent=5 // pred_fallthru
        _
      %p1122 = scmp.le.s32.totalorder 2, %s9
      // Predicated region
      $region143: #{discrete_vae_forward.10} parent=5 // pred_check
        %p1123 = pneg %p1122
      $region144: #{discrete_vae_forward.10} parent=5 // pred_check_branch
        %1125 = sbr.rel (%p1123) target = $region146
      $region145: #{discrete_vae_forward.10} parent=5 // pred_region
        %s1126 = ssub.s32 %s9, 2
        // Predicated region
        $region147: #{discrete_vae_forward.10} parent=145 // pred_check
          %p1127 = pneg %p141
        $region148: #{discrete_vae_forward.10} parent=145 // pred_check_branch
          %1129 = sbr.rel (%p1127) target = $region150
        $region149: #{discrete_vae_forward.10} parent=145 // pred_region
          %s1130 = sand.u32 %s126, 1
          %s1131 = sand.u32 %s126, 1
          %s1132 = smul.addr %s1131, 32
          %s1133 = scalar_lea.vmem [#allocation5], %s1132
        $region150: #{discrete_vae_forward.10} parent=145 // pred_fallthru
          _
      $region146: #{discrete_vae_forward.10} parent=5 // pred_fallthru
        _
    $region6: #{discrete_vae_forward.10} parent=1 // loop_footer
      %s13 = sadd.s32 1, %s9
    $region7: #{discrete_vae_forward.10} parent=1 // loop_footer_branch
      %8 = sbr.rel target = $region3
    $region8: #{discrete_vae_forward.10} parent=1 // loop_exit
      _

// kernel: discrete_vae_forward.11
$region0: #{discrete_vae_forward.11}
  #allocation0 [shape = 'u32[]', space=smem, size = 0x4, offset = 0x4, fixed_abs, tag = 'smem constant byte address 0x4 - core index']
  #allocation1 [shape = 'u32[144,128]{1,0:T(1,128)}', space=vmem, size = 0x12000, scoped, tag = 'internal scratch']
  #allocation2 [shape = 'f32[128,128]{1,0:T(8,128)}', space=vmem, size = 0x10000, scoped, tag = 'scratch operand']
  %s0 = inlined_call_operand.vmem [shape: bf16[128,1152], index: 0, kind: input, shape index: {}]
  %s1 = inlined_call_operand.vmem [shape: bf16[1152,128], index: 1, kind: input, shape index: {}]
  %s2 = inlined_call_operand.vmem [shape: f32[1,128], index: 2, kind: input, shape index: {}]
  %s3 = inlined_call_operand.vmem [shape: bf16[128,128], index: 3, kind: input, shape index: {}]
  %s4 = inlined_call_operand.vmem [shape: f32[1,128], index: 4, kind: input, shape index: {}]
  %s5 = inlined_call_operand.vmem [shape: f32[128,128], index: 5, kind: output, shape index: {}]
  %s6 = sld [smem:[#allocation0]]
  $region87: #{discrete_vae_forward.11} parent=0
    _
  %s8 = ssub.s32 1, %s6
  %s9 = scalar_select 0, %s8, %s6
  $region1: #{discrete_vae_forward.11} parent=0
    #allocation3 [shape = 'u8[196608]{0}', space=vmem, size = 0x30000, scoped, tag = 'input window, operand 0']
    loop: start=0, step=1, limit=5
    $region2: #{discrete_vae_forward.11} parent=1 // loop_pre_header
      _
    $region3: #{discrete_vae_forward.11} parent=1 // loop_header
      %s11 = sphi 0, %s15
      %p12 = scmp.ge.s32.totalorder %s11, 5
      %s18 = sphi 0, %s37
      %s19 = sphi 0, %s33
      %s20 = sphi 0, %s29
      %s21 = sphi 0, %s18
      %s22 = sphi 0, %s19
      %s23 = sphi 0, %s20
      %s24 = sphi 0, %s21
      %s25 = sphi 0, %s22
      %s26 = sphi 0, %s23
      %s42 = sphi 0, %s44
      %s45 = sphi 0, %s42
      %s46 = sphi 0, %s45
      %s62 = sphi 0, %s46
      %s70 = sphi 0, %s72
      %s73 = sphi 0, %s70
      %s74 = sphi 0, %s73
      %s90 = sphi 0, %s74
      %s96 = sphi 0, %s98
      %s99 = sphi 0, %s96
      %s100 = sphi 0, %s99
      %s116 = sphi 0, %s100
      %s120 = sphi 0, %s120
      %s122 = sphi 0, %s120
      %s123 = sphi 0, %s122
      %s137 = sphi 0, %s123
      %s141 = sphi 0, %s141
      %s143 = sphi 0, %s141
      %s144 = sphi 0, %s143
      %s158 = sphi 0, %s144
      %s164 = sphi 0, %s166
      %s167 = sphi 0, %s164
      %s168 = sphi 0, %s167
      %s184 = sphi 0, %s168
    $region4: #{discrete_vae_forward.11} parent=1 // loop_header_branch
      %14 = sbr.rel (%p12) target = $region8
    $region5: #{discrete_vae_forward.11} parent=1 // loop_body
      %s16 = ssub.s32 %s11, 1
      %s17 = ssub.s32 %s11, 2
      %s27 = sadd.s32 1, %s20
      %p28 = scmp.ge.s32.totalorder %s27, 3
      %s29 = scalar_select %p28, 0, %s27
      %s30 = sadd.s32 1, %s19
      %s31 = scalar_select %p28, %s30, %s19
      %p32 = scmp.ge.s32.totalorder %s31, 1
      %s33 = scalar_select %p32, 0, %s31
      %s34 = sadd.s32 1, %s18
      %s35 = scalar_select %p32, %s34, %s18
      %p36 = scmp.ge.s32.totalorder %s35, 1
      %s37 = scalar_select %p36, 0, %s35
      %s38 = ssub.s32 %s18, %s37
      %s39 = ssub.s32 %s20, %s29
      %s40 = sor.u32 %s38, %s39
      %p41 = scmp.eq.s32.totalorder %s40, 0
      %s43 = sadd.s32 %s42, 1
      %s44 = scalar_select %p41, %s42, %s43
      %p47 = pneg %p41
      %p48 = scmp.eq.s32.totalorder %s11, 2
      %p49 = por %p47, %p48
      %p50 = scmp.ne.s32.totalorder %s42, %s45
      %p51 = scmp.eq.s32.totalorder %s11, 0
      %p52 = por %p50, %p51
      %p53 = scmp.ne.s32.totalorder %s42, %s45
      %p54 = scmp.eq.s32.totalorder %s16, 2
      %p55 = por %p53, %p54
      %p56 = scmp.ne.s32.totalorder %s45, %s46
      %p57 = scmp.eq.s32.totalorder %s16, 0
      %p58 = por %p56, %p57
      %p59 = scmp.ne.s32.totalorder %s45, %s46
      %p60 = scmp.eq.s32.totalorder %s17, 2
      %p61 = por %p59, %p60
      %p63 = scmp.ne.s32.totalorder %s46, %s62
      %p64 = scmp.eq.s32.totalorder %s17, 0
      %p65 = por %p63, %p64
      %s66 = ssub.s32 %s20, %s29
      %s67 = ssub.s32 %s19, %s33
      %s68 = sor.u32 %s66, %s67
      %p69 = scmp.eq.s32.totalorder %s68, 0
      %s71 = sadd.s32 %s70, 1
      %s72 = scalar_select %p69, %s70, %s71
      %p75 = pneg %p69
      %p76 = scmp.eq.s32.totalorder %s11, 2
      %p77 = por %p75, %p76
      %p78 = scmp.ne.s32.totalorder %s70, %s73
      %p79 = scmp.eq.s32.totalorder %s11, 0
      %p80 = por %p78, %p79
      %p81 = scmp.ne.s32.totalorder %s70, %s73
      %p82 = scmp.eq.s32.totalorder %s16, 2
      %p83 = por %p81, %p82
      %p84 = scmp.ne.s32.totalorder %s73, %s74
      %p85 = scmp.eq.s32.totalorder %s16, 0
      %p86 = por %p84, %p85
      %p87 = scmp.ne.s32.totalorder %s73, %s74
      %p88 = scmp.eq.s32.totalorder %s17, 2
      %p89 = por %p87, %p88
      %p91 = scmp.ne.s32.totalorder %s74, %s90
      %p92 = scmp.eq.s32.totalorder %s17, 0
      %p93 = por %p91, %p92
      %s94 = ssub.s32 %s19, %s33
      %p95 = scmp.eq.s32.totalorder %s94, 0
      %s97 = sadd.s32 %s96, 1
      %s98 = scalar_select %p95, %s96, %s97
      %p101 = pneg %p95
      %p102 = scmp.eq.s32.totalorder %s11, 2
      %p103 = por %p101, %p102
      %p104 = scmp.ne.s32.totalorder %s96, %s99
      %p105 = scmp.eq.s32.totalorder %s11, 0
      %p106 = por %p104, %p105
      %p107 = scmp.ne.s32.totalorder %s96, %s99
      %p108 = scmp.eq.s32.totalorder %s16, 2
      %p109 = por %p107, %p108
      %p110 = scmp.ne.s32.totalorder %s99, %s100
      %p111 = scmp.eq.s32.totalorder %s16, 0
      %p112 = por %p110, %p111
      %p113 = scmp.ne.s32.totalorder %s99, %s100
      %p114 = scmp.eq.s32.totalorder %s17, 2
      %p115 = por %p113, %p114
      %p117 = scmp.ne.s32.totalorder %s100, %s116
      %p118 = scmp.eq.s32.totalorder %s17, 0
      %p119 = por %p117, %p118
      %s121 = sadd.s32 %s120, 1
      %p124 = scmp.eq.s32.totalorder %s11, 2
      %p125 = scmp.ne.s32.totalorder %s120, %s122
      %p126 = scmp.eq.s32.totalorder %s11, 0
      %p127 = por %p125, %p126
      %p128 = scmp.ne.s32.totalorder %s120, %s122
      %p129 = scmp.eq.s32.totalorder %s16, 2
      %p130 = por %p128, %p129
      %p131 = scmp.ne.s32.totalorder %s122, %s123
      %p132 = scmp.eq.s32.totalorder %s16, 0
      %p133 = por %p131, %p132
      %p134 = scmp.ne.s32.totalorder %s122, %s123
      %p135 = scmp.eq.s32.totalorder %s17, 2
      %p136 = por %p134, %p135
      %p138 = scmp.ne.s32.totalorder %s123, %s137
      %p139 = scmp.eq.s32.totalorder %s17, 0
      %p140 = por %p138, %p139
      %s142 = sadd.s32 %s141, 1
      %p145 = scmp.eq.s32.totalorder %s11, 2
      %p146 = scmp.ne.s32.totalorder %s141, %s143
      %p147 = scmp.eq.s32.totalorder %s11, 0
      %p148 = por %p146, %p147
      %p149 = scmp.ne.s32.totalorder %s141, %s143
      %p150 = scmp.eq.s32.totalorder %s16, 2
      %p151 = por %p149, %p150
      %p152 = scmp.ne.s32.totalorder %s143, %s144
      %p153 = scmp.eq.s32.totalorder %s16, 0
      %p154 = por %p152, %p153
      %p155 = scmp.ne.s32.totalorder %s143, %s144
      %p156 = scmp.eq.s32.totalorder %s17, 2
      %p157 = por %p155, %p156
      %p159 = scmp.ne.s32.totalorder %s144, %s158
      %p160 = scmp.eq.s32.totalorder %s17, 0
      %p161 = por %p159, %p160
      %s162 = ssub.s32 %s18, %s37
      %p163 = scmp.eq.s32.totalorder %s162, 0
      %s165 = sadd.s32 %s164, 1
      %s166 = scalar_select %p163, %s164, %s165
      %p169 = pneg %p163
      %p170 = scmp.eq.s32.totalorder %s11, 2
      %p171 = por %p169, %p170
      %p172 = scmp.ne.s32.totalorder %s164, %s167
      %p173 = scmp.eq.s32.totalorder %s11, 0
      %p174 = por %p172, %p173
      %p175 = scmp.ne.s32.totalorder %s164, %s167
      %p176 = scmp.eq.s32.totalorder %s16, 2
      %p177 = por %p175, %p176
      %p178 = scmp.ne.s32.totalorder %s167, %s168
      %p179 = scmp.eq.s32.totalorder %s16, 0
      %p180 = por %p178, %p179
      %p181 = scmp.ne.s32.totalorder %s167, %s168
      %p182 = scmp.eq.s32.totalorder %s17, 2
      %p183 = por %p181, %p182
      %p185 = scmp.ne.s32.totalorder %s168, %s184
      %p186 = scmp.eq.s32.totalorder %s17, 0
      %p187 = por %p185, %p186
      %p188 = scmp.le.s32.totalorder 1, %s11
      %p189 = scmp.lt.s32.totalorder %s11, 4
      %p190 = pnand %p188, %p189
      %p191 = pneg %p190
      // Predicated region
      $region9: #{discrete_vae_forward.11} parent=5 // pred_check
        _
      $region10: #{discrete_vae_forward.11} parent=5 // pred_check_branch
        %193 = sbr.rel (%p190) target = $region12
      $region11: #{discrete_vae_forward.11} parent=5 // pred_region
        %s194 = ssub.s32 %s11, 1
        // Predicated region
        $region13: #{discrete_vae_forward.11} parent=11 // pred_check
          %p195 = pneg %p112
        $region14: #{discrete_vae_forward.11} parent=11 // pred_check_branch
          %197 = sbr.rel (%p195) target = $region16
        $region15: #{discrete_vae_forward.11} parent=11 // pred_region
          %p198 = scmp.lt.s32.totalorder %s22, 0
          %s199 = scalar_select %p198, %s22, 0
          %s200 = scalar_lea.vmem %s2, %s199
        $region16: #{discrete_vae_forward.11} parent=11 // pred_fallthru
          _
        // Predicated region
        $region17: #{discrete_vae_forward.11} parent=11 // pred_check
          %p201 = pneg %p133
        $region18: #{discrete_vae_forward.11} parent=11 // pred_check_branch
          %203 = sbr.rel (%p201) target = $region20
        $region19: #{discrete_vae_forward.11} parent=11 // pred_region
          _
        $region20: #{discrete_vae_forward.11} parent=11 // pred_fallthru
          _
        // Predicated region
        $region21: #{discrete_vae_forward.11} parent=11 // pred_check
          %p204 = pneg %p154
        $region22: #{discrete_vae_forward.11} parent=11 // pred_check_branch
          %206 = sbr.rel (%p204) target = $region24
        $region23: #{discrete_vae_forward.11} parent=11 // pred_region
          _
        $region24: #{discrete_vae_forward.11} parent=11 // pred_fallthru
          _
      $region12: #{discrete_vae_forward.11} parent=5 // pred_fallthru
        _
      %p207 = scmp.lt.s32.totalorder %s11, 3
      // Predicated region
      $region25: #{discrete_vae_forward.11} parent=5 // pred_check
        %p208 = pneg %p207
      $region26: #{discrete_vae_forward.11} parent=5 // pred_check_branch
        %210 = sbr.rel (%p208) target = $region28
      $region27: #{discrete_vae_forward.11} parent=5 // pred_region
        // Predicated region
        $region29: #{discrete_vae_forward.11} parent=27 // pred_check
          %p211 = pneg %p52
        $region30: #{discrete_vae_forward.11} parent=27 // pred_check_branch
          %213 = sbr.rel (%p211) target = $region32
        $region31: #{discrete_vae_forward.11} parent=27 // pred_region
          %s214 = sand.u32 %s42, 1
          %s215 = sand.u32 %s42, 1
          %s216 = smul.addr %s215, 192
          %s217 = scalar_lea.vmem [#allocation3], %s216
          %s218 = smul.u32 16, %s18
          %s219 = smul.u32 3, %s20
          %s220 = smul.addr %s218, 9
          %s221 = sadd.s32 %s219, %s220
          %s222 = smul.addr %s221, 4
          %s223 = scalar_lea.vmem %s0, %s222
          // Predicated region
          $region33: #{discrete_vae_forward.11} parent=31 // pred_check
            _
          $region34: #{discrete_vae_forward.11} parent=31 // pred_check_branch
            %225 = sbr.rel (0) target = $region36
          $region35: #{discrete_vae_forward.11} parent=31 // pred_region
            // Predicated region
            $region37: #{discrete_vae_forward.11} parent=35 // pred_check
              _
            $region38: #{discrete_vae_forward.11} parent=35 // pred_check_branch
              %227 = sbr.rel (0) target = $region40
            $region39: #{discrete_vae_forward.11} parent=35 // pred_region
              %s228 = scalar_lea.vmem %s223, 8
              %s229 = scalar_lea.vmem %s217, 8 [#allocation3]
              loop: start=0, step=1, limit=1
              $region41: #{discrete_vae_forward.11} parent=39 // loop_pre_header
                _
              $region42: #{discrete_vae_forward.11} parent=39 // loop_header
                %s231 = sphi 0, %s235
                %p232 = scmp.ge.s32.totalorder %s231, 1
                %s236 = sphi %s223, %s223
                %s237 = sphi %s217, %s217
              $region43: #{discrete_vae_forward.11} parent=39 // loop_header_branch
                %234 = sbr.rel (%p232) target = $region47
              $region44: #{discrete_vae_forward.11} parent=39 // loop_body
                %v238 = vld [vmem:[%s236] sm:$0xff]
                %239 = vst [vmem:[%s237] sm:$0xff] %v238
                %v240 = vld [vmem:[%s236 + $0x24] sm:$0xff]
                %241 = vst [vmem:[%s237 + $0xc] sm:$0xff] %v240
                %v242 = vld [vmem:[%s236 + $0x48] sm:$0xff]
                %243 = vst [vmem:[%s237 + $0x18] sm:$0xff] %v242
                %v244 = vld [vmem:[%s236 + $0x6c] sm:$0xff]
                %245 = vst [vmem:[%s237 + $0x24] sm:$0xff] %v244
                %v246 = vld [vmem:[%s236 + $0x90] sm:$0xff]
                %247 = vst [vmem:[%s237 + $0x30] sm:$0xff] %v246
                %v248 = vld [vmem:[%s236 + $0xb4] sm:$0xff]
                %249 = vst [vmem:[%s237 + $0x3c] sm:$0xff] %v248
                %v250 = vld [vmem:[%s236 + $0xd8] sm:$0xff]
                %251 = vst [vmem:[%s237 + $0x48] sm:$0xff] %v250
                %v252 = vld [vmem:[%s236 + $0xfc] sm:$0xff]
                %253 = vst [vmem:[%s237 + $0x54] sm:$0xff] %v252
                %v254 = vld [vmem:[%s236 + $0x120] sm:$0xff]
                %255 = vst [vmem:[%s237 + $0x60] sm:$0xff] %v254
                %v256 = vld [vmem:[%s236 + $0x144] sm:$0xff]
                %257 = vst [vmem:[%s237 + $0x6c] sm:$0xff] %v256
                %v258 = vld [vmem:[%s236 + $0x168] sm:$0xff]
                %259 = vst [vmem:[%s237 + $0x78] sm:$0xff] %v258
                %v260 = vld [vmem:[%s236 + $0x18c] sm:$0xff]
                %261 = vst [vmem:[%s237 + $0x84] sm:$0xff] %v260
                %v262 = vld [vmem:[%s236 + $0x1b0] sm:$0xff]
                %263 = vst [vmem:[%s237 + $0x90] sm:$0xff] %v262
                %v264 = vld [vmem:[%s236 + $0x1d4] sm:$0xff]
                %265 = vst [vmem:[%s237 + $0x9c] sm:$0xff] %v264
                %v266 = vld [vmem:[%s236 + $0x1f8] sm:$0xff]
                %267 = vst [vmem:[%s237 + $0xa8] sm:$0xff] %v266
                %v268 = vld [vmem:[%s236 + $0x21c] sm:$0xff]
                %269 = vst [vmem:[%s237 + $0xb4] sm:$0xff] %v268
              $region45: #{discrete_vae_forward.11} parent=39 // loop_footer
                %s235 = sadd.s32 1, %s231
              $region46: #{discrete_vae_forward.11} parent=39 // loop_footer_branch
                %230 = sbr.rel target = $region42
              $region47: #{discrete_vae_forward.11} parent=39 // loop_exit
                _
              %s271 = ssub.s32 16, 1
              loop: start=0, step=1, limit=1
              $region48: #{discrete_vae_forward.11} parent=39 // loop_pre_header
                _
              $region49: #{discrete_vae_forward.11} parent=39 // loop_header
                %s273 = sphi 0, %s277
                %p274 = scmp.ge.s32.totalorder %s273, 1
                %s278 = sphi %s228, %s228
                %s279 = sphi %s229, %s229
              $region50: #{discrete_vae_forward.11} parent=39 // loop_header_branch
                %276 = sbr.rel (%p274) target = $region54
              $region51: #{discrete_vae_forward.11} parent=39 // loop_body
                %v280 = vld [vmem:[%s278] sm:%s271]
                %281 = vst [vmem:[%s279] sm:%s271] %v280
                %v282 = vld [vmem:[%s278 + $0x24] sm:%s271]
                %283 = vst [vmem:[%s279 + $0xc] sm:%s271] %v282
                %v284 = vld [vmem:[%s278 + $0x48] sm:%s271]
                %285 = vst [vmem:[%s279 + $0x18] sm:%s271] %v284
                %v286 = vld [vmem:[%s278 + $0x6c] sm:%s271]
                %287 = vst [vmem:[%s279 + $0x24] sm:%s271] %v286
                %v288 = vld [vmem:[%s278 + $0x90] sm:%s271]
                %289 = vst [vmem:[%s279 + $0x30] sm:%s271] %v288
                %v290 = vld [vmem:[%s278 + $0xb4] sm:%s271]
                %291 = vst [vmem:[%s279 + $0x3c] sm:%s271] %v290
                %v292 = vld [vmem:[%s278 + $0xd8] sm:%s271]
                %293 = vst [vmem:[%s279 + $0x48] sm:%s271] %v292
                %v294 = vld [vmem:[%s278 + $0xfc] sm:%s271]
                %295 = vst [vmem:[%s279 + $0x54] sm:%s271] %v294
                %v296 = vld [vmem:[%s278 + $0x120] sm:%s271]
                %297 = vst [vmem:[%s279 + $0x60] sm:%s271] %v296
                %v298 = vld [vmem:[%s278 + $0x144] sm:%s271]
                %299 = vst [vmem:[%s279 + $0x6c] sm:%s271] %v298
                %v300 = vld [vmem:[%s278 + $0x168] sm:%s271]
                %301 = vst [vmem:[%s279 + $0x78] sm:%s271] %v300
                %v302 = vld [vmem:[%s278 + $0x18c] sm:%s271]
                %303 = vst [vmem:[%s279 + $0x84] sm:%s271] %v302
                %v304 = vld [vmem:[%s278 + $0x1b0] sm:%s271]
                %305 = vst [vmem:[%s279 + $0x90] sm:%s271] %v304
                %v306 = vld [vmem:[%s278 + $0x1d4] sm:%s271]
                %307 = vst [vmem:[%s279 + $0x9c] sm:%s271] %v306
                %v308 = vld [vmem:[%s278 + $0x1f8] sm:%s271]
                %309 = vst [vmem:[%s279 + $0xa8] sm:%s271] %v308
                %v310 = vld [vmem:[%s278 + $0x21c] sm:%s271]
                %311 = vst [vmem:[%s279 + $0xb4] sm:%s271] %v310
              $region52: #{discrete_vae_forward.11} parent=39 // loop_footer
                %s277 = sadd.s32 1, %s273
              $region53: #{discrete_vae_forward.11} parent=39 // loop_footer_branch
                %272 = sbr.rel target = $region49
              $region54: #{discrete_vae_forward.11} parent=39 // loop_exit
                _
            $region40: #{discrete_vae_forward.11} parent=35 // pred_fallthru
              _
          $region36: #{discrete_vae_forward.11} parent=31 // pred_fallthru
            _
          %312 = vnop
        $region32: #{discrete_vae_forward.11} parent=27 // pred_fallthru
          _
        // Predicated region
        $region55: #{discrete_vae_forward.11} parent=27 // pred_check
          %p313 = pneg %p80
        $region56: #{discrete_vae_forward.11} parent=27 // pred_check_branch
          %315 = sbr.rel (%p313) target = $region58
        $region57: #{discrete_vae_forward.11} parent=27 // pred_region
          %s316 = smul.u32 48, %s20
          %p317 = scmp.lt.s32.totalorder %s316, 143
          %s318 = scalar_select %p317, %s316, 143
          %p319 = scmp.lt.s32.totalorder %s19, 0
          %s320 = scalar_select %p319, %s19, 0
          %s321 = sadd.s32 %s320, %s318
          %s322 = smul.addr %s321, 4
          %s323 = scalar_lea.vmem %s1, %s322
          %s324 = smul.u32 48, %s20
        $region58: #{discrete_vae_forward.11} parent=27 // pred_fallthru
          _
      $region28: #{discrete_vae_forward.11} parent=5 // pred_fallthru
        _
      %p325 = scmp.le.s32.totalorder 1, %s11
      %p326 = scmp.lt.s32.totalorder %s11, 4
      %p327 = pnand %p325, %p326
      %p328 = pneg %p327
      // Predicated region
      $region59: #{discrete_vae_forward.11} parent=5 // pred_check
        _
      $region60: #{discrete_vae_forward.11} parent=5 // pred_check_branch
        %330 = sbr.rel (%p327) target = $region62
      $region61: #{discrete_vae_forward.11} parent=5 // pred_region
        %s331 = ssub.s32 %s11, 1
        %s332 = sand.u32 %s45, 1
        %s333 = sand.u32 %s45, 1
        %s334 = smul.addr %s333, 192
        %s335 = scalar_lea.vmem [#allocation3], %s334
        // Predicated region
        $region63: #{discrete_vae_forward.11} parent=61 // pred_check
          %p336 = pneg %p58
        $region64: #{discrete_vae_forward.11} parent=61 // pred_check_branch
          %338 = sbr.rel (%p336) target = $region66
        $region65: #{discrete_vae_forward.11} parent=61 // pred_region
          _
        $region66: #{discrete_vae_forward.11} parent=61 // pred_fallthru
          _
        %s339 = sand.u32 %s45, 1
        %s340 = sand.u32 %s45, 1
        %s341 = smul.addr %s340, 192
        %s342 = scalar_lea.vmem [#allocation3], %s341
        %p343 = pneg %p58
        %p344 = pneg %p55
        %s345 = smul.u32 48, %s23
        %p346 = scmp.lt.s32.totalorder %s345, 143
        %s347 = scalar_select %p346, %s345, 143
        %p348 = scmp.lt.s32.totalorder %s22, 0
        %s349 = scalar_select %p348, %s22, 0
        %s350 = sadd.s32 %s349, %s347
        %s351 = smul.addr %s350, 4
        %s352 = scalar_lea.vmem %s1, %s351
        %p353 = pneg %p86
        %p354 = pneg %p83
        %p355 = scmp.lt.s32.totalorder %s22, 0
        %s356 = scalar_select %p355, %s22, 0
        %s357 = scalar_lea.vmem %s2, %s356
        %p358 = pneg %p112
        %p359 = pneg %p109
        %p360 = pneg %p133
        %p361 = pneg %p130
        %p362 = pneg %p154
        %p363 = pneg %p151
        %p364 = pneg %p180
        %p365 = pneg %p177
        %s366 = smul.u32 16, %s21
        %p367 = scmp.lt.s32.totalorder %s366, 15
        %s368 = scalar_select %p367, %s366, 15
        %s369 = smul.addr %s368, 8
        %s370 = scalar_lea.vmem %s5, %s369
        %s371 = smul.u32 16, %s21
        %s372 = smul.u32 3, %s23
        %s373 = smul.u32 48, %s23
        %p374 = scmp.lt.s32.totalorder %s373, 143
        %s375 = scalar_select %p374, %s373, 143
        %p376 = scmp.lt.s32.totalorder %s22, 0
        %s377 = scalar_select %p376, %s22, 0
        %s378 = sadd.s32 %s377, %s375
        %s379 = smul.addr %s378, 4
        %s380 = scalar_lea.vmem %s1, %s379
        %s381 = smul.u32 48, %s23
        %p382 = scmp.lt.s32.totalorder %s22, 0
        %s383 = scalar_select %p382, %s22, 0
        %s384 = scalar_lea.vmem %s2, %s383
        %s385 = smul.u32 16, %s21
        %p386 = scmp.lt.s32.totalorder %s385, 15
        %s387 = scalar_select %p386, %s385, 15
        %s388 = smul.addr %s387, 8
        %s389 = scalar_lea.vmem %s5, %s388
        %s390 = smul.u32 16, %s21
        %p392 = scmp.eq.s32.totalorder %s23, 0
        // Predicated region
        $region67: #{discrete_vae_forward.11} parent=61 // pred_check
          %p393 = pneg %p392
        $region68: #{discrete_vae_forward.11} parent=61 // pred_check_branch
          %395 = sbr.rel (%p393) target = $region70
        $region69: #{discrete_vae_forward.11} parent=61 // pred_region
          %396 = vst [vmem:[#allocation2] sm:$0xff] 0.0
          %397 = vst [vmem:[#allocation2 + $0x8] sm:$0xff] 0.0
          %398 = vst [vmem:[#allocation2 + $0x10] sm:$0xff] 0.0
          %399 = vst [vmem:[#allocation2 + $0x18] sm:$0xff] 0.0
          %400 = vst [vmem:[#allocation2 + $0x20] sm:$0xff] 0.0
          %401 = vst [vmem:[#allocation2 + $0x28] sm:$0xff] 0.0
          %402 = vst [vmem:[#allocation2 + $0x30] sm:$0xff] 0.0
          %403 = vst [vmem:[#allocation2 + $0x38] sm:$0xff] 0.0
          %404 = vst [vmem:[#allocation2 + $0x40] sm:$0xff] 0.0
          %405 = vst [vmem:[#allocation2 + $0x48] sm:$0xff] 0.0
          %406 = vst [vmem:[#allocation2 + $0x50] sm:$0xff] 0.0
          %407 = vst [vmem:[#allocation2 + $0x58] sm:$0xff] 0.0
          %408 = vst [vmem:[#allocation2 + $0x60] sm:$0xff] 0.0
          %409 = vst [vmem:[#allocation2 + $0x68] sm:$0xff] 0.0
          %410 = vst [vmem:[#allocation2 + $0x70] sm:$0xff] 0.0
          %411 = vst [vmem:[#allocation2 + $0x78] sm:$0xff] 0.0
        $region70: #{discrete_vae_forward.11} parent=61 // pred_fallthru
          _
        %v412 = vld [vmem:[#allocation2] sm:$0xff]
        %v413 = vld [vmem:[#allocation2 + $0x8] sm:$0xff]
        %v414 = vld [vmem:[#allocation2 + $0x10] sm:$0xff]
        %v415 = vld [vmem:[#allocation2 + $0x18] sm:$0xff]
        %v416 = vld [vmem:[#allocation2 + $0x20] sm:$0xff]
        %v417 = vld [vmem:[#allocation2 + $0x28] sm:$0xff]
        %v418 = vld [vmem:[#allocation2 + $0x30] sm:$0xff]
        %v419 = vld [vmem:[#allocation2 + $0x38] sm:$0xff]
        %v420 = vld [vmem:[#allocation2 + $0x40] sm:$0xff]
        %v421 = vld [vmem:[#allocation2 + $0x48] sm:$0xff]
        %v422 = vld [vmem:[#allocation2 + $0x50] sm:$0xff]
        %v423 = vld [vmem:[#allocation2 + $0x58] sm:$0xff]
        %v424 = vld [vmem:[#allocation2 + $0x60] sm:$0xff]
        %v425 = vld [vmem:[#allocation2 + $0x68] sm:$0xff]
        %v426 = vld [vmem:[#allocation2 + $0x70] sm:$0xff]
        %v427 = vld [vmem:[#allocation2 + $0x78] sm:$0xff]
        %v428 = vld [vmem:[%s335] sm:$0xff]
        %v429 = vld [vmem:[%s335 + $0x8] sm:$0xf]
        %v430 = vld [vmem:[%s335 + $0xc] sm:$0xff]
        %v431 = vld [vmem:[%s335 + $0x14] sm:$0xf]
        %v432 = vld [vmem:[%s335 + $0x18] sm:$0xff]
        %v433 = vld [vmem:[%s335 + $0x20] sm:$0xf]
        %v434 = vld [vmem:[%s335 + $0x24] sm:$0xff]
        %v435 = vld [vmem:[%s335 + $0x2c] sm:$0xf]
        %v436 = vld [vmem:[%s335 + $0x30] sm:$0xff]
        %v437 = vld [vmem:[%s335 + $0x38] sm:$0xf]
        %v438 = vld [vmem:[%s335 + $0x3c] sm:$0xff]
        %v439 = vld [vmem:[%s335 + $0x44] sm:$0xf]
        %v440 = vld [vmem:[%s335 + $0x48] sm:$0xff]
        %v441 = vld [vmem:[%s335 + $0x50] sm:$0xf]
        %v442 = vld [vmem:[%s335 + $0x54] sm:$0xff]
        %v443 = vld [vmem:[%s335 + $0x5c] sm:$0xf]
        %v444 = vld [vmem:[%s335 + $0x60] sm:$0xff]
        %v445 = vld [vmem:[%s335 + $0x68] sm:$0xf]
        %v446 = vld [vmem:[%s335 + $0x6c] sm:$0xff]
        %v447 = vld [vmem:[%s335 + $0x74] sm:$0xf]
        %v448 = vld [vmem:[%s335 + $0x78] sm:$0xff]
        %v449 = vld [vmem:[%s335 + $0x80] sm:$0xf]
        %v450 = vld [vmem:[%s335 + $0x84] sm:$0xff]
        %v451 = vld [vmem:[%s335 + $0x8c] sm:$0xf]
        %v452 = vld [vmem:[%s335 + $0x90] sm:$0xff]
        %v453 = vld [vmem:[%s335 + $0x98] sm:$0xf]
        %v454 = vld [vmem:[%s335 + $0x9c] sm:$0xff]
        %v455 = vld [vmem:[%s335 + $0xa4] sm:$0xf]
        %v456 = vld [vmem:[%s335 + $0xa8] sm:$0xff]
        %v457 = vld [vmem:[%s335 + $0xb0] sm:$0xf]
        %v458 = vld [vmem:[%s335 + $0xb4] sm:$0xff]
        %v459 = vld [vmem:[%s335 + $0xbc] sm:$0xf]
        %v460 = vld [vmem:[%s380] sm:$0xf]
        %v461 = vld [vmem:[%s380 + $0x4] sm:$0xf]
        %v462 = vld [vmem:[%s380 + $0x8] sm:$0xf]
        %v463 = vld [vmem:[%s380 + $0xc] sm:$0xf]
        %v464 = vld [vmem:[%s380 + $0x10] sm:$0xf]
        %v465 = vld [vmem:[%s380 + $0x14] sm:$0xf]
        %v466 = vld [vmem:[%s380 + $0x18] sm:$0xf]
        %v467 = vld [vmem:[%s380 + $0x1c] sm:$0xf]
        %v468 = vld [vmem:[%s380 + $0x20] sm:$0xf]
        %v469 = vld [vmem:[%s380 + $0x24] sm:$0xf]
        %v470 = vld [vmem:[%s380 + $0x28] sm:$0xf]
        %v471 = vld [vmem:[%s380 + $0x2c] sm:$0xf]
        %v472 = vld [vmem:[%s380 + $0x30] sm:$0xf]
        %v473 = vld [vmem:[%s380 + $0x34] sm:$0xf]
        %v474 = vld [vmem:[%s380 + $0x38] sm:$0xf]
        %v475 = vld [vmem:[%s380 + $0x3c] sm:$0xf]
        %v476 = vld [vmem:[%s380 + $0x40] sm:$0xf]
        %v477 = vld [vmem:[%s380 + $0x44] sm:$0xf]
        %v478 = vld [vmem:[%s380 + $0x48] sm:$0xf]
        %v479 = vld [vmem:[%s380 + $0x4c] sm:$0xf]
        %v480 = vld [vmem:[%s380 + $0x50] sm:$0xf]
        %v481 = vld [vmem:[%s380 + $0x54] sm:$0xf]
        %v482 = vld [vmem:[%s380 + $0x58] sm:$0xf]
        %v483 = vld [vmem:[%s380 + $0x5c] sm:$0xf]
        %v484 = vld [vmem:[%s380 + $0x60] sm:$0xf]
        %v485 = vld [vmem:[%s380 + $0x64] sm:$0xf]
        %v486 = vld [vmem:[%s380 + $0x68] sm:$0xf]
        %v487 = vld [vmem:[%s380 + $0x6c] sm:$0xf]
        %v488 = vld [vmem:[%s380 + $0x70] sm:$0xf]
        %v489 = vld [vmem:[%s380 + $0x74] sm:$0xf]
        %v490 = vld [vmem:[%s380 + $0x78] sm:$0xf]
        %v491 = vld [vmem:[%s380 + $0x7c] sm:$0xf]
        %v492 = vld [vmem:[%s380 + $0x80] sm:$0xf]
        %v493 = vld [vmem:[%s380 + $0x84] sm:$0xf]
        %v494 = vld [vmem:[%s380 + $0x88] sm:$0xf]
        %v495 = vld [vmem:[%s380 + $0x8c] sm:$0xf]
        %v496 = vld [vmem:[%s380 + $0x90] sm:$0xf]
        %v497 = vld [vmem:[%s380 + $0x94] sm:$0xf]
        %v498 = vld [vmem:[%s380 + $0x98] sm:$0xf]
        %v499 = vld [vmem:[%s380 + $0x9c] sm:$0xf]
        %v500 = vld [vmem:[%s380 + $0xa0] sm:$0xf]
        %v501 = vld [vmem:[%s380 + $0xa4] sm:$0xf]
        %v502 = vld [vmem:[%s380 + $0xa8] sm:$0xf]
        %v503 = vld [vmem:[%s380 + $0xac] sm:$0xf]
        %v504 = vld [vmem:[%s380 + $0xb0] sm:$0xf]
        %v505 = vld [vmem:[%s380 + $0xb4] sm:$0xf]
        %v506 = vld [vmem:[%s380 + $0xb8] sm:$0xf]
        %v507 = vld [vmem:[%s380 + $0xbc] sm:$0xf]
        %v540 = vunpack.c.l.b16 %v428
        %v541 = vunpack.c.h.b16 %v428
        %v542 = vunpack.c.l.b16 %v429
        %v543 = vunpack.c.l.b16 %v430
        %v544 = vunpack.c.h.b16 %v430
        %v545 = vunpack.c.l.b16 %v431
        %v546 = vunpack.c.l.b16 %v432
        %v547 = vunpack.c.h.b16 %v432
        %v548 = vunpack.c.l.b16 %v433
        %v549 = vunpack.c.l.b16 %v434
        %v550 = vunpack.c.h.b16 %v434
        %v551 = vunpack.c.l.b16 %v435
        %v552 = vunpack.c.l.b16 %v436
        %v553 = vunpack.c.h.b16 %v436
        %v554 = vunpack.c.l.b16 %v437
        %v555 = vunpack.c.l.b16 %v438
        %v556 = vunpack.c.h.b16 %v438
        %v557 = vunpack.c.l.b16 %v439
        %v558 = vunpack.c.l.b16 %v440
        %v559 = vunpack.c.h.b16 %v440
        %v560 = vunpack.c.l.b16 %v441
        %v561 = vunpack.c.l.b16 %v442
        %v562 = vunpack.c.h.b16 %v442
        %v563 = vunpack.c.l.b16 %v443
        %v564 = vunpack.c.l.b16 %v444
        %v565 = vunpack.c.h.b16 %v444
        %v566 = vunpack.c.l.b16 %v445
        %v567 = vunpack.c.l.b16 %v446
        %v568 = vunpack.c.h.b16 %v446
        %v569 = vunpack.c.l.b16 %v447
        %v570 = vunpack.c.l.b16 %v448
        %v571 = vunpack.c.h.b16 %v448
        %v572 = vunpack.c.l.b16 %v449
        %v573 = vunpack.c.l.b16 %v450
        %v574 = vunpack.c.h.b16 %v450
        %v575 = vunpack.c.l.b16 %v451
        %v576 = vunpack.c.l.b16 %v452
        %v577 = vunpack.c.h.b16 %v452
        %v578 = vunpack.c.l.b16 %v453
        %v579 = vunpack.c.l.b16 %v454
        %v580 = vunpack.c.h.b16 %v454
        %v581 = vunpack.c.l.b16 %v455
        %v582 = vunpack.c.l.b16 %v456
        %v583 = vunpack.c.h.b16 %v456
        %v584 = vunpack.c.l.b16 %v457
        %v585 = vunpack.c.l.b16 %v458
        %v586 = vunpack.c.h.b16 %v458
        %v587 = vunpack.c.l.b16 %v459
        %v588 = vpack.c.b16 %v543, %v540
        %v589 = vpack.c.b16 %v544, %v541
        %v590 = vpack.c.b16 %v545, %v542
        %v591 = vpack.c.b16 %v549, %v546
        %v592 = vpack.c.b16 %v550, %v547
        %v593 = vpack.c.b16 %v551, %v548
        %v594 = vpack.c.b16 %v555, %v552
        %v595 = vpack.c.b16 %v556, %v553
        %v596 = vpack.c.b16 %v557, %v554
        %v597 = vpack.c.b16 %v561, %v558
        %v598 = vpack.c.b16 %v562, %v559
        %v599 = vpack.c.b16 %v563, %v560
        %v600 = vpack.c.b16 %v567, %v564
        %v601 = vpack.c.b16 %v568, %v565
        %v602 = vpack.c.b16 %v569, %v566
        %v603 = vpack.c.b16 %v573, %v570
        %v604 = vpack.c.b16 %v574, %v571
        %v605 = vpack.c.b16 %v575, %v572
        %v606 = vpack.c.b16 %v579, %v576
        %v607 = vpack.c.b16 %v580, %v577
        %v608 = vpack.c.b16 %v581, %v578
        %v609 = vpack.c.b16 %v585, %v582
        %v610 = vpack.c.b16 %v586, %v583
        %v611 = vpack.c.b16 %v587, %v584
        %v684 = vunpack.c.l.b16 %v460
        %v685 = vunpack.c.l.b16 %v461
        %v686 = vunpack.c.l.b16 %v462
        %v687 = vunpack.c.l.b16 %v463
        %v688 = vunpack.c.l.b16 %v464
        %v689 = vunpack.c.l.b16 %v465
        %v690 = vunpack.c.l.b16 %v466
        %v691 = vunpack.c.l.b16 %v467
        %v692 = vunpack.c.l.b16 %v468
        %v693 = vunpack.c.l.b16 %v469
        %v694 = vunpack.c.l.b16 %v470
        %v695 = vunpack.c.l.b16 %v471
        %v696 = vunpack.c.l.b16 %v472
        %v697 = vunpack.c.l.b16 %v473
        %v698 = vunpack.c.l.b16 %v474
        %v699 = vunpack.c.l.b16 %v475
        %v700 = vunpack.c.l.b16 %v476
        %v701 = vunpack.c.l.b16 %v477
        %v702 = vunpack.c.l.b16 %v478
        %v703 = vunpack.c.l.b16 %v479
        %v704 = vunpack.c.l.b16 %v480
        %v705 = vunpack.c.l.b16 %v481
        %v706 = vunpack.c.l.b16 %v482
        %v707 = vunpack.c.l.b16 %v483
        %v708 = vunpack.c.l.b16 %v484
        %v709 = vunpack.c.l.b16 %v485
        %v710 = vunpack.c.l.b16 %v486
        %v711 = vunpack.c.l.b16 %v487
        %v712 = vunpack.c.l.b16 %v488
        %v713 = vunpack.c.l.b16 %v489
        %v714 = vunpack.c.l.b16 %v490
        %v715 = vunpack.c.l.b16 %v491
        %v716 = vunpack.c.l.b16 %v492
        %v717 = vunpack.c.l.b16 %v493
        %v718 = vunpack.c.l.b16 %v494
        %v719 = vunpack.c.l.b16 %v495
        %v720 = vunpack.c.l.b16 %v496
        %v721 = vunpack.c.l.b16 %v497
        %v722 = vunpack.c.l.b16 %v498
        %v723 = vunpack.c.l.b16 %v499
        %v724 = vunpack.c.l.b16 %v500
        %v725 = vunpack.c.l.b16 %v501
        %v726 = vunpack.c.l.b16 %v502
        %v727 = vunpack.c.l.b16 %v503
        %v728 = vunpack.c.l.b16 %v504
        %v729 = vunpack.c.l.b16 %v505
        %v730 = vunpack.c.l.b16 %v506
        %v731 = vunpack.c.l.b16 %v507
        %v732 = vpack.c.b16 %v685, %v684
        %v733 = vpack.c.b16 %v687, %v686
        %v734 = vpack.c.b16 %v689, %v688
        %v735 = vpack.c.b16 %v691, %v690
        %v736 = vpack.c.b16 %v693, %v692
        %v737 = vpack.c.b16 %v695, %v694
        %v738 = vpack.c.b16 %v697, %v696
        %v739 = vpack.c.b16 %v699, %v698
        %v740 = vpack.c.b16 %v701, %v700
        %v741 = vpack.c.b16 %v703, %v702
        %v742 = vpack.c.b16 %v705, %v704
        %v743 = vpack.c.b16 %v707, %v706
        %v744 = vpack.c.b16 %v709, %v708
        %v745 = vpack.c.b16 %v711, %v710
        %v746 = vpack.c.b16 %v713, %v712
        %v747 = vpack.c.b16 %v715, %v714
        %v748 = vpack.c.b16 %v717, %v716
        %v749 = vpack.c.b16 %v719, %v718
        %v750 = vpack.c.b16 %v721, %v720
        %v751 = vpack.c.b16 %v723, %v722
        %v752 = vpack.c.b16 %v725, %v724
        %v753 = vpack.c.b16 %v727, %v726
        %v754 = vpack.c.b16 %v729, %v728
        %v755 = vpack.c.b16 %v731, %v730
        %780 = vmatprep.subr.bf16.mxu0 0
        %781 = vmatpush1.bf16.msra.mxu0 %v739
        %782 = vmatprep.subr.bf16.mxu0 0
        %783 = vmatpush1.bf16.msra.mxu0 %v738
        %784 = vmatprep.subr.bf16.mxu0 0
        %785 = vmatpush1.bf16.msra.mxu0 %v737
        %786 = vmatprep.subr.bf16.mxu0 0
        %787 = vmatpush1.bf16.msra.mxu0 %v736
        %788 = vmatprep.subr.bf16.mxu0 0
        %789 = vmatpush1.bf16.msra.mxu0 %v735
        %790 = vmatprep.subr.bf16.mxu0 0
        %791 = vmatpush1.bf16.msra.mxu0 %v734
        %792 = vmatprep.subr.bf16.mxu0 0
        %793 = vmatpush1.bf16.msra.mxu0 %v733
        %794 = vmatprep.subr.bf16.mxu0 0
        %795 = vmatpush1.bf16.msra.mxu0 %v732
        %796 = vmatprep.subr.bf16.mxu0 0
        %797 = vmatpush2.bf16.msra.mxu0 %v747
        %798 = vmatprep.subr.bf16.mxu0 0
        %799 = vmatpush2.bf16.msra.mxu0 %v746
        %800 = vmatprep.subr.bf16.mxu0 0
        %801 = vmatpush2.bf16.msra.mxu0 %v745
        %802 = vmatprep.subr.bf16.mxu0 0
        %803 = vmatpush2.bf16.msra.mxu0 %v744
        %804 = vmatprep.subr.bf16.mxu0 0
        %805 = vmatpush2.bf16.msra.mxu0 %v743
        %806 = vmatprep.subr.bf16.mxu0 0
        %807 = vmatpush2.bf16.msra.mxu0 %v742
        %808 = vmatprep.subr.bf16.mxu0 0
        %809 = vmatpush2.bf16.msra.mxu0 %v741
        %810 = vmatprep.subr.bf16.mxu0 0
        %811 = vmatpush2.bf16.msra.mxu0 %v740
        %812 = vmatprep.mubr.bf16.mxu0 %v589
        %813 = vmatmul.mubr.bf16.gmra.mxu0 %v588
        %v814 = vpop.f32.mrf.mxu0
        %v815 = vadd.f32 0.0, %v814
        %v816 = vpop.f32.mrf.mxu0
        %v817 = vpop.f32.mrf.mxu0
        %v818 = vadd.f32 0.0, %v817
        %v819 = vpop.f32.mrf.mxu0
        %820 = vmatprep.mubr.bf16.mxu0 %v592
        %821 = vmatmul.mubr.bf16.gmra.mxu0 %v591
        %v822 = vpop.f32.mrf.mxu0
        %v823 = vadd.f32 0.0, %v822
        %v824 = vpop.f32.mrf.mxu0
        %v825 = vpop.f32.mrf.mxu0
        %v826 = vadd.f32 0.0, %v825
        %v827 = vpop.f32.mrf.mxu0
        %828 = vmatprep.mubr.bf16.mxu0 %v595
        %829 = vmatmul.mubr.bf16.gmra.mxu0 %v594
        %v830 = vpop.f32.mrf.mxu0
        %v831 = vadd.f32 0.0, %v830
        %v832 = vpop.f32.mrf.mxu0
        %v833 = vpop.f32.mrf.mxu0
        %v834 = vadd.f32 0.0, %v833
        %v835 = vpop.f32.mrf.mxu0
        %836 = vmatprep.mubr.bf16.mxu0 %v598
        %837 = vmatmul.mubr.bf16.gmra.mxu0 %v597
        %v838 = vpop.f32.mrf.mxu0
        %v839 = vadd.f32 0.0, %v838
        %v840 = vpop.f32.mrf.mxu0
        %v841 = vpop.f32.mrf.mxu0
        %v842 = vadd.f32 0.0, %v841
        %v843 = vpop.f32.mrf.mxu0
        %844 = vmatprep.mubr.bf16.mxu0 %v601
        %845 = vmatmul.mubr.bf16.gmra.mxu0 %v600
        %v846 = vpop.f32.mrf.mxu0
        %v847 = vadd.f32 0.0, %v846
        %v848 = vpop.f32.mrf.mxu0
        %v849 = vpop.f32.mrf.mxu0
        %v850 = vadd.f32 0.0, %v849
        %v851 = vpop.f32.mrf.mxu0
        %852 = vmatprep.mubr.bf16.mxu0 %v604
        %853 = vmatmul.mubr.bf16.gmra.mxu0 %v603
        %v854 = vpop.f32.mrf.mxu0
        %v855 = vadd.f32 0.0, %v854
        %v856 = vpop.f32.mrf.mxu0
        %v857 = vpop.f32.mrf.mxu0
        %v858 = vadd.f32 0.0, %v857
        %v859 = vpop.f32.mrf.mxu0
        %860 = vmatprep.mubr.bf16.mxu0 %v607
        %861 = vmatmul.mubr.bf16.gmra.mxu0 %v606
        %v862 = vpop.f32.mrf.mxu0
        %v863 = vadd.f32 0.0, %v862
        %v864 = vpop.f32.mrf.mxu0
        %v865 = vpop.f32.mrf.mxu0
        %v866 = vadd.f32 0.0, %v865
        %v867 = vpop.f32.mrf.mxu0
        %868 = vmatprep.mubr.bf16.mxu0 %v610
        %869 = vmatmul.mubr.bf16.gmra.mxu0 %v609
        %v870 = vpop.f32.mrf.mxu0
        %v871 = vadd.f32 0.0, %v870
        %v872 = vpop.f32.mrf.mxu0
        %v873 = vpop.f32.mrf.mxu0
        %v874 = vadd.f32 0.0, %v873
        %v875 = vpop.f32.mrf.mxu0
        %876 = vdwg.mxu0
        %877 = vmatprep.subr.bf16.mxu0 0
        %878 = vmatpush1.bf16.msra.mxu0 %v755
        %879 = vmatprep.subr.bf16.mxu0 0
        %880 = vmatpush1.bf16.msra.mxu0 %v754
        %881 = vmatprep.subr.bf16.mxu0 0
        %882 = vmatpush1.bf16.msra.mxu0 %v753
        %883 = vmatprep.subr.bf16.mxu0 0
        %884 = vmatpush1.bf16.msra.mxu0 %v752
        %885 = vmatprep.subr.bf16.mxu0 0
        %886 = vmatpush1.bf16.msra.mxu0 %v751
        %887 = vmatprep.subr.bf16.mxu0 0
        %888 = vmatpush1.bf16.msra.mxu0 %v750
        %889 = vmatprep.subr.bf16.mxu0 0
        %890 = vmatpush1.bf16.msra.mxu0 %v749
        %891 = vmatprep.subr.bf16.mxu0 0
        %892 = vmatpush1.bf16.msra.mxu0 %v748
        %893 = vmatprep.subr.bf16.mxu0 0
        %894 = vmatpush2.bf16.msra.mxu0 0
        %895 = vmatprep.subr.bf16.mxu0 0
        %896 = vmatpush2.bf16.msra.mxu0 0
        %897 = vmatprep.subr.bf16.mxu0 0
        %898 = vmatpush2.bf16.msra.mxu0 0
        %899 = vmatprep.subr.bf16.mxu0 0
        %900 = vmatpush2.bf16.msra.mxu0 0
        %901 = vmatprep.subr.bf16.mxu0 0
        %902 = vmatpush2.bf16.msra.mxu0 0
        %903 = vmatprep.subr.bf16.mxu0 0
        %904 = vmatpush2.bf16.msra.mxu0 0
        %905 = vmatprep.subr.bf16.mxu0 0
        %906 = vmatpush2.bf16.msra.mxu0 0
        %907 = vmatprep.subr.bf16.mxu0 0
        %908 = vmatpush2.bf16.msra.mxu0 0
        %909 = vmatprep.mubr.bf16.mxu0 0
        %910 = vmatmul.mubr.bf16.gmra.mxu0 %v590
        %v911 = vpop.f32.mrf.mxu0
        %v912 = vadd.f32 %v815, %v911
        %v913 = vpop.f32.mrf.mxu0
        %v914 = vpop.f32.mrf.mxu0
        %v915 = vadd.f32 %v818, %v914
        %v916 = vpop.f32.mrf.mxu0
        %917 = vmatprep.mubr.bf16.mxu0 0
        %918 = vmatmul.mubr.bf16.gmra.mxu0 %v593
        %v919 = vpop.f32.mrf.mxu0
        %v920 = vadd.f32 %v823, %v919
        %v921 = vpop.f32.mrf.mxu0
        %v922 = vpop.f32.mrf.mxu0
        %v923 = vadd.f32 %v826, %v922
        %v924 = vpop.f32.mrf.mxu0
        %925 = vmatprep.mubr.bf16.mxu0 0
        %926 = vmatmul.mubr.bf16.gmra.mxu0 %v596
        %v927 = vpop.f32.mrf.mxu0
        %v928 = vadd.f32 %v831, %v927
        %v929 = vpop.f32.mrf.mxu0
        %v930 = vpop.f32.mrf.mxu0
        %v931 = vadd.f32 %v834, %v930
        %v932 = vpop.f32.mrf.mxu0
        %933 = vmatprep.mubr.bf16.mxu0 0
        %934 = vmatmul.mubr.bf16.gmra.mxu0 %v599
        %v935 = vpop.f32.mrf.mxu0
        %v936 = vadd.f32 %v839, %v935
        %v937 = vpop.f32.mrf.mxu0
        %v938 = vpop.f32.mrf.mxu0
        %v939 = vadd.f32 %v842, %v938
        %v940 = vpop.f32.mrf.mxu0
        %941 = vmatprep.mubr.bf16.mxu0 0
        %942 = vmatmul.mubr.bf16.gmra.mxu0 %v602
        %v943 = vpop.f32.mrf.mxu0
        %v944 = vadd.f32 %v847, %v943
        %v945 = vpop.f32.mrf.mxu0
        %v946 = vpop.f32.mrf.mxu0
        %v947 = vadd.f32 %v850, %v946
        %v948 = vpop.f32.mrf.mxu0
        %949 = vmatprep.mubr.bf16.mxu0 0
        %950 = vmatmul.mubr.bf16.gmra.mxu0 %v605
        %v951 = vpop.f32.mrf.mxu0
        %v952 = vadd.f32 %v855, %v951
        %v953 = vpop.f32.mrf.mxu0
        %v954 = vpop.f32.mrf.mxu0
        %v955 = vadd.f32 %v858, %v954
        %v956 = vpop.f32.mrf.mxu0
        %957 = vmatprep.mubr.bf16.mxu0 0
        %958 = vmatmul.mubr.bf16.gmra.mxu0 %v608
        %v959 = vpop.f32.mrf.mxu0
        %v960 = vadd.f32 %v863, %v959
        %v961 = vpop.f32.mrf.mxu0
        %v962 = vpop.f32.mrf.mxu0
        %v963 = vadd.f32 %v866, %v962
        %v964 = vpop.f32.mrf.mxu0
        %965 = vmatprep.mubr.bf16.mxu0 0
        %966 = vmatmul.mubr.bf16.gmra.mxu0 %v611
        %v967 = vpop.f32.mrf.mxu0
        %v968 = vadd.f32 %v871, %v967
        %v969 = vpop.f32.mrf.mxu0
        %v970 = vpop.f32.mrf.mxu0
        %v971 = vadd.f32 %v874, %v970
        %v972 = vpop.f32.mrf.mxu0
        %973 = vdwg.mxu0
        %v974 = vadd.f32 %v412, %v912
        %v975 = vadd.f32 %v413, %v915
        %v976 = vadd.f32 %v414, %v920
        %v977 = vadd.f32 %v415, %v923
        %v978 = vadd.f32 %v416, %v928
        %v979 = vadd.f32 %v417, %v931
        %v980 = vadd.f32 %v418, %v936
        %v981 = vadd.f32 %v419, %v939
        %v982 = vadd.f32 %v420, %v944
        %v983 = vadd.f32 %v421, %v947
        %v984 = vadd.f32 %v422, %v952
        %v985 = vadd.f32 %v423, %v955
        %v986 = vadd.f32 %v424, %v960
        %v987 = vadd.f32 %v425, %v963
        %v988 = vadd.f32 %v426, %v968
        %v989 = vadd.f32 %v427, %v971
        %990 = vst [vmem:[#allocation2] sm:$0xff] %v974
        %991 = vst [vmem:[#allocation2 + $0x8] sm:$0xff] %v975
        %992 = vst [vmem:[#allocation2 + $0x10] sm:$0xff] %v976
        %993 = vst [vmem:[#allocation2 + $0x18] sm:$0xff] %v977
        %994 = vst [vmem:[#allocation2 + $0x20] sm:$0xff] %v978
        %995 = vst [vmem:[#allocation2 + $0x28] sm:$0xff] %v979
        %996 = vst [vmem:[#allocation2 + $0x30] sm:$0xff] %v980
        %997 = vst [vmem:[#allocation2 + $0x38] sm:$0xff] %v981
        %998 = vst [vmem:[#allocation2 + $0x40] sm:$0xff] %v982
        %999 = vst [vmem:[#allocation2 + $0x48] sm:$0xff] %v983
        %1000 = vst [vmem:[#allocation2 + $0x50] sm:$0xff] %v984
        %1001 = vst [vmem:[#allocation2 + $0x58] sm:$0xff] %v985
        %1002 = vst [vmem:[#allocation2 + $0x60] sm:$0xff] %v986
        %1003 = vst [vmem:[#allocation2 + $0x68] sm:$0xff] %v987
        %1004 = vst [vmem:[#allocation2 + $0x70] sm:$0xff] %v988
        %1005 = vst [vmem:[#allocation2 + $0x78] sm:$0xff] %v989
        %p1006 = scmp.eq.s32.totalorder %s23, 2
        // Predicated region
        $region71: #{discrete_vae_forward.11} parent=61 // pred_check
          %p1007 = pneg %p1006
        $region72: #{discrete_vae_forward.11} parent=61 // pred_check_branch
          %1009 = sbr.rel (%p1007) target = $region74
        $region73: #{discrete_vae_forward.11} parent=61 // pred_region
          %v1010 = vld [vmem:[#allocation2] sm:$0xff]
          %v1011 = vld [vmem:[#allocation2 + $0x8] sm:$0xff]
          %v1012 = vld [vmem:[#allocation2 + $0x10] sm:$0xff]
          %v1013 = vld [vmem:[#allocation2 + $0x18] sm:$0xff]
          %v1014 = vld [vmem:[#allocation2 + $0x20] sm:$0xff]
          %v1015 = vld [vmem:[#allocation2 + $0x28] sm:$0xff]
          %v1016 = vld [vmem:[#allocation2 + $0x30] sm:$0xff]
          %v1017 = vld [vmem:[#allocation2 + $0x38] sm:$0xff]
          %v1018 = vld [vmem:[#allocation2 + $0x40] sm:$0xff]
          %v1019 = vld [vmem:[#allocation2 + $0x48] sm:$0xff]
          %v1020 = vld [vmem:[#allocation2 + $0x50] sm:$0xff]
          %v1021 = vld [vmem:[#allocation2 + $0x58] sm:$0xff]
          %v1022 = vld [vmem:[#allocation2 + $0x60] sm:$0xff]
          %v1023 = vld [vmem:[#allocation2 + $0x68] sm:$0xff]
          %v1024 = vld [vmem:[#allocation2 + $0x70] sm:$0xff]
          %v1025 = vld [vmem:[#allocation2 + $0x78] sm:$0xff]
          %v1026 = vld [vmem:[%s384] sm:$0x1]
          %v1028 = vlaneseq
          %v1029 = vshrl.u32 %v1028, 7
          %v1030 = vsub.s32 0, %v1029
          %v1031 = vrot.slane %v1026, %v1030
          %v1033 = vadd.f32 %v1010, %v1031
          %v1034 = vadd.f32 %v1011, %v1031
          %v1035 = vadd.f32 %v1012, %v1031
          %v1036 = vadd.f32 %v1013, %v1031
          %v1037 = vadd.f32 %v1014, %v1031
          %v1038 = vadd.f32 %v1015, %v1031
          %v1039 = vadd.f32 %v1016, %v1031
          %v1040 = vadd.f32 %v1017, %v1031
          %v1041 = vadd.f32 %v1018, %v1031
          %v1042 = vadd.f32 %v1019, %v1031
          %v1043 = vadd.f32 %v1020, %v1031
          %v1044 = vadd.f32 %v1021, %v1031
          %v1045 = vadd.f32 %v1022, %v1031
          %v1046 = vadd.f32 %v1023, %v1031
          %v1047 = vadd.f32 %v1024, %v1031
          %v1048 = vadd.f32 %v1025, %v1031
          %vm1049 = vcmp.ge.f32.partialorder %v1033, 0.0
          %vm1050 = vcmp.ge.f32.partialorder %v1034, 0.0
          %vm1051 = vcmp.ge.f32.partialorder %v1035, 0.0
          %vm1052 = vcmp.ge.f32.partialorder %v1036, 0.0
          %vm1053 = vcmp.ge.f32.partialorder %v1037, 0.0
          %vm1054 = vcmp.ge.f32.partialorder %v1038, 0.0
          %vm1055 = vcmp.ge.f32.partialorder %v1039, 0.0
          %vm1056 = vcmp.ge.f32.partialorder %v1040, 0.0
          %vm1057 = vcmp.ge.f32.partialorder %v1041, 0.0
          %vm1058 = vcmp.ge.f32.partialorder %v1042, 0.0
          %vm1059 = vcmp.ge.f32.partialorder %v1043, 0.0
          %vm1060 = vcmp.ge.f32.partialorder %v1044, 0.0
          %vm1061 = vcmp.ge.f32.partialorder %v1045, 0.0
          %vm1062 = vcmp.ge.f32.partialorder %v1046, 0.0
          %vm1063 = vcmp.ge.f32.partialorder %v1047, 0.0
          %vm1064 = vcmp.ge.f32.partialorder %v1048, 0.0
          %v1065 = vmul.f32 %v1033, 0.2
          %v1066 = vmul.f32 %v1034, 0.2
          %v1067 = vmul.f32 %v1035, 0.2
          %v1068 = vmul.f32 %v1036, 0.2
          %v1069 = vmul.f32 %v1037, 0.2
          %v1070 = vmul.f32 %v1038, 0.2
          %v1071 = vmul.f32 %v1039, 0.2
          %v1072 = vmul.f32 %v1040, 0.2
          %v1073 = vmul.f32 %v1041, 0.2
          %v1074 = vmul.f32 %v1042, 0.2
          %v1075 = vmul.f32 %v1043, 0.2
          %v1076 = vmul.f32 %v1044, 0.2
          %v1077 = vmul.f32 %v1045, 0.2
          %v1078 = vmul.f32 %v1046, 0.2
          %v1079 = vmul.f32 %v1047, 0.2
          %v1080 = vmul.f32 %v1048, 0.2
          %v1081 = vsel %vm1049, %v1033, %v1065
          %v1082 = vsel %vm1050, %v1034, %v1066
          %v1083 = vsel %vm1051, %v1035, %v1067
          %v1084 = vsel %vm1052, %v1036, %v1068
          %v1085 = vsel %vm1053, %v1037, %v1069
          %v1086 = vsel %vm1054, %v1038, %v1070
          %v1087 = vsel %vm1055, %v1039, %v1071
          %v1088 = vsel %vm1056, %v1040, %v1072
          %v1089 = vsel %vm1057, %v1041, %v1073
          %v1090 = vsel %vm1058, %v1042, %v1074
          %v1091 = vsel %vm1059, %v1043, %v1075
          %v1092 = vsel %vm1060, %v1044, %v1076
          %v1093 = vsel %vm1061, %v1045, %v1077
          %v1094 = vsel %vm1062, %v1046, %v1078
          %v1095 = vsel %vm1063, %v1047, %v1079
          %v1096 = vsel %vm1064, %v1048, %v1080
          %v1097 = vpack.c.bf16 %v1082, %v1081
          %v1098 = vpack.c.bf16 %v1084, %v1083
          %v1099 = vpack.c.bf16 %v1086, %v1085
          %v1100 = vpack.c.bf16 %v1088, %v1087
          %v1101 = vpack.c.bf16 %v1090, %v1089
          %v1102 = vpack.c.bf16 %v1092, %v1091
          %v1103 = vpack.c.bf16 %v1094, %v1093
          %v1104 = vpack.c.bf16 %v1096, %v1095
          %v1105 = vld [vmem:[%s3] sm:$0xf]
          %v1106 = vld [vmem:[%s3 + $0x4] sm:$0xf]
          %v1107 = vld [vmem:[%s3 + $0x8] sm:$0xf]
          %v1108 = vld [vmem:[%s3 + $0xc] sm:$0xf]
          %v1109 = vld [vmem:[%s3 + $0x10] sm:$0xf]
          %v1110 = vld [vmem:[%s3 + $0x14] sm:$0xf]
          %v1111 = vld [vmem:[%s3 + $0x18] sm:$0xf]
          %v1112 = vld [vmem:[%s3 + $0x1c] sm:$0xf]
          %v1113 = vld [vmem:[%s3 + $0x20] sm:$0xf]
          %v1114 = vld [vmem:[%s3 + $0x24] sm:$0xf]
          %v1115 = vld [vmem:[%s3 + $0x28] sm:$0xf]
          %v1116 = vld [vmem:[%s3 + $0x2c] sm:$0xf]
          %v1117 = vld [vmem:[%s3 + $0x30] sm:$0xf]
          %v1118 = vld [vmem:[%s3 + $0x34] sm:$0xf]
          %v1119 = vld [vmem:[%s3 + $0x38] sm:$0xf]
          %v1120 = vld [vmem:[%s3 + $0x3c] sm:$0xf]
          %v1121 = vld [vmem:[%s4] sm:$0x1]
          %v1123 = vlaneseq
          %v1124 = vshrl.u32 %v1123, 7
          %v1125 = vsub.s32 0, %v1124
          %v1126 = vrot.slane %v1121, %v1125
          %v1144 = vunpack.c.l.b16 %v1105
          %v1145 = vunpack.c.l.b16 %v1106
          %v1146 = vunpack.c.l.b16 %v1107
          %v1147 = vunpack.c.l.b16 %v1108
          %v1148 = vunpack.c.l.b16 %v1109
          %v1149 = vunpack.c.l.b16 %v1110
          %v1150 = vunpack.c.l.b16 %v1111
          %v1151 = vunpack.c.l.b16 %v1112
          %v1152 = vunpack.c.l.b16 %v1113
          %v1153 = vunpack.c.l.b16 %v1114
          %v1154 = vunpack.c.l.b16 %v1115
          %v1155 = vunpack.c.l.b16 %v1116
          %v1156 = vunpack.c.l.b16 %v1117
          %v1157 = vunpack.c.l.b16 %v1118
          %v1158 = vunpack.c.l.b16 %v1119
          %v1159 = vunpack.c.l.b16 %v1120
          %v1160 = vpack.c.b16 %v1145, %v1144
          %v1161 = vpack.c.b16 %v1147, %v1146
          %v1162 = vpack.c.b16 %v1149, %v1148
          %v1163 = vpack.c.b16 %v1151, %v1150
          %v1164 = vpack.c.b16 %v1153, %v1152
          %v1165 = vpack.c.b16 %v1155, %v1154
          %v1166 = vpack.c.b16 %v1157, %v1156
          %v1167 = vpack.c.b16 %v1159, %v1158
          %1176 = vmatprep.subr.bf16.mxu0 0
          %1177 = vmatpush1.bf16.msra.mxu0 %v1167
          %1178 = vmatprep.subr.bf16.mxu0 0
          %1179 = vmatpush1.bf16.msra.mxu0 %v1166
          %1180 = vmatprep.subr.bf16.mxu0 0
          %1181 = vmatpush1.bf16.msra.mxu0 %v1165
          %1182 = vmatprep.subr.bf16.mxu0 0
          %1183 = vmatpush1.bf16.msra.mxu0 %v1164
          %1184 = vmatprep.subr.bf16.mxu0 0
          %1185 = vmatpush1.bf16.msra.mxu0 %v1163
          %1186 = vmatprep.subr.bf16.mxu0 0
          %1187 = vmatpush1.bf16.msra.mxu0 %v1162
          %1188 = vmatprep.subr.bf16.mxu0 0
          %1189 = vmatpush1.bf16.msra.mxu0 %v1161
          %1190 = vmatprep.subr.bf16.mxu0 0
          %1191 = vmatpush1.bf16.msra.mxu0 %v1160
          %1192 = vmatprep.subr.bf16.mxu0 0
          %1193 = vmatpush2.bf16.msra.mxu0 0
          %1194 = vmatprep.subr.bf16.mxu0 0
          %1195 = vmatpush2.bf16.msra.mxu0 0
          %1196 = vmatprep.subr.bf16.mxu0 0
          %1197 = vmatpush2.bf16.msra.mxu0 0
          %1198 = vmatprep.subr.bf16.mxu0 0
          %1199 = vmatpush2.bf16.msra.mxu0 0
          %1200 = vmatprep.subr.bf16.mxu0 0
          %1201 = vmatpush2.bf16.msra.mxu0 0
          %1202 = vmatprep.subr.bf16.mxu0 0
          %1203 = vmatpush2.bf16.msra.mxu0 0
          %1204 = vmatprep.subr.bf16.mxu0 0
          %1205 = vmatpush2.bf16.msra.mxu0 0
          %1206 = vmatprep.subr.bf16.mxu0 0
          %1207 = vmatpush2.bf16.msra.mxu0 0
          %1208 = vmatprep.mubr.bf16.mxu0 0
          %1209 = vmatmul.mubr.bf16.gmra.mxu0 %v1097
          %v1210 = vpop.f32.mrf.mxu0
          %v1211 = vadd.f32 %v1126, %v1210
          %v1212 = vpop.f32.mrf.mxu0
          %v1213 = vpop.f32.mrf.mxu0
          %v1214 = vadd.f32 %v1126, %v1213
          %v1215 = vpop.f32.mrf.mxu0
          %1216 = vmatprep.mubr.bf16.mxu0 0
          %1217 = vmatmul.mubr.bf16.gmra.mxu0 %v1098
          %v1218 = vpop.f32.mrf.mxu0
          %v1219 = vadd.f32 %v1126, %v1218
          %v1220 = vpop.f32.mrf.mxu0
          %v1221 = vpop.f32.mrf.mxu0
          %v1222 = vadd.f32 %v1126, %v1221
          %v1223 = vpop.f32.mrf.mxu0
          %1224 = vmatprep.mubr.bf16.mxu0 0
          %1225 = vmatmul.mubr.bf16.gmra.mxu0 %v1099
          %v1226 = vpop.f32.mrf.mxu0
          %v1227 = vadd.f32 %v1126, %v1226
          %v1228 = vpop.f32.mrf.mxu0
          %v1229 = vpop.f32.mrf.mxu0
          %v1230 = vadd.f32 %v1126, %v1229
          %v1231 = vpop.f32.mrf.mxu0
          %1232 = vmatprep.mubr.bf16.mxu0 0
          %1233 = vmatmul.mubr.bf16.gmra.mxu0 %v1100
          %v1234 = vpop.f32.mrf.mxu0
          %v1235 = vadd.f32 %v1126, %v1234
          %v1236 = vpop.f32.mrf.mxu0
          %v1237 = vpop.f32.mrf.mxu0
          %v1238 = vadd.f32 %v1126, %v1237
          %v1239 = vpop.f32.mrf.mxu0
          %1240 = vmatprep.mubr.bf16.mxu0 0
          %1241 = vmatmul.mubr.bf16.gmra.mxu0 %v1101
          %v1242 = vpop.f32.mrf.mxu0
          %v1243 = vadd.f32 %v1126, %v1242
          %v1244 = vpop.f32.mrf.mxu0
          %v1245 = vpop.f32.mrf.mxu0
          %v1246 = vadd.f32 %v1126, %v1245
          %v1247 = vpop.f32.mrf.mxu0
          %1248 = vmatprep.mubr.bf16.mxu0 0
          %1249 = vmatmul.mubr.bf16.gmra.mxu0 %v1102
          %v1250 = vpop.f32.mrf.mxu0
          %v1251 = vadd.f32 %v1126, %v1250
          %v1252 = vpop.f32.mrf.mxu0
          %v1253 = vpop.f32.mrf.mxu0
          %v1254 = vadd.f32 %v1126, %v1253
          %v1255 = vpop.f32.mrf.mxu0
          %1256 = vmatprep.mubr.bf16.mxu0 0
          %1257 = vmatmul.mubr.bf16.gmra.mxu0 %v1103
          %v1258 = vpop.f32.mrf.mxu0
          %v1259 = vadd.f32 %v1126, %v1258
          %v1260 = vpop.f32.mrf.mxu0
          %v1261 = vpop.f32.mrf.mxu0
          %v1262 = vadd.f32 %v1126, %v1261
          %v1263 = vpop.f32.mrf.mxu0
          %1264 = vmatprep.mubr.bf16.mxu0 0
          %1265 = vmatmul.mubr.bf16.gmra.mxu0 %v1104
          %v1266 = vpop.f32.mrf.mxu0
          %v1267 = vadd.f32 %v1126, %v1266
          %v1268 = vpop.f32.mrf.mxu0
          %v1269 = vpop.f32.mrf.mxu0
          %v1270 = vadd.f32 %v1126, %v1269
          %v1271 = vpop.f32.mrf.mxu0
          %1272 = vdwg.mxu0
          %1273 = vst [vmem:[%s389] sm:$0xff] %v1211
          %1274 = vst [vmem:[%s389 + $0x8] sm:$0xff] %v1214
          %1275 = vst [vmem:[%s389 + $0x10] sm:$0xff] %v1219
          %1276 = vst [vmem:[%s389 + $0x18] sm:$0xff] %v1222
          %1277 = vst [vmem:[%s389 + $0x20] sm:$0xff] %v1227
          %1278 = vst [vmem:[%s389 + $0x28] sm:$0xff] %v1230
          %1279 = vst [vmem:[%s389 + $0x30] sm:$0xff] %v1235
          %1280 = vst [vmem:[%s389 + $0x38] sm:$0xff] %v1238
          %1281 = vst [vmem:[%s389 + $0x40] sm:$0xff] %v1243
          %1282 = vst [vmem:[%s389 + $0x48] sm:$0xff] %v1246
          %1283 = vst [vmem:[%s389 + $0x50] sm:$0xff] %v1251
          %1284 = vst [vmem:[%s389 + $0x58] sm:$0xff] %v1254
          %1285 = vst [vmem:[%s389 + $0x60] sm:$0xff] %v1259
          %1286 = vst [vmem:[%s389 + $0x68] sm:$0xff] %v1262
          %1287 = vst [vmem:[%s389 + $0x70] sm:$0xff] %v1267
          %1288 = vst [vmem:[%s389 + $0x78] sm:$0xff] %v1270
        $region74: #{discrete_vae_forward.11} parent=61 // pred_fallthru
          _
        %s1289 = smul.u32 16, %s21
        %p1290 = scmp.lt.s32.totalorder %s1289, 15
        %s1291 = scalar_select %p1290, %s1289, 15
        %s1292 = smul.addr %s1291, 8
        %s1293 = scalar_lea.vmem %s5, %s1292
        // Predicated region
        $region75: #{discrete_vae_forward.11} parent=61 // pred_check
          %p1294 = pneg %p177
        $region76: #{discrete_vae_forward.11} parent=61 // pred_check_branch
          %1296 = sbr.rel (%p1294) target = $region78
        $region77: #{discrete_vae_forward.11} parent=61 // pred_region
          %s1297 = smul.u32 16, %s21
        $region78: #{discrete_vae_forward.11} parent=61 // pred_fallthru
          _
        // Predicated region
        $region79: #{discrete_vae_forward.11} parent=61 // pred_check
          %p1298 = pneg %p177
        $region80: #{discrete_vae_forward.11} parent=61 // pred_check_branch
          %1300 = sbr.rel (%p1298) target = $region82
        $region81: #{discrete_vae_forward.11} parent=61 // pred_region
          %s1301 = smul.u32 16, %s21
          %p1302 = scmp.lt.s32.totalorder %s1301, 15
          %s1303 = scalar_select %p1302, %s1301, 15
          %s1304 = smul.addr %s1303, 8
          %s1305 = scalar_lea.vmem %s5, %s1304
        $region82: #{discrete_vae_forward.11} parent=61 // pred_fallthru
          _
      $region62: #{discrete_vae_forward.11} parent=5 // pred_fallthru
        _
      %p1306 = scmp.le.s32.totalorder 2, %s11
      // Predicated region
      $region83: #{discrete_vae_forward.11} parent=5 // pred_check
        %p1307 = pneg %p1306
      $region84: #{discrete_vae_forward.11} parent=5 // pred_check_branch
        %1309 = sbr.rel (%p1307) target = $region86
      $region85: #{discrete_vae_forward.11} parent=5 // pred_region
        %s1310 = ssub.s32 %s11, 2
      $region86: #{discrete_vae_forward.11} parent=5 // pred_fallthru
        _
    $region6: #{discrete_vae_forward.11} parent=1 // loop_footer
      %s15 = sadd.s32 1, %s11
    $region7: #{discrete_vae_forward.11} parent=1 // loop_footer_branch
      %10 = sbr.rel target = $region3
    $region8: #{discrete_vae_forward.11} parent=1 // loop_exit
      _

</llo_original>
